<compile_context>
chip_gen: v5e
topology: v5e:2x2
jax: 0.10.0
libtpu: 0.0.40
codegen_flags: <defaults>
</compile_context>

<pallas_src>
import numpy as np
import jax
import jax.numpy as jnp
from jax.experimental import pallas as pl
from jax.experimental.pallas import tpu as pltpu

POSE_DIM = 9             # get_pose_dim('rot_matrix') = 6 (rot6d) + 3 (trans)
POSE_PAD = 128           # zero-padded, lane-aligned pose width fed to the kernel
POSE_HID = 256
T_EMB = 128              # GaussianFourierProjection embed_dim
PTS_DIM = 1024           # pts_feat channels
HEADS = 3                # rot_x, rot_y, trans
HEAD_HID = 256
FUSE_IN = PTS_DIM + T_EMB + POSE_HID   # 1408
OUT_DIM = 3 * HEADS      # 9
OUT_PAD = 128            # lane-aligned padded output width
SIGMA = 25.0             # marginal_prob_func (VE SDE)

_TWO_PI = float(2.0 * np.pi)
_LOG_SIGMA = float(np.log(SIGMA))
_INV_2LOG_SIGMA = float(1.0 / (2.0 * np.log(SIGMA)))


# -----------------------------------------------------------------------------
# Kernel
# -----------------------------------------------------------------------------
def _pose_score_kernel(pts_ref, pose_ref, t_ref,
                       gw_ref, wt_sin_ref, wt_cos_ref, bt_ref,
                       wp1_ref, bp1_ref, wp2_ref, bp2_ref,
                       wh1p_ref, wh1t_ref, wh1q_ref, bh1_ref,
                       wh2_ref, bh2_ref,
                       out_ref):
    f32 = jnp.float32
    bf16 = jnp.bfloat16
    relu = lambda x: jnp.maximum(x, 0.0)
    # bf16 x bf16 matmul, f32 accumulation on the MXU.
    dot = lambda a, w_ref: jnp.dot(a.astype(bf16), w_ref[...],
                                   preferred_element_type=f32)

    t = t_ref[...]                                           # [TM, 1], f32

    # --- fused GaussianFourierProjection + t-encoder Linear(128,128)+ReLU.
    #     cat([sin, cos]) @ Wt  ==  sin @ Wt[:64] + cos @ Wt[64:]  (no lane concat).
    #     gw_ref already contains W * 2*pi (pre-scaled at packing time).
    x_proj = t * gw_ref[...]                                 # [TM, 64]
    t_feat = relu(dot(jnp.sin(x_proj), wt_sin_ref)
                  + dot(jnp.cos(x_proj), wt_cos_ref)
                  + bt_ref[...])                             # [TM, 128]

    # --- pose encoder: Linear(9,256)+ReLU, Linear(256,256)+ReLU (pose lane-padded).
    p1 = relu(dot(pose_ref[...], wp1_ref) + bp1_ref[...])
    pose_feat = relu(dot(p1, wp2_ref) + bp2_ref[...])        # [TM, 256]

    # --- fusion heads, layer 1.  total_feat = cat([pts, t_feat, pose_feat]) realized
    #     as a sum of row-block matmuls; the three heads' first layers are stacked on
    #     the output axis (768 = 3 x 256).
    h = jnp.dot(pts_ref[...], wh1p_ref[...], preferred_element_type=f32)  # pts already bf16
    h = h + dot(t_feat, wh1t_ref)
    h = h + dot(pose_feat, wh1q_ref)
    h = relu(h + bh1_ref[...])                               # [TM, 768]

    # --- fusion heads, layer 2: block-diagonal stack of the three zero_module
    #     Linear(256,3) layers, lane-padded to 128.
    out_raw = dot(h, wh2_ref) + bh2_ref[...]                 # [TM, 128]

    # --- marginal_prob_func (VE SDE): std = sqrt((sigma^(2t)-1) / (2 ln sigma))
    std = jnp.sqrt((jnp.exp(2.0 * t * f32(_LOG_SIGMA)) - 1.0) * f32(_INV_2LOG_SIGMA))
    inv = pl.reciprocal(std + 1e-7, approx=True)             # EUP slot, essentially free
    out_ref[...] = out_raw * inv


# -----------------------------------------------------------------------------
# Parameter construction / one-time packing
# -----------------------------------------------------------------------------
def init_params(key, zero_final=True):
    """Raw parameters in the PyTorch module layout ([in, out] weights)."""
    keys = jax.random.split(key, 32)

    def lin(kw, kb, fi, fo):
        lim = 1.0 / np.sqrt(fi)
        w = jax.random.uniform(kw, (fi, fo), jnp.float32, -lim, lim)
        b = jax.random.uniform(kb, (fo,), jnp.float32, -lim, lim)
        return w, b

    p = {}
    # GaussianFourierProjection.W = randn(embed_dim//2) * 30, non-trainable
    p['gauss_W'] = jax.random.normal(keys[0], (T_EMB // 2,), jnp.float32) * 30.0
    p['t_lin'] = lin(keys[1], keys[2], T_EMB, T_EMB)              # Linear(128,128)
    p['pose_lin1'] = lin(keys[3], keys[4], POSE_DIM, POSE_HID)    # Linear(9,256)
    p['pose_lin2'] = lin(keys[5], keys[6], POSE_HID, POSE_HID)    # Linear(256,256)
    heads = []
    for i in range(HEADS):
        w1, b1 = lin(keys[7 + 4 * i], keys[8 + 4 * i], FUSE_IN, HEAD_HID)  # Linear(1408,256)
        if zero_final:
            # zero_module(nn.Linear(256, 3)) -> zeros (faithful to the module)
            w2 = jnp.zeros((HEAD_HID, 3), jnp.float32)
            b2 = jnp.zeros((3,), jnp.float32)
        else:
            # non-zero variant used only to make the numerical test non-trivial
            w2, b2 = lin(keys[9 + 4 * i], keys[10 + 4 * i], HEAD_HID, 3)
        heads.append((w1, b1, w2, b2))
    p['heads'] = heads
    return p


def prepare_params(params):
    """One-time packing of the weights into the kernel layout (bf16, lane-aligned).

    Call once; reuse the result for every forward call.
    """
    bf16 = jnp.bfloat16
    wt, bt = params['t_lin']
    wp1, bp1 = params['pose_lin1']
    wp2, bp2 = params['pose_lin2']
    w1s = [h[0] for h in params['heads']]
    b1s = [h[1] for h in params['heads']]
    w2s = [h[2] for h in params['heads']]
    b2s = [h[3] for h in params['heads']]

    # pose encoder layer 1: lane-pad the 9 input rows to 128
    wp1_pad = jnp.zeros((POSE_PAD, POSE_HID), bf16).at[:POSE_DIM].set(wp1.astype(bf16))

    # heads layer 1: stack the three heads side-by-side, split by input row-block
    wh1p = jnp.concatenate([w[:PTS_DIM] for w in w1s], axis=1).astype(bf16)                # [1024,768]
    wh1t = jnp.concatenate([w[PTS_DIM:PTS_DIM + T_EMB] for w in w1s], axis=1).astype(bf16) # [128, 768]
    wh1q = jnp.concatenate([w[PTS_DIM + T_EMB:] for w in w1s], axis=1).astype(bf16)        # [256, 768]
    bh1 = jnp.concatenate(b1s)[None, :].astype(jnp.float32)                                # [1, 768]

    # heads layer 2: block-diagonal stack of the three Linear(256,3), lane-padded to 128
    wh2 = jnp.zeros((HEADS * HEAD_HID, OUT_PAD), jnp.float32)
    for i, w2 in enumerate(w2s):
        wh2 = wh2.at[i * HEAD_HID:(i + 1) * HEAD_HID, i * 3:(i + 1) * 3].set(w2)
    bh2 = jnp.zeros((1, OUT_PAD), jnp.float32).at[0, :OUT_DIM].set(jnp.concatenate(b2s))

    packed = {
        # Gaussian-Fourier frequencies pre-scaled by 2*pi (saves a VPU mul per tile)
        'gauss_W': (params['gauss_W'] * _TWO_PI).reshape(1, T_EMB // 2).astype(jnp.float32),
        'wt_sin': wt[:T_EMB // 2].astype(bf16),     # [64, 128]
        'wt_cos': wt[T_EMB // 2:].astype(bf16),     # [64, 128]
        'bt': bt[None, :].astype(jnp.float32),
        'wp1': wp1_pad,
        'bp1': bp1[None, :].astype(jnp.float32),
        'wp2': wp2.astype(bf16),
        'bp2': bp2[None, :].astype(jnp.float32),
        'wh1p': wh1p, 'wh1t': wh1t, 'wh1q': wh1q, 'bh1': bh1,
        'wh2': wh2.astype(bf16), 'bh2': bh2,
    }
    return jax.tree_util.tree_map(jax.block_until_ready, packed)


# -----------------------------------------------------------------------------
# Forward wrapper
# -----------------------------------------------------------------------------
def _round_up(x, m):
    return (x + m - 1) // m * m


@jax.jit
def forward_pallas(packed, pts_feat, sampled_pose, t):
    bs = pts_feat.shape[0]
    tm = 128 if bs >= 128 else _round_up(bs, 8)    # batch tile (sublane aligned)
    padded_bs = _round_up(bs, tm)

    # Per-call activation padding only (weights are pre-packed).
    # pts and pose ship as bf16 (they only feed bf16 MXU matmuls); t stays f32.
    pts_pad = jnp.zeros((padded_bs, PTS_DIM), jnp.bfloat16).at[:bs].set(
        pts_feat.astype(jnp.bfloat16))
    pose_pad = jnp.zeros((padded_bs, POSE_PAD), jnp.bfloat16).at[:bs, :POSE_DIM].set(
        sampled_pose.astype(jnp.bfloat16))
    # pad t with 1.0 so std of padded rows stays well-behaved (rows are sliced off anyway)
    t_pad = jnp.ones((padded_bs, 1), jnp.float32).at[:bs].set(t.astype(jnp.float32))

    weight_args = (packed['gauss_W'], packed['wt_sin'], packed['wt_cos'], packed['bt'],
                   packed['wp1'], packed['bp1'], packed['wp2'], packed['bp2'],
                   packed['wh1p'], packed['wh1t'], packed['wh1q'], packed['bh1'],
                   packed['wh2'], packed['bh2'])

    batch_spec = lambda width: pl.BlockSpec((tm, width), lambda i: (i, 0))
    # constant block index -> weights stay VMEM-resident across grid steps (DMA'd once)
    const_spec = lambda a: pl.BlockSpec(a.shape, lambda i: (0, 0))

    out_pad = pl.pallas_call(
        _pose_score_kernel,
        out_shape=jax.ShapeDtypeStruct((padded_bs, OUT_PAD), jnp.float32),
        grid=(padded_bs // tm,),
        in_specs=[batch_spec(PTS_DIM), batch_spec(POSE_PAD), batch_spec(1)]
                 + [const_spec(a) for a in weight_args],
        out_specs=batch_spec(OUT_PAD),
        compiler_params=pltpu.CompilerParams(
            dimension_semantics=("parallel",),          # shards batch tiles across TCs
            vmem_limit_bytes=16 * 1024 * 1024),
    )(pts_pad, pose_pad, t_pad, *weight_args)
    return out_pad[:bs, :OUT_DIM]


# -----------------------------------------------------------------------------
# Pure-JAX reference (mirrors the PyTorch forward, f32)
# -----------------------------------------------------------------------------
def forward_reference(params, pts_feat, sampled_pose, t):
    relu = lambda x: jnp.maximum(x, 0.0)
    tsq = t[:, 0]
    x_proj = tsq[:, None] * params['gauss_W'][None, :] * 2.0 * np.pi
    temb = jnp.concatenate([jnp.sin(x_proj), jnp.cos(x_proj)], axis=-1)
    wt, bt = params['t_lin']
    t_feat = relu(temb @ wt + bt)
    wp1, bp1 = params['pose_lin1']
    wp2, bp2 = params['pose_lin2']
    pose_feat = relu(relu(sampled_pose @ wp1 + bp1) @ wp2 + bp2)
    total = jnp.concatenate([pts_feat, t_feat, pose_feat], axis=-1)
    std = jnp.sqrt((SIGMA ** (2.0 * t) - 1.0) / (2.0 * np.log(SIGMA)))
    outs = []
    for (w1, b1, w2, b2) in params['heads']:
        h = relu(total @ w1 + b1)
        outs.append(h @ w2 + b2)
    return jnp.concatenate(outs, axis=-1) / (std + 1e-7)


if __name__ == "__main__":
    key = jax.random.PRNGKey(0)
    kp, kx, kq, kt, kp2, kx2, kq2, kt2 = jax.random.split(key, 8)

    # --- check 1: faithful module (zero_module final layers), small batch ----------
    bs = 8
    params = init_params(kp, zero_final=True)
    packed = prepare_params(params)              # one-time packing (reused every call)
    pts_feat = jax.random.normal(kx, (bs, PTS_DIM), jnp.float32)
    sampled_pose = jax.random.normal(kq, (bs, POSE_DIM), jnp.float32)
    t = jax.random.uniform(kt, (bs, 1), jnp.float32, 1e-3, 1.0)

    out = jax.block_until_ready(forward_pallas(packed, pts_feat, sampled_pose, t))
    ref = forward_reference(params, pts_feat, sampled_pose, t)
    assert out.shape == (bs, OUT_DIM)
    np.testing.assert_allclose(np.asarray(out), np.asarray(ref), atol=1e-6)

    # --- check 2: non-zero final layers + multi-tile batch (exercises grid/padding) -
    bs2 = 200
    params2 = init_params(kp2, zero_final=False)
    packed2 = prepare_params(params2)
    pts_feat2 = jax.random.normal(kx2, (bs2, PTS_DIM), jnp.float32)
    sampled_pose2 = jax.random.normal(kq2, (bs2, POSE_DIM), jnp.float32)
    t2 = jax.random.uniform(kt2, (bs2, 1), jnp.float32, 0.1, 1.0)

    out2 = jax.block_until_ready(forward_pallas(packed2, pts_feat2, sampled_pose2, t2))
    ref2 = forward_reference(params2, pts_feat2, sampled_pose2, t2)
    assert out2.shape == (bs2, OUT_DIM)
    # bf16 weights/activations vs f32 reference -> relaxed tolerance
    np.testing.assert_allclose(np.asarray(out2), np.asarray(ref2), rtol=3e-2, atol=3e-2)

    print("KERNEL_OK")
</pallas_src>

<mosaic_0001>
module attributes {stable_mosaic.version = 11 : i64} {
  func.func @_pose_score_kernel(%arg0: i32, %arg1: memref<8x1024xbf16, #tpu.memory_space<vmem>>, %arg2: memref<8x128xbf16, #tpu.memory_space<vmem>>, %arg3: memref<8x1xf32, #tpu.memory_space<vmem>>, %arg4: memref<1x64xf32, #tpu.memory_space<vmem>>, %arg5: memref<64x128xbf16, #tpu.memory_space<vmem>>, %arg6: memref<64x128xbf16, #tpu.memory_space<vmem>>, %arg7: memref<1x128xf32, #tpu.memory_space<vmem>>, %arg8: memref<128x256xbf16, #tpu.memory_space<vmem>>, %arg9: memref<1x256xf32, #tpu.memory_space<vmem>>, %arg10: memref<256x256xbf16, #tpu.memory_space<vmem>>, %arg11: memref<1x256xf32, #tpu.memory_space<vmem>>, %arg12: memref<1024x768xbf16, #tpu.memory_space<vmem>>, %arg13: memref<128x768xbf16, #tpu.memory_space<vmem>>, %arg14: memref<256x768xbf16, #tpu.memory_space<vmem>>, %arg15: memref<1x768xf32, #tpu.memory_space<vmem>>, %arg16: memref<768x128xbf16, #tpu.memory_space<vmem>>, %arg17: memref<1x128xf32, #tpu.memory_space<vmem>>, %arg18: memref<8x128xf32, #tpu.memory_space<vmem>>) attributes {dimension_semantics = [#tpu.dimension_semantics<parallel>], iteration_bounds = array<i64: 1>, scalar_prefetch = 0 : i64, scratch_operands = 0 : i64, tpu.core_type = #tpu.core_type<tc>, window_params = [{transform_indices = @transform_0, window_bounds = array<i64: 8, 1024>}, {transform_indices = @transform_1, window_bounds = array<i64: 8, 128>}, {transform_indices = @transform_2, window_bounds = array<i64: 8, 1>}, {pipeline_mode = #tpu.pipeline_mode<synchronous>, transform_indices = @transform_3, window_bounds = array<i64: 1, 64>}, {pipeline_mode = #tpu.pipeline_mode<synchronous>, transform_indices = @transform_4, window_bounds = array<i64: 64, 128>}, {pipeline_mode = #tpu.pipeline_mode<synchronous>, transform_indices = @transform_5, window_bounds = array<i64: 64, 128>}, {pipeline_mode = #tpu.pipeline_mode<synchronous>, transform_indices = @transform_6, window_bounds = array<i64: 1, 128>}, {pipeline_mode = #tpu.pipeline_mode<synchronous>, transform_indices = @transform_7, window_bounds = array<i64: 128, 256>}, {pipeline_mode = #tpu.pipeline_mode<synchronous>, transform_indices = @transform_8, window_bounds = array<i64: 1, 256>}, {pipeline_mode = #tpu.pipeline_mode<synchronous>, transform_indices = @transform_9, window_bounds = array<i64: 256, 256>}, {pipeline_mode = #tpu.pipeline_mode<synchronous>, transform_indices = @transform_10, window_bounds = array<i64: 1, 256>}, {pipeline_mode = #tpu.pipeline_mode<synchronous>, transform_indices = @transform_11, window_bounds = array<i64: 1024, 768>}, {pipeline_mode = #tpu.pipeline_mode<synchronous>, transform_indices = @transform_12, window_bounds = array<i64: 128, 768>}, {pipeline_mode = #tpu.pipeline_mode<synchronous>, transform_indices = @transform_13, window_bounds = array<i64: 256, 768>}, {pipeline_mode = #tpu.pipeline_mode<synchronous>, transform_indices = @transform_14, window_bounds = array<i64: 1, 768>}, {pipeline_mode = #tpu.pipeline_mode<synchronous>, transform_indices = @transform_15, window_bounds = array<i64: 768, 128>}, {pipeline_mode = #tpu.pipeline_mode<synchronous>, transform_indices = @transform_16, window_bounds = array<i64: 1, 128>}, {transform_indices = @transform_17, window_bounds = array<i64: 8, 128>}]} {
    %c0 = arith.constant 0 : index
    %c0_0 = arith.constant 0 : index
    %0 = vector.load %arg3[%c0, %c0_0] : memref<8x1xf32, #tpu.memory_space<vmem>>, vector<8x1xf32>
    %c0_1 = arith.constant 0 : index
    %c0_2 = arith.constant 0 : index
    %1 = vector.load %arg4[%c0_1, %c0_2] : memref<1x64xf32, #tpu.memory_space<vmem>>, vector<1x64xf32>
    %2 = vector.broadcast %0 : vector<8x1xf32> to vector<8x64xf32>
    %3 = vector.broadcast %1 : vector<1x64xf32> to vector<8x64xf32>
    %4 = arith.mulf %2, %3 : vector<8x64xf32>
    %5 = math.sin %4 : vector<8x64xf32>
    %6 = arith.truncf %5 : vector<8x64xf32> to vector<8x64xbf16>
    %c0_3 = arith.constant 0 : index
    %c0_4 = arith.constant 0 : index
    %7 = vector.load %arg5[%c0_3, %c0_4] : memref<64x128xbf16, #tpu.memory_space<vmem>>, vector<64x128xbf16>
    %cst = arith.constant dense<0.000000e+00> : vector<8x128xf32>
    %8 = tpu.matmul %6, %7, %cst {dimension_numbers = #tpu.dot_dimension_numbers<[1], [0], [0], [1], [0, 0, 1, 1], [], []>} : vector<8x64xbf16>, vector<64x128xbf16>, vector<8x128xf32> -> vector<8x128xf32>
    %9 = math.cos %4 : vector<8x64xf32>
    %10 = arith.truncf %9 : vector<8x64xf32> to vector<8x64xbf16>
    %c0_5 = arith.constant 0 : index
    %c0_6 = arith.constant 0 : index
    %11 = vector.load %arg6[%c0_5, %c0_6] : memref<64x128xbf16, #tpu.memory_space<vmem>>, vector<64x128xbf16>
    %cst_7 = arith.constant dense<0.000000e+00> : vector<8x128xf32>
    %12 = tpu.matmul %10, %11, %cst_7 {dimension_numbers = #tpu.dot_dimension_numbers<[1], [0], [0], [1], [0, 0, 1, 1], [], []>} : vector<8x64xbf16>, vector<64x128xbf16>, vector<8x128xf32> -> vector<8x128xf32>
    %13 = arith.addf %8, %12 : vector<8x128xf32>
    %c0_8 = arith.constant 0 : index
    %c0_9 = arith.constant 0 : index
    %14 = vector.load %arg7[%c0_8, %c0_9] : memref<1x128xf32, #tpu.memory_space<vmem>>, vector<1x128xf32>
    %15 = vector.broadcast %14 : vector<1x128xf32> to vector<8x128xf32>
    %16 = arith.addf %13, %15 : vector<8x128xf32>
    %cst_10 = arith.constant 0.000000e+00 : f32
    %17 = vector.broadcast %cst_10 : f32 to vector<8x128xf32>
    %18 = arith.maximumf %16, %17 : vector<8x128xf32>
    %c0_11 = arith.constant 0 : index
    %c0_12 = arith.constant 0 : index
    %19 = vector.load %arg2[%c0_11, %c0_12] : memref<8x128xbf16, #tpu.memory_space<vmem>>, vector<8x128xbf16>
    %c0_13 = arith.constant 0 : index
    %c0_14 = arith.constant 0 : index
    %20 = vector.load %arg8[%c0_13, %c0_14] : memref<128x256xbf16, #tpu.memory_space<vmem>>, vector<128x256xbf16>
    %cst_15 = arith.constant dense<0.000000e+00> : vector<8x256xf32>
    %21 = tpu.matmul %19, %20, %cst_15 {dimension_numbers = #tpu.dot_dimension_numbers<[1], [0], [0], [1], [0, 0, 1, 1], [], []>} : vector<8x128xbf16>, vector<128x256xbf16>, vector<8x256xf32> -> vector<8x256xf32>
    %c0_16 = arith.constant 0 : index
    %c0_17 = arith.constant 0 : index
    %22 = vector.load %arg9[%c0_16, %c0_17] : memref<1x256xf32, #tpu.memory_space<vmem>>, vector<1x256xf32>
    %23 = vector.broadcast %22 : vector<1x256xf32> to vector<8x256xf32>
    %24 = arith.addf %21, %23 : vector<8x256xf32>
    %cst_18 = arith.constant 0.000000e+00 : f32
    %25 = vector.broadcast %cst_18 : f32 to vector<8x256xf32>
    %26 = arith.maximumf %24, %25 : vector<8x256xf32>
    %27 = arith.truncf %26 : vector<8x256xf32> to vector<8x256xbf16>
    %c0_19 = arith.constant 0 : index
    %c0_20 = arith.constant 0 : index
    %28 = vector.load %arg10[%c0_19, %c0_20] : memref<256x256xbf16, #tpu.memory_space<vmem>>, vector<256x256xbf16>
    %cst_21 = arith.constant dense<0.000000e+00> : vector<8x256xf32>
    %29 = tpu.matmul %27, %28, %cst_21 {dimension_numbers = #tpu.dot_dimension_numbers<[1], [0], [0], [1], [0, 0, 1, 1], [], []>} : vector<8x256xbf16>, vector<256x256xbf16>, vector<8x256xf32> -> vector<8x256xf32>
    %c0_22 = arith.constant 0 : index
    %c0_23 = arith.constant 0 : index
    %30 = vector.load %arg11[%c0_22, %c0_23] : memref<1x256xf32, #tpu.memory_space<vmem>>, vector<1x256xf32>
    %31 = vector.broadcast %30 : vector<1x256xf32> to vector<8x256xf32>
    %32 = arith.addf %29, %31 : vector<8x256xf32>
    %cst_24 = arith.constant 0.000000e+00 : f32
    %33 = vector.broadcast %cst_24 : f32 to vector<8x256xf32>
    %34 = arith.maximumf %32, %33 : vector<8x256xf32>
    %c0_25 = arith.constant 0 : index
    %c0_26 = arith.constant 0 : index
    %35 = vector.load %arg1[%c0_25, %c0_26] : memref<8x1024xbf16, #tpu.memory_space<vmem>>, vector<8x1024xbf16>
    %c0_27 = arith.constant 0 : index
    %c0_28 = arith.constant 0 : index
    %36 = vector.load %arg12[%c0_27, %c0_28] : memref<1024x768xbf16, #tpu.memory_space<vmem>>, vector<1024x768xbf16>
    %cst_29 = arith.constant dense<0.000000e+00> : vector<8x768xf32>
    %37 = tpu.matmul %35, %36, %cst_29 {dimension_numbers = #tpu.dot_dimension_numbers<[1], [0], [0], [1], [0, 0, 1, 1], [], []>} : vector<8x1024xbf16>, vector<1024x768xbf16>, vector<8x768xf32> -> vector<8x768xf32>
    %38 = arith.truncf %18 : vector<8x128xf32> to vector<8x128xbf16>
    %c0_30 = arith.constant 0 : index
    %c0_31 = arith.constant 0 : index
    %39 = vector.load %arg13[%c0_30, %c0_31] : memref<128x768xbf16, #tpu.memory_space<vmem>>, vector<128x768xbf16>
    %cst_32 = arith.constant dense<0.000000e+00> : vector<8x768xf32>
    %40 = tpu.matmul %38, %39, %cst_32 {dimension_numbers = #tpu.dot_dimension_numbers<[1], [0], [0], [1], [0, 0, 1, 1], [], []>} : vector<8x128xbf16>, vector<128x768xbf16>, vector<8x768xf32> -> vector<8x768xf32>
    %41 = arith.addf %37, %40 : vector<8x768xf32>
    %42 = arith.truncf %34 : vector<8x256xf32> to vector<8x256xbf16>
    %c0_33 = arith.constant 0 : index
    %c0_34 = arith.constant 0 : index
    %43 = vector.load %arg14[%c0_33, %c0_34] : memref<256x768xbf16, #tpu.memory_space<vmem>>, vector<256x768xbf16>
    %cst_35 = arith.constant dense<0.000000e+00> : vector<8x768xf32>
    %44 = tpu.matmul %42, %43, %cst_35 {dimension_numbers = #tpu.dot_dimension_numbers<[1], [0], [0], [1], [0, 0, 1, 1], [], []>} : vector<8x256xbf16>, vector<256x768xbf16>, vector<8x768xf32> -> vector<8x768xf32>
    %45 = arith.addf %41, %44 : vector<8x768xf32>
    %c0_36 = arith.constant 0 : index
    %c0_37 = arith.constant 0 : index
    %46 = vector.load %arg15[%c0_36, %c0_37] : memref<1x768xf32, #tpu.memory_space<vmem>>, vector<1x768xf32>
    %47 = vector.broadcast %46 : vector<1x768xf32> to vector<8x768xf32>
    %48 = arith.addf %45, %47 : vector<8x768xf32>
    %cst_38 = arith.constant 0.000000e+00 : f32
    %49 = vector.broadcast %cst_38 : f32 to vector<8x768xf32>
    %50 = arith.maximumf %48, %49 : vector<8x768xf32>
    %51 = arith.truncf %50 : vector<8x768xf32> to vector<8x768xbf16>
    %c0_39 = arith.constant 0 : index
    %c0_40 = arith.constant 0 : index
    %52 = vector.load %arg16[%c0_39, %c0_40] : memref<768x128xbf16, #tpu.memory_space<vmem>>, vector<768x128xbf16>
    %cst_41 = arith.constant dense<0.000000e+00> : vector<8x128xf32>
    %53 = tpu.matmul %51, %52, %cst_41 {dimension_numbers = #tpu.dot_dimension_numbers<[1], [0], [0], [1], [0, 0, 1, 1], [], []>} : vector<8x768xbf16>, vector<768x128xbf16>, vector<8x128xf32> -> vector<8x128xf32>
    %c0_42 = arith.constant 0 : index
    %c0_43 = arith.constant 0 : index
    %54 = vector.load %arg17[%c0_42, %c0_43] : memref<1x128xf32, #tpu.memory_space<vmem>>, vector<1x128xf32>
    %55 = vector.broadcast %54 : vector<1x128xf32> to vector<8x128xf32>
    %56 = arith.addf %53, %55 : vector<8x128xf32>
    %cst_44 = arith.constant 2.000000e+00 : f32
    %57 = vector.broadcast %cst_44 : f32 to vector<8x1xf32>
    %58 = arith.mulf %57, %0 : vector<8x1xf32>
    %cst_45 = arith.constant 3.21887589 : f32
    %59 = vector.broadcast %cst_45 : f32 to vector<8x1xf32>
    %60 = arith.mulf %58, %59 : vector<8x1xf32>
    %61 = math.exp %60 : vector<8x1xf32>
    %cst_46 = arith.constant 1.000000e+00 : f32
    %62 = vector.broadcast %cst_46 : f32 to vector<8x1xf32>
    %63 = arith.subf %61, %62 : vector<8x1xf32>
    %cst_47 = arith.constant 0.155333728 : f32
    %64 = vector.broadcast %cst_47 : f32 to vector<8x1xf32>
    %65 = arith.mulf %63, %64 : vector<8x1xf32>
    %66 = math.sqrt %65 : vector<8x1xf32>
    %cst_48 = arith.constant 1.000000e-07 : f32
    %67 = vector.broadcast %cst_48 : f32 to vector<8x1xf32>
    %68 = arith.addf %66, %67 : vector<8x1xf32>
    %69 = tpu.reciprocal %68 {approx = true} : vector<8x1xf32> -> vector<8x1xf32>
    %70 = vector.broadcast %69 : vector<8x1xf32> to vector<8x128xf32>
    %71 = arith.mulf %56, %70 : vector<8x128xf32>
    %c0_49 = arith.constant 0 : index
    %c0_50 = arith.constant 0 : index
    %72 = vector.load %arg18[%c0_49, %c0_50] : memref<8x128xf32, #tpu.memory_space<vmem>>, vector<8x128xf32>
    tpu.vector_store %arg18[%c0_49, %c0_50], %71 {strides = array<i32>} : memref<8x128xf32, #tpu.memory_space<vmem>>, vector<8x128xf32>,
    return
  }
  func.func @transform_0(%arg0: i32) -> (i32, i32) {
    %c0_i32 = arith.constant 0 : i32
    %c0_i32_0 = arith.constant 0 : i32
    return %arg0, %c0_i32 : i32, i32
  }
  func.func @transform_1(%arg0: i32) -> (i32, i32) {
    %c0_i32 = arith.constant 0 : i32
    %c0_i32_0 = arith.constant 0 : i32
    return %arg0, %c0_i32 : i32, i32
  }
  func.func @transform_2(%arg0: i32) -> (i32, i32) {
    %c0_i32 = arith.constant 0 : i32
    %c0_i32_0 = arith.constant 0 : i32
    return %arg0, %c0_i32 : i32, i32
  }
  func.func @transform_3(%arg0: i32) -> (i32, i32) {
    %c0_i32 = arith.constant 0 : i32
    %c0_i32_0 = arith.constant 0 : i32
    %c0_i32_1 = arith.constant 0 : i32
    return %c0_i32, %c0_i32_0 : i32, i32
  }
  func.func @transform_4(%arg0: i32) -> (i32, i32) {
    %c0_i32 = arith.constant 0 : i32
    %c0_i32_0 = arith.constant 0 : i32
    %c0_i32_1 = arith.constant 0 : i32
    return %c0_i32, %c0_i32_0 : i32, i32
  }
  func.func @transform_5(%arg0: i32) -> (i32, i32) {
    %c0_i32 = arith.constant 0 : i32
    %c0_i32_0 = arith.constant 0 : i32
    %c0_i32_1 = arith.constant 0 : i32
    return %c0_i32, %c0_i32_0 : i32, i32
  }
  func.func @transform_6(%arg0: i32) -> (i32, i32) {
    %c0_i32 = arith.constant 0 : i32
    %c0_i32_0 = arith.constant 0 : i32
    %c0_i32_1 = arith.constant 0 : i32
    return %c0_i32, %c0_i32_0 : i32, i32
  }
  func.func @transform_7(%arg0: i32) -> (i32, i32) {
    %c0_i32 = arith.constant 0 : i32
    %c0_i32_0 = arith.constant 0 : i32
    %c0_i32_1 = arith.constant 0 : i32
    return %c0_i32, %c0_i32_0 : i32, i32
  }
  func.func @transform_8(%arg0: i32) -> (i32, i32) {
    %c0_i32 = arith.constant 0 : i32
    %c0_i32_0 = arith.constant 0 : i32
    %c0_i32_1 = arith.constant 0 : i32
    return %c0_i32, %c0_i32_0 : i32, i32
  }
  func.func @transform_9(%arg0: i32) -> (i32, i32) {
    %c0_i32 = arith.constant 0 : i32
    %c0_i32_0 = arith.constant 0 : i32
    %c0_i32_1 = arith.constant 0 : i32
    return %c0_i32, %c0_i32_0 : i32, i32
  }
  func.func @transform_10(%arg0: i32) -> (i32, i32) {
    %c0_i32 = arith.constant 0 : i32
    %c0_i32_0 = arith.constant 0 : i32
    %c0_i32_1 = arith.constant 0 : i32
    return %c0_i32, %c0_i32_0 : i32, i32
  }
  func.func @transform_11(%arg0: i32) -> (i32, i32) {
    %c0_i32 = arith.constant 0 : i32
    %c0_i32_0 = arith.constant 0 : i32
    %c0_i32_1 = arith.constant 0 : i32
    return %c0_i32, %c0_i32_0 : i32, i32
  }
  func.func @transform_12(%arg0: i32) -> (i32, i32) {
    %c0_i32 = arith.constant 0 : i32
    %c0_i32_0 = arith.constant 0 : i32
    %c0_i32_1 = arith.constant 0 : i32
    return %c0_i32, %c0_i32_0 : i32, i32
  }
  func.func @transform_13(%arg0: i32) -> (i32, i32) {
    %c0_i32 = arith.constant 0 : i32
    %c0_i32_0 = arith.constant 0 : i32
    %c0_i32_1 = arith.constant 0 : i32
    return %c0_i32, %c0_i32_0 : i32, i32
  }
  func.func @transform_14(%arg0: i32) -> (i32, i32) {
    %c0_i32 = arith.constant 0 : i32
    %c0_i32_0 = arith.constant 0 : i32
    %c0_i32_1 = arith.constant 0 : i32
    return %c0_i32, %c0_i32_0 : i32, i32
  }
  func.func @transform_15(%arg0: i32) -> (i32, i32) {
    %c0_i32 = arith.constant 0 : i32
    %c0_i32_0 = arith.constant 0 : i32
    %c0_i32_1 = arith.constant 0 : i32
    return %c0_i32, %c0_i32_0 : i32, i32
  }
  func.func @transform_16(%arg0: i32) -> (i32, i32) {
    %c0_i32 = arith.constant 0 : i32
    %c0_i32_0 = arith.constant 0 : i32
    %c0_i32_1 = arith.constant 0 : i32
    return %c0_i32, %c0_i32_0 : i32, i32
  }
  func.func @transform_17(%arg0: i32) -> (i32, i32) {
    %c0_i32 = arith.constant 0 : i32
    %c0_i32_0 = arith.constant 0 : i32
    return %arg0, %c0_i32 : i32, i32
  }
}

</mosaic_0001>

<llo_original>
// kernel: forward_pallas.1
$region0: #{forward_pallas.1}
  #allocation0 [shape = 'u32[]', space=smem, size = 0x4, offset = 0x4, fixed_abs, tag = 'smem constant byte address 0x4 - core index']
  #allocation1 [shape = 'u32[72,128]{1,0:T(1,128)}', space=vmem, size = 0x9000, scoped, tag = 'internal scratch']
  %s0 = inlined_call_operand.vmem [shape: bf16[8,1024], index: 0, kind: input, shape index: {}]
  %s1 = inlined_call_operand.vmem [shape: bf16[8,128], index: 1, kind: input, shape index: {}]
  %s2 = inlined_call_operand.vmem [shape: f32[8,1], index: 2, kind: input, shape index: {}]
  %s3 = inlined_call_operand.hbm [shape: f32[1,64], index: 3, kind: input, shape index: {}]
  %s4 = inlined_call_operand.hbm [shape: bf16[64,128], index: 4, kind: input, shape index: {}]
  %s5 = inlined_call_operand.hbm [shape: bf16[64,128], index: 5, kind: input, shape index: {}]
  %s6 = inlined_call_operand.hbm [shape: f32[1,128], index: 6, kind: input, shape index: {}]
  %s7 = inlined_call_operand.hbm [shape: bf16[128,256], index: 7, kind: input, shape index: {}]
  %s8 = inlined_call_operand.hbm [shape: f32[1,256], index: 8, kind: input, shape index: {}]
  %s9 = inlined_call_operand.hbm [shape: bf16[256,256], index: 9, kind: input, shape index: {}]
  %s10 = inlined_call_operand.hbm [shape: f32[1,256], index: 10, kind: input, shape index: {}]
  %s11 = inlined_call_operand.hbm [shape: bf16[1024,768], index: 11, kind: input, shape index: {}]
  %s12 = inlined_call_operand.hbm [shape: bf16[128,768], index: 12, kind: input, shape index: {}]
  %s13 = inlined_call_operand.hbm [shape: bf16[256,768], index: 13, kind: input, shape index: {}]
  %s14 = inlined_call_operand.hbm [shape: f32[1,768], index: 14, kind: input, shape index: {}]
  %s15 = inlined_call_operand.hbm [shape: bf16[768,128], index: 15, kind: input, shape index: {}]
  %s16 = inlined_call_operand.hbm [shape: f32[1,128], index: 16, kind: input, shape index: {}]
  %s17 = inlined_call_operand.hbm [shape: f32[8,128], index: 17, kind: output, shape index: {}]
  %s18 = sld [smem:[#allocation0]]
  $region134: #{forward_pallas.1} parent=0
    _
  %s20 = ssub.s32 1, %s18
  %s21 = scalar_select 0, %s20, %s18
  $region1: #{forward_pallas.1} parent=0
    #allocation2 [shape = 'u8[512]{0}', space=vmem, size = 0x400, scoped, tag = 'input window, operand 3, single buffered']
    #allocation3 [shape = 's32[1]{0}', space=sflag, size = 0x4, scoped, tag = 'scoped memory for forward_pallas.1']
    #allocation4 [shape = 's32[1]{0}', space=sflag, size = 0x4, scoped, tag = 'scoped memory for forward_pallas.1']
    #allocation5 [shape = 'u8[16384]{0}', space=vmem, size = 0x4000, scoped, tag = 'input window, operand 4, single buffered']
    #allocation6 [shape = 's32[1]{0}', space=sflag, size = 0x4, scoped, tag = 'scoped memory for forward_pallas.1']
    #allocation7 [shape = 'u8[16384]{0}', space=vmem, size = 0x4000, scoped, tag = 'input window, operand 5, single buffered']
    #allocation8 [shape = 'u8[512]{0}', space=vmem, size = 0x400, scoped, tag = 'input window, operand 6, single buffered']
    #allocation9 [shape = 's32[1]{0}', space=sflag, size = 0x4, scoped, tag = 'scoped memory for forward_pallas.1']
    #allocation10 [shape = 'u8[65536]{0}', space=vmem, size = 0x10000, scoped, tag = 'input window, operand 7, single buffered']
    #allocation11 [shape = 'u8[1024]{0}', space=vmem, size = 0x400, scoped, tag = 'input window, operand 8, single buffered']
    #allocation12 [shape = 's32[1]{0}', space=sflag, size = 0x4, scoped, tag = 'scoped memory for forward_pallas.1']
    #allocation13 [shape = 'u8[131072]{0}', space=vmem, size = 0x20000, scoped, tag = 'input window, operand 9, single buffered']
    #allocation14 [shape = 'u8[1024]{0}', space=vmem, size = 0x400, scoped, tag = 'input window, operand 10, single buffered']
    #allocation15 [shape = 's32[1]{0}', space=sflag, size = 0x4, scoped, tag = 'scoped memory for forward_pallas.1']
    #allocation16 [shape = 'u8[1572864]{0}', space=vmem, size = 0x180000, scoped, tag = 'input window, operand 11, single buffered']
    #allocation17 [shape = 'u8[196608]{0}', space=vmem, size = 0x30000, scoped, tag = 'input window, operand 12, single buffered']
    #allocation18 [shape = 's32[1]{0}', space=sflag, size = 0x4, scoped, tag = 'scoped memory for forward_pallas.1']
    #allocation19 [shape = 'u8[393216]{0}', space=vmem, size = 0x60000, scoped, tag = 'input window, operand 13, single buffered']
    #allocation20 [shape = 'u8[3072]{0}', space=vmem, size = 0xc00, scoped, tag = 'input window, operand 14, single buffered']
    #allocation21 [shape = 's32[1]{0}', space=sflag, size = 0x4, scoped, tag = 'scoped memory for forward_pallas.1']
    #allocation22 [shape = 'u8[196608]{0}', space=vmem, size = 0x30000, scoped, tag = 'input window, operand 15, single buffered']
    #allocation23 [shape = 'u8[512]{0}', space=vmem, size = 0x400, scoped, tag = 'input window, operand 16, single buffered']
    #allocation24 [shape = 's32[1]{0}', space=sflag, size = 0x4, scoped, tag = 'scoped memory for forward_pallas.1']
    #allocation25 [shape = 'u8[4096]{0}', space=vmem, size = 0x1000, scoped, tag = 'output window, operand 0, single buffered']
    %22 = vsyncpa [#allocation3], 0
    %23 = vsyncpa [#allocation6], 0
    %24 = vsyncpa [#allocation9], 0
    %25 = vsyncpa [#allocation12], 0
    %26 = vsyncpa [#allocation15], 0
    %27 = vsyncpa [#allocation18], 0
    %28 = vsyncpa [#allocation21], 0
    %29 = vsyncpa [#allocation24], 0
    %30 = vsyncpa [#allocation4], 0
    // Predicated region
    $region2: #{forward_pallas.1} parent=1 // pred_check
      _
    $region3: #{forward_pallas.1} parent=1 // pred_check_branch
      %32 = sbr.rel (0) target = $region5
    $region4: #{forward_pallas.1} parent=1 // pred_region
      _
    $region5: #{forward_pallas.1} parent=1 // pred_fallthru
      _
    // Predicated region
    $region6: #{forward_pallas.1} parent=1 // pred_check
      _
    $region7: #{forward_pallas.1} parent=1 // pred_check_branch
      %34 = sbr.rel (0) target = $region9
    $region8: #{forward_pallas.1} parent=1 // pred_region
      _
    $region9: #{forward_pallas.1} parent=1 // pred_fallthru
      _
    // Predicated region
    $region10: #{forward_pallas.1} parent=1 // pred_check
      _
    $region11: #{forward_pallas.1} parent=1 // pred_check_branch
      %36 = sbr.rel (0) target = $region13
    $region12: #{forward_pallas.1} parent=1 // pred_region
      _
    $region13: #{forward_pallas.1} parent=1 // pred_fallthru
      _
    // Predicated region
    $region14: #{forward_pallas.1} parent=1 // pred_check
      _
    $region15: #{forward_pallas.1} parent=1 // pred_check_branch
      %38 = sbr.rel (0) target = $region17
    $region16: #{forward_pallas.1} parent=1 // pred_region
      %40 = vsyncadd [#allocation3], 0
      %s42 = sshll.u32 %s3, 4
      %s43 = int_to_ptr.hbm [resolvable:$true] %s42
      %s44 = sshll.u32 [#allocation2], 4
      %s45 = int_to_ptr.vmem [resolvable:$true] %s44
      %47 = dma.hbm_to_vmem [thread:$0]  %s43, 16, %s45, [#allocation3]
    $region17: #{forward_pallas.1} parent=1 // pred_fallthru
      _
    // Predicated region
    $region18: #{forward_pallas.1} parent=1 // pred_check
      _
    $region19: #{forward_pallas.1} parent=1 // pred_check_branch
      %49 = sbr.rel (0) target = $region21
    $region20: #{forward_pallas.1} parent=1 // pred_region
      %51 = vsyncadd [#allocation6], 0
      %s52 = sshll.u32 %s4, 4
      %s53 = int_to_ptr.hbm [resolvable:$true] %s52
      %s54 = sshll.u32 [#allocation5], 4
      %s55 = int_to_ptr.vmem [resolvable:$true] %s54
      %60 = dma.hbm_to_vmem [thread:$0]  %s53, 512, %s55, [#allocation6], 64, 64, 4
    $region21: #{forward_pallas.1} parent=1 // pred_fallthru
      _
    // Predicated region
    $region22: #{forward_pallas.1} parent=1 // pred_check
      _
    $region23: #{forward_pallas.1} parent=1 // pred_check_branch
      %62 = sbr.rel (0) target = $region25
    $region24: #{forward_pallas.1} parent=1 // pred_region
      %64 = vsyncadd [#allocation6], 0
      %s65 = sshll.u32 %s5, 4
      %s66 = int_to_ptr.hbm [resolvable:$true] %s65
      %s67 = sshll.u32 [#allocation7], 4
      %s68 = int_to_ptr.vmem [resolvable:$true] %s67
      %73 = dma.hbm_to_vmem [thread:$0]  %s66, 512, %s68, [#allocation6], 64, 64, 4
    $region25: #{forward_pallas.1} parent=1 // pred_fallthru
      _
    // Predicated region
    $region26: #{forward_pallas.1} parent=1 // pred_check
      _
    $region27: #{forward_pallas.1} parent=1 // pred_check_branch
      %75 = sbr.rel (0) target = $region29
    $region28: #{forward_pallas.1} parent=1 // pred_region
      %77 = vsyncadd [#allocation9], 0
      %s79 = sshll.u32 %s6, 4
      %s80 = int_to_ptr.hbm [resolvable:$true] %s79
      %s81 = sshll.u32 [#allocation8], 4
      %s82 = int_to_ptr.vmem [resolvable:$true] %s81
      %84 = dma.hbm_to_vmem [thread:$0]  %s80, 16, %s82, [#allocation9]
    $region29: #{forward_pallas.1} parent=1 // pred_fallthru
      _
    // Predicated region
    $region30: #{forward_pallas.1} parent=1 // pred_check
      _
    $region31: #{forward_pallas.1} parent=1 // pred_check_branch
      %86 = sbr.rel (0) target = $region33
    $region32: #{forward_pallas.1} parent=1 // pred_region
      %88 = vsyncadd [#allocation9], 0
      %s89 = sshll.u32 %s7, 4
      %s90 = int_to_ptr.hbm [resolvable:$true] %s89
      %s91 = sshll.u32 [#allocation10], 4
      %s92 = int_to_ptr.vmem [resolvable:$true] %s91
      %97 = dma.hbm_to_vmem [thread:$0]  %s90, 2048, %s92, [#allocation9], 128, 128, 8
    $region33: #{forward_pallas.1} parent=1 // pred_fallthru
      _
    // Predicated region
    $region34: #{forward_pallas.1} parent=1 // pred_check
      _
    $region35: #{forward_pallas.1} parent=1 // pred_check_branch
      %99 = sbr.rel (0) target = $region37
    $region36: #{forward_pallas.1} parent=1 // pred_region
      %101 = vsyncadd [#allocation12], 0
      %s103 = sshll.u32 %s8, 4
      %s104 = int_to_ptr.hbm [resolvable:$true] %s103
      %s105 = sshll.u32 [#allocation11], 4
      %s106 = int_to_ptr.vmem [resolvable:$true] %s105
      %108 = dma.hbm_to_vmem [thread:$0]  %s104, 32, %s106, [#allocation12]
    $region37: #{forward_pallas.1} parent=1 // pred_fallthru
      _
    // Predicated region
    $region38: #{forward_pallas.1} parent=1 // pred_check
      _
    $region39: #{forward_pallas.1} parent=1 // pred_check_branch
      %110 = sbr.rel (0) target = $region41
    $region40: #{forward_pallas.1} parent=1 // pred_region
      %112 = vsyncadd [#allocation12], 0
      %s113 = sshll.u32 %s9, 4
      %s114 = int_to_ptr.hbm [resolvable:$true] %s113
      %s115 = sshll.u32 [#allocation13], 4
      %s116 = int_to_ptr.vmem [resolvable:$true] %s115
      %121 = dma.hbm_to_vmem [thread:$0]  %s114, 4096, %s116, [#allocation12], 128, 128, 8
    $region41: #{forward_pallas.1} parent=1 // pred_fallthru
      _
    // Predicated region
    $region42: #{forward_pallas.1} parent=1 // pred_check
      _
    $region43: #{forward_pallas.1} parent=1 // pred_check_branch
      %123 = sbr.rel (0) target = $region45
    $region44: #{forward_pallas.1} parent=1 // pred_region
      %125 = vsyncadd [#allocation15], 0
      %s127 = sshll.u32 %s10, 4
      %s128 = int_to_ptr.hbm [resolvable:$true] %s127
      %s129 = sshll.u32 [#allocation14], 4
      %s130 = int_to_ptr.vmem [resolvable:$true] %s129
      %132 = dma.hbm_to_vmem [thread:$0]  %s128, 32, %s130, [#allocation15]
    $region45: #{forward_pallas.1} parent=1 // pred_fallthru
      _
    // Predicated region
    $region46: #{forward_pallas.1} parent=1 // pred_check
      _
    $region47: #{forward_pallas.1} parent=1 // pred_check_branch
      %134 = sbr.rel (0) target = $region49
    $region48: #{forward_pallas.1} parent=1 // pred_region
      %136 = vsyncadd [#allocation15], 0
      %s137 = sshll.u32 %s11, 4
      %s138 = int_to_ptr.hbm [resolvable:$true] %s137
      %s139 = sshll.u32 [#allocation16], 4
      %s140 = int_to_ptr.vmem [resolvable:$true] %s139
      %145 = dma.hbm_to_vmem [thread:$0]  %s138, 49152, %s140, [#allocation15], 384, 384, 24
    $region49: #{forward_pallas.1} parent=1 // pred_fallthru
      _
    // Predicated region
    $region50: #{forward_pallas.1} parent=1 // pred_check
      _
    $region51: #{forward_pallas.1} parent=1 // pred_check_branch
      %147 = sbr.rel (0) target = $region53
    $region52: #{forward_pallas.1} parent=1 // pred_region
      %149 = vsyncadd [#allocation18], 0
      %s150 = sshll.u32 %s12, 4
      %s151 = int_to_ptr.hbm [resolvable:$true] %s150
      %s152 = sshll.u32 [#allocation17], 4
      %s153 = int_to_ptr.vmem [resolvable:$true] %s152
      %158 = dma.hbm_to_vmem [thread:$0]  %s151, 6144, %s153, [#allocation18], 384, 384, 24
    $region53: #{forward_pallas.1} parent=1 // pred_fallthru
      _
    // Predicated region
    $region54: #{forward_pallas.1} parent=1 // pred_check
      _
    $region55: #{forward_pallas.1} parent=1 // pred_check_branch
      %160 = sbr.rel (0) target = $region57
    $region56: #{forward_pallas.1} parent=1 // pred_region
      %162 = vsyncadd [#allocation18], 0
      %s163 = sshll.u32 %s13, 4
      %s164 = int_to_ptr.hbm [resolvable:$true] %s163
      %s165 = sshll.u32 [#allocation19], 4
      %s166 = int_to_ptr.vmem [resolvable:$true] %s165
      %171 = dma.hbm_to_vmem [thread:$0]  %s164, 12288, %s166, [#allocation18], 384, 384, 24
    $region57: #{forward_pallas.1} parent=1 // pred_fallthru
      _
    // Predicated region
    $region58: #{forward_pallas.1} parent=1 // pred_check
      _
    $region59: #{forward_pallas.1} parent=1 // pred_check_branch
      %173 = sbr.rel (0) target = $region61
    $region60: #{forward_pallas.1} parent=1 // pred_region
      %175 = vsyncadd [#allocation21], 0
      %s177 = sshll.u32 %s14, 4
      %s178 = int_to_ptr.hbm [resolvable:$true] %s177
      %s179 = sshll.u32 [#allocation20], 4
      %s180 = int_to_ptr.vmem [resolvable:$true] %s179
      %182 = dma.hbm_to_vmem [thread:$0]  %s178, 96, %s180, [#allocation21]
    $region61: #{forward_pallas.1} parent=1 // pred_fallthru
      _
    // Predicated region
    $region62: #{forward_pallas.1} parent=1 // pred_check
      _
    $region63: #{forward_pallas.1} parent=1 // pred_check_branch
      %184 = sbr.rel (0) target = $region65
    $region64: #{forward_pallas.1} parent=1 // pred_region
      %186 = vsyncadd [#allocation21], 0
      %s187 = sshll.u32 %s15, 4
      %s188 = int_to_ptr.hbm [resolvable:$true] %s187
      %s189 = sshll.u32 [#allocation22], 4
      %s190 = int_to_ptr.vmem [resolvable:$true] %s189
      %195 = dma.hbm_to_vmem [thread:$0]  %s188, 6144, %s190, [#allocation21], 64, 64, 4
    $region65: #{forward_pallas.1} parent=1 // pred_fallthru
      _
    // Predicated region
    $region66: #{forward_pallas.1} parent=1 // pred_check
      _
    $region67: #{forward_pallas.1} parent=1 // pred_check_branch
      %197 = sbr.rel (0) target = $region69
    $region68: #{forward_pallas.1} parent=1 // pred_region
      %199 = vsyncadd [#allocation24], 0
      %s201 = sshll.u32 %s16, 4
      %s202 = int_to_ptr.hbm [resolvable:$true] %s201
      %s203 = sshll.u32 [#allocation23], 4
      %s204 = int_to_ptr.vmem [resolvable:$true] %s203
      %206 = dma.hbm_to_vmem [thread:$0]  %s202, 16, %s204, [#allocation24]
    $region69: #{forward_pallas.1} parent=1 // pred_fallthru
      _
    // Predicated region
    $region70: #{forward_pallas.1} parent=1 // pred_check
      _
    $region71: #{forward_pallas.1} parent=1 // pred_check_branch
      %208 = sbr.rel (0) target = $region73
    $region72: #{forward_pallas.1} parent=1 // pred_region
      %210 = dma.done [#allocation3], 16
    $region73: #{forward_pallas.1} parent=1 // pred_fallthru
      _
    // Predicated region
    $region74: #{forward_pallas.1} parent=1 // pred_check
      _
    $region75: #{forward_pallas.1} parent=1 // pred_check_branch
      %212 = sbr.rel (0) target = $region77
    $region76: #{forward_pallas.1} parent=1 // pred_region
      %214 = dma.done [#allocation6], 512
    $region77: #{forward_pallas.1} parent=1 // pred_fallthru
      _
    // Predicated region
    $region78: #{forward_pallas.1} parent=1 // pred_check
      _
    $region79: #{forward_pallas.1} parent=1 // pred_check_branch
      %216 = sbr.rel (0) target = $region81
    $region80: #{forward_pallas.1} parent=1 // pred_region
      %218 = dma.done [#allocation6], 512
    $region81: #{forward_pallas.1} parent=1 // pred_fallthru
      _
    // Predicated region
    $region82: #{forward_pallas.1} parent=1 // pred_check
      _
    $region83: #{forward_pallas.1} parent=1 // pred_check_branch
      %220 = sbr.rel (0) target = $region85
    $region84: #{forward_pallas.1} parent=1 // pred_region
      %222 = dma.done [#allocation9], 16
    $region85: #{forward_pallas.1} parent=1 // pred_fallthru
      _
    // Predicated region
    $region86: #{forward_pallas.1} parent=1 // pred_check
      _
    $region87: #{forward_pallas.1} parent=1 // pred_check_branch
      %224 = sbr.rel (0) target = $region89
    $region88: #{forward_pallas.1} parent=1 // pred_region
      %226 = dma.done [#allocation9], 2048
    $region89: #{forward_pallas.1} parent=1 // pred_fallthru
      _
    // Predicated region
    $region90: #{forward_pallas.1} parent=1 // pred_check
      _
    $region91: #{forward_pallas.1} parent=1 // pred_check_branch
      %228 = sbr.rel (0) target = $region93
    $region92: #{forward_pallas.1} parent=1 // pred_region
      %230 = dma.done [#allocation12], 32
    $region93: #{forward_pallas.1} parent=1 // pred_fallthru
      _
    // Predicated region
    $region94: #{forward_pallas.1} parent=1 // pred_check
      _
    $region95: #{forward_pallas.1} parent=1 // pred_check_branch
      %232 = sbr.rel (0) target = $region97
    $region96: #{forward_pallas.1} parent=1 // pred_region
      %234 = dma.done [#allocation12], 4096
    $region97: #{forward_pallas.1} parent=1 // pred_fallthru
      _
    // Predicated region
    $region98: #{forward_pallas.1} parent=1 // pred_check
      _
    $region99: #{forward_pallas.1} parent=1 // pred_check_branch
      %236 = sbr.rel (0) target = $region101
    $region100: #{forward_pallas.1} parent=1 // pred_region
      %238 = dma.done [#allocation15], 32
    $region101: #{forward_pallas.1} parent=1 // pred_fallthru
      _
    // Predicated region
    $region102: #{forward_pallas.1} parent=1 // pred_check
      _
    $region103: #{forward_pallas.1} parent=1 // pred_check_branch
      %240 = sbr.rel (0) target = $region105
    $region104: #{forward_pallas.1} parent=1 // pred_region
      %242 = dma.done [#allocation15], 49152
    $region105: #{forward_pallas.1} parent=1 // pred_fallthru
      _
    // Predicated region
    $region106: #{forward_pallas.1} parent=1 // pred_check
      _
    $region107: #{forward_pallas.1} parent=1 // pred_check_branch
      %244 = sbr.rel (0) target = $region109
    $region108: #{forward_pallas.1} parent=1 // pred_region
      %246 = dma.done [#allocation18], 6144
    $region109: #{forward_pallas.1} parent=1 // pred_fallthru
      _
    // Predicated region
    $region110: #{forward_pallas.1} parent=1 // pred_check
      _
    $region111: #{forward_pallas.1} parent=1 // pred_check_branch
      %248 = sbr.rel (0) target = $region113
    $region112: #{forward_pallas.1} parent=1 // pred_region
      %250 = dma.done [#allocation18], 12288
    $region113: #{forward_pallas.1} parent=1 // pred_fallthru
      _
    // Predicated region
    $region114: #{forward_pallas.1} parent=1 // pred_check
      _
    $region115: #{forward_pallas.1} parent=1 // pred_check_branch
      %252 = sbr.rel (0) target = $region117
    $region116: #{forward_pallas.1} parent=1 // pred_region
      %254 = dma.done [#allocation21], 96
    $region117: #{forward_pallas.1} parent=1 // pred_fallthru
      _
    // Predicated region
    $region118: #{forward_pallas.1} parent=1 // pred_check
      _
    $region119: #{forward_pallas.1} parent=1 // pred_check_branch
      %256 = sbr.rel (0) target = $region121
    $region120: #{forward_pallas.1} parent=1 // pred_region
      %258 = dma.done [#allocation21], 6144
    $region121: #{forward_pallas.1} parent=1 // pred_fallthru
      _
    // Predicated region
    $region122: #{forward_pallas.1} parent=1 // pred_check
      _
    $region123: #{forward_pallas.1} parent=1 // pred_check_branch
      %260 = sbr.rel (0) target = $region125
    $region124: #{forward_pallas.1} parent=1 // pred_region
      %262 = dma.done [#allocation24], 16
    $region125: #{forward_pallas.1} parent=1 // pred_fallthru
      _
    %v264 = vld [vmem:[%s2] sm:$0xff]
    %v265 = vld [vmem:[#allocation2] sm:$0x1]
    %267 = vset.pattern.permute.xlu0 0
    %268 = vperm.xlu0 %267, %v264
    %v269 = vpop.permute.xlu0 %268
    %v272 = vperm.slane %v265, 0
    %v274 = vmul.f32 %v269, %v272
    %v275 = vand.u32 2147483647, %v274
    %vm276 = vcmp.le.f32.partialorder %v275, 0.7853982
    %vm277 = vcmp.lt.s32.totalorder %v274, 0
    %v278 = vand.u32 %v274, 2139095040
    %v279 = vshrl.u32 %v278, 23
    %v280 = vsub.s32 %v279, 127
    %v281 = vand.u32 2147483647, %v274
    %v282 = vand.u32 %v281, 8388607
    %v283 = vor.u32 %v282, 8388608
    %v284 = vsub.s32 0, %v283
    %v285 = vadd.s32 %v280, 1
    %vm286 = vcmp.gt.s32.totalorder %v285, 0
    %v287 = vsel %vm286, %v285, 0
    %v288 = vshrl.u32 %v287, 5
    %v289 = vand.u32 %v287, 31
    %v290 = vsub.s32 32, %v289
    %v291 = vshrl.u32 683565275, %v290
    %v292 = vshll.u32 683565275, %v289
    %v293 = vshrl.u32 2475754826, %v290
    %v294 = vor.u32 %v292, %v293
    %v295 = vshll.u32 2475754826, %v289
    %v296 = vshrl.u32 2131351028, %v290
    %v297 = vor.u32 %v295, %v296
    %v298 = vshll.u32 2131351028, %v289
    %v299 = vshrl.u32 2102212464, %v290
    %v300 = vor.u32 %v298, %v299
    %v301 = vshll.u32 2102212464, %v289
    %v302 = vshrl.u32 920167782, %v290
    %v303 = vor.u32 %v301, %v302
    %v304 = vshll.u32 920167782, %v289
    %v305 = vshrl.u32 1326507024, %v290
    %v306 = vor.u32 %v304, %v305
    %vm307 = vcmp.lt.s32.totalorder %v288, 1
    %vm308 = vcmp.lt.s32.totalorder %v288, 2
    %vm309 = vcmp.lt.s32.totalorder %v288, 3
    %vm310 = vcmp.lt.s32.totalorder %v288, 4
    %v311 = vsel %vm307, %v291, %v294
    %v312 = vsel %vm310, %v300, 2102212464
    %v313 = vsel %vm309, %v297, %v312
    %v314 = vsel %vm308, %v311, %v313
    %v315 = vsel %vm307, %v294, %v297
    %v316 = vsel %vm310, %v303, 920167782
    %v317 = vsel %vm309, %v300, %v316
    %v318 = vsel %vm308, %v315, %v317
    %v319 = vsel %vm307, %v297, %v300
    %v320 = vsel %vm310, %v306, 1326507024
    %v321 = vsel %vm309, %v303, %v320
    %v322 = vsel %vm308, %v319, %v321
    %v323 = vshll.u32 %v283, 8
    %v324 = vand.u32 %v323, 65535
    %v325 = vshrl.u32 %v323, 16
    %v326 = vand.u32 %v322, 65535
    %v327 = vshrl.u32 %v322, 16
    %v328 = vmul.u32 %v324, %v326
    %v329 = vmul.u32 %v324, %v327
    %v330 = vmul.u32 %v325, %v326
    %v331 = vmul.u32 %v325, %v327
    %v332 = vshll.u32 %v329, 16
    %v333 = vshrl.u32 %v329, 16
    %v334 = vshll.u32 %v330, 16
    %v335 = vshrl.u32 %v330, 16
    %vm336 = vc.u32 %v328, %v332
    %v337 = vsel %vm336, 1, 0
    %v338 = vadd.s32 %v328, %v332
    %v339 = vadd.s32 %v331, %v337
    %vm340 = vc.u32 %v338, %v334
    %v341 = vsel %vm340, 1, 0
    %v342 = vadd.s32 %v338, %v334
    %v343 = vadd.s32 %v339, %v341
    %v344 = vadd.s32 %v343, %v333
    %v345 = vadd.s32 %v344, %v335
    %v346 = vand.u32 %v323, 65535
    %v347 = vshrl.u32 %v323, 16
    %v348 = vand.u32 %v318, 65535
    %v349 = vshrl.u32 %v318, 16
    %v350 = vmul.u32 %v346, %v348
    %v351 = vmul.u32 %v346, %v349
    %v352 = vmul.u32 %v347, %v348
    %v353 = vmul.u32 %v347, %v349
    %v354 = vshll.u32 %v351, 16
    %v355 = vshrl.u32 %v351, 16
    %v356 = vshll.u32 %v352, 16
    %v357 = vshrl.u32 %v352, 16
    %vm358 = vc.u32 %v350, %v354
    %v359 = vsel %vm358, 1, 0
    %v360 = vadd.s32 %v350, %v354
    %v361 = vadd.s32 %v353, %v359
    %vm362 = vc.u32 %v360, %v356
    %v363 = vsel %vm362, 1, 0
    %v364 = vadd.s32 %v360, %v356
    %v365 = vadd.s32 %v361, %v363
    %v366 = vadd.s32 %v365, %v355
    %v367 = vadd.s32 %v366, %v357
    %v368 = vmul.u32 %v323, %v314
    %v369 = vadd.s32 %v345, %v364
    %vm370 = vc.u32 %v345, %v364
    %v371 = vadd.s32 %v367, 1
    %v372 = vsel %vm370, %v371, %v367
    %v373 = vadd.s32 %v368, %v372
    %v374 = vadd.s32 %v373, 536870912
    %v375 = vshrl.u32 %v374, 30
    %v376 = vshll.u32 %v375, 30
    %v377 = vsub.s32 %v373, %v376
    %vm378 = vcmp.lt.s32.totalorder %v377, 0
    %v379 = vsub.s32 0, %v377
    %v380 = vsel %vm378, %v379, %v377
    %v381 = vclz %v380
    %v382 = vsub.s32 %v381, 2
    %vm383 = vcmp.gt.s32.totalorder 0, %v382
    %v384 = vsel %vm383, 0, %v382
    %v385 = vsub.s32 32, %v384
    %v386 = vshll.u32 %v377, %v384
    %v387 = vshrl.u32 %v369, %v385
    %v388 = vor.u32 %v386, %v387
    %v389 = vsub.s32 4294967266, %v384
    %v390 = vadd.s32 %v389, 127
    %v391 = vshll.u32 %v390, 23
    %v392 = vor.u32 4788187, %v391
    %v393 = vand.u32 2147483647, %v392
    %v395 = vcvt.s32.f32 %v388
    %v396 = vmul.f32 %v395, %v393
    %v397 = vxor.u32 %v396, 2147483648
    %v398 = vsel %vm277, %v397, %v396
    %v399 = vsub.s32 4, %v375
    %v400 = vsel %vm277, %v399, %v375
    %v401 = vsel %vm276, %v274, %v398
    %v402 = vsel %vm276, 0, %v400
    %v403 = vmul.f32 %v401, %v401
    %v404 = vmul.f32 %v403, -0.001358992
    %v405 = vadd.f32 %v404, 0.041655596
    %v406 = vmul.f32 %v403, %v405
    %v407 = vadd.f32 %v406, -0.4999988
    %v408 = vmul.f32 %v403, %v407
    %v409 = vadd.f32 1.0, %v408
    %v410 = vmul.f32 %v401, %v401
    %v411 = vmul.f32 %v410, -0.00019511016
    %v412 = vadd.f32 %v411, 0.008332121
    %v413 = vmul.f32 %v410, %v412
    %v414 = vadd.f32 %v413, -0.16666654
    %v415 = vmul.f32 %v410, %v414
    %v416 = vadd.f32 %v415, 1.0
    %v417 = vmul.f32 %v416, %v401
    %vm418 = vweird.f32 %v274
    %v419 = vadd.s32 %v402, 3
    %v420 = vand.u32 %v419, 3
    %vm421 = vcmp.lt.s32.totalorder %v420, 2
    %vm422 = vcmp.eq.s32.totalorder %v420, 0
    %v423 = vxor.u32 %v417, 2147483648
    %v424 = vsel %vm422, %v409, %v423
    %vm425 = vcmp.eq.s32.totalorder %v420, 2
    %v426 = vxor.u32 %v409, 2147483648
    %v427 = vsel %vm425, %v426, %v417
    %v428 = vsel %vm421, %v424, %v427
    %v429 = vsel %vm418, nan, %v428
    %v430 = vpack.c.bf16 %v429, %v429
    %v431 = vld [vmem:[#allocation5] sm:$0xf]
    %v432 = vld [vmem:[#allocation5 + $0x4] sm:$0xf]
    %v433 = vld [vmem:[#allocation5 + $0x8] sm:$0xf]
    %v434 = vld [vmem:[#allocation5 + $0xc] sm:$0xf]
    %v435 = vld [vmem:[#allocation5 + $0x10] sm:$0xf]
    %v436 = vld [vmem:[#allocation5 + $0x14] sm:$0xf]
    %v437 = vld [vmem:[#allocation5 + $0x18] sm:$0xf]
    %v438 = vld [vmem:[#allocation5 + $0x1c] sm:$0xf]
    %v439 = vand.u32 2147483647, %v274
    %vm440 = vcmp.le.f32.partialorder %v439, 0.7853982
    %vm441 = vcmp.lt.s32.totalorder %v274, 0
    %v442 = vand.u32 %v274, 2139095040
    %v443 = vshrl.u32 %v442, 23
    %v444 = vsub.s32 %v443, 127
    %v445 = vand.u32 2147483647, %v274
    %v446 = vand.u32 %v445, 8388607
    %v447 = vor.u32 %v446, 8388608
    %v448 = vsub.s32 0, %v447
    %v449 = vadd.s32 %v444, 1
    %vm450 = vcmp.gt.s32.totalorder %v449, 0
    %v451 = vsel %vm450, %v449, 0
    %v452 = vshrl.u32 %v451, 5
    %v453 = vand.u32 %v451, 31
    %v454 = vsub.s32 32, %v453
    %v455 = vshrl.u32 683565275, %v454
    %v456 = vshll.u32 683565275, %v453
    %v457 = vshrl.u32 2475754826, %v454
    %v458 = vor.u32 %v456, %v457
    %v459 = vshll.u32 2475754826, %v453
    %v460 = vshrl.u32 2131351028, %v454
    %v461 = vor.u32 %v459, %v460
    %v462 = vshll.u32 2131351028, %v453
    %v463 = vshrl.u32 2102212464, %v454
    %v464 = vor.u32 %v462, %v463
    %v465 = vshll.u32 2102212464, %v453
    %v466 = vshrl.u32 920167782, %v454
    %v467 = vor.u32 %v465, %v466
    %v468 = vshll.u32 920167782, %v453
    %v469 = vshrl.u32 1326507024, %v454
    %v470 = vor.u32 %v468, %v469
    %vm471 = vcmp.lt.s32.totalorder %v452, 1
    %vm472 = vcmp.lt.s32.totalorder %v452, 2
    %vm473 = vcmp.lt.s32.totalorder %v452, 3
    %vm474 = vcmp.lt.s32.totalorder %v452, 4
    %v475 = vsel %vm471, %v455, %v458
    %v476 = vsel %vm474, %v464, 2102212464
    %v477 = vsel %vm473, %v461, %v476
    %v478 = vsel %vm472, %v475, %v477
    %v479 = vsel %vm471, %v458, %v461
    %v480 = vsel %vm474, %v467, 920167782
    %v481 = vsel %vm473, %v464, %v480
    %v482 = vsel %vm472, %v479, %v481
    %v483 = vsel %vm471, %v461, %v464
    %v484 = vsel %vm474, %v470, 1326507024
    %v485 = vsel %vm473, %v467, %v484
    %v486 = vsel %vm472, %v483, %v485
    %v487 = vshll.u32 %v447, 8
    %v488 = vand.u32 %v487, 65535
    %v489 = vshrl.u32 %v487, 16
    %v490 = vand.u32 %v486, 65535
    %v491 = vshrl.u32 %v486, 16
    %v492 = vmul.u32 %v488, %v490
    %v493 = vmul.u32 %v488, %v491
    %v494 = vmul.u32 %v489, %v490
    %v495 = vmul.u32 %v489, %v491
    %v496 = vshll.u32 %v493, 16
    %v497 = vshrl.u32 %v493, 16
    %v498 = vshll.u32 %v494, 16
    %v499 = vshrl.u32 %v494, 16
    %vm500 = vc.u32 %v492, %v496
    %v501 = vsel %vm500, 1, 0
    %v502 = vadd.s32 %v492, %v496
    %v503 = vadd.s32 %v495, %v501
    %vm504 = vc.u32 %v502, %v498
    %v505 = vsel %vm504, 1, 0
    %v506 = vadd.s32 %v502, %v498
    %v507 = vadd.s32 %v503, %v505
    %v508 = vadd.s32 %v507, %v497
    %v509 = vadd.s32 %v508, %v499
    %v510 = vand.u32 %v487, 65535
    %v511 = vshrl.u32 %v487, 16
    %v512 = vand.u32 %v482, 65535
    %v513 = vshrl.u32 %v482, 16
    %v514 = vmul.u32 %v510, %v512
    %v515 = vmul.u32 %v510, %v513
    %v516 = vmul.u32 %v511, %v512
    %v517 = vmul.u32 %v511, %v513
    %v518 = vshll.u32 %v515, 16
    %v519 = vshrl.u32 %v515, 16
    %v520 = vshll.u32 %v516, 16
    %v521 = vshrl.u32 %v516, 16
    %vm522 = vc.u32 %v514, %v518
    %v523 = vsel %vm522, 1, 0
    %v524 = vadd.s32 %v514, %v518
    %v525 = vadd.s32 %v517, %v523
    %vm526 = vc.u32 %v524, %v520
    %v527 = vsel %vm526, 1, 0
    %v528 = vadd.s32 %v524, %v520
    %v529 = vadd.s32 %v525, %v527
    %v530 = vadd.s32 %v529, %v519
    %v531 = vadd.s32 %v530, %v521
    %v532 = vmul.u32 %v487, %v478
    %v533 = vadd.s32 %v509, %v528
    %vm534 = vc.u32 %v509, %v528
    %v535 = vadd.s32 %v531, 1
    %v536 = vsel %vm534, %v535, %v531
    %v537 = vadd.s32 %v532, %v536
    %v538 = vadd.s32 %v537, 536870912
    %v539 = vshrl.u32 %v538, 30
    %v540 = vshll.u32 %v539, 30
    %v541 = vsub.s32 %v537, %v540
    %vm542 = vcmp.lt.s32.totalorder %v541, 0
    %v543 = vsub.s32 0, %v541
    %v544 = vsel %vm542, %v543, %v541
    %v545 = vclz %v544
    %v546 = vsub.s32 %v545, 2
    %vm547 = vcmp.gt.s32.totalorder 0, %v546
    %v548 = vsel %vm547, 0, %v546
    %v549 = vsub.s32 32, %v548
    %v550 = vshll.u32 %v541, %v548
    %v551 = vshrl.u32 %v533, %v549
    %v552 = vor.u32 %v550, %v551
    %v553 = vsub.s32 4294967266, %v548
    %v554 = vadd.s32 %v553, 127
    %v555 = vshll.u32 %v554, 23
    %v556 = vor.u32 4788187, %v555
    %v557 = vand.u32 2147483647, %v556
    %v559 = vcvt.s32.f32 %v552
    %v560 = vmul.f32 %v559, %v557
    %v561 = vxor.u32 %v560, 2147483648
    %v562 = vsel %vm441, %v561, %v560
    %v563 = vsub.s32 4, %v539
    %v564 = vsel %vm441, %v563, %v539
    %v565 = vsel %vm440, %v274, %v562
    %v566 = vsel %vm440, 0, %v564
    %v567 = vmul.f32 %v565, %v565
    %v568 = vmul.f32 %v567, -0.001358992
    %v569 = vadd.f32 %v568, 0.041655596
    %v570 = vmul.f32 %v567, %v569
    %v571 = vadd.f32 %v570, -0.4999988
    %v572 = vmul.f32 %v567, %v571
    %v573 = vadd.f32 1.0, %v572
    %v574 = vmul.f32 %v565, %v565
    %v575 = vmul.f32 %v574, -0.00019511016
    %v576 = vadd.f32 %v575, 0.008332121
    %v577 = vmul.f32 %v574, %v576
    %v578 = vadd.f32 %v577, -0.16666654
    %v579 = vmul.f32 %v574, %v578
    %v580 = vadd.f32 %v579, 1.0
    %v581 = vmul.f32 %v580, %v565
    %vm582 = vweird.f32 %v274
    %v583 = vand.u32 %v566, 3
    %vm584 = vcmp.lt.s32.totalorder %v583, 2
    %vm585 = vcmp.eq.s32.totalorder %v583, 0
    %v586 = vxor.u32 %v581, 2147483648
    %v587 = vsel %vm585, %v573, %v586
    %vm588 = vcmp.eq.s32.totalorder %v583, 2
    %v589 = vxor.u32 %v573, 2147483648
    %v590 = vsel %vm588, %v589, %v581
    %v591 = vsel %vm584, %v587, %v590
    %v592 = vsel %vm582, nan, %v591
    %v593 = vpack.c.bf16 %v592, %v592
    %v594 = vld [vmem:[#allocation7] sm:$0xf]
    %v595 = vld [vmem:[#allocation7 + $0x4] sm:$0xf]
    %v596 = vld [vmem:[#allocation7 + $0x8] sm:$0xf]
    %v597 = vld [vmem:[#allocation7 + $0xc] sm:$0xf]
    %v598 = vld [vmem:[#allocation7 + $0x10] sm:$0xf]
    %v599 = vld [vmem:[#allocation7 + $0x14] sm:$0xf]
    %v600 = vld [vmem:[#allocation7 + $0x18] sm:$0xf]
    %v601 = vld [vmem:[#allocation7 + $0x1c] sm:$0xf]
    %v610 = vunpack.c.l.b16 %v594
    %v611 = vunpack.c.l.b16 %v595
    %v612 = vunpack.c.l.b16 %v596
    %v613 = vunpack.c.l.b16 %v597
    %v614 = vunpack.c.l.b16 %v598
    %v615 = vunpack.c.l.b16 %v599
    %v616 = vunpack.c.l.b16 %v600
    %v617 = vunpack.c.l.b16 %v601
    %v618 = vpack.c.b16 %v611, %v610
    %v619 = vpack.c.b16 %v613, %v612
    %v620 = vpack.c.b16 %v615, %v614
    %v621 = vpack.c.b16 %v617, %v616
    %vm626 = vcmask 523264
    %v628 = vsel %vm626, %v593, 0
    %630 = vmatpush.bf16.msra.mxu0 0
    %631 = vmatpush.bf16.msra.mxu0 0
    %632 = vmatpush.bf16.msra.mxu0 0
    %633 = vmatpush.bf16.msra.mxu0 0
    %634 = vmatpush.bf16.msra.mxu0 %v621
    %635 = vmatpush.bf16.msra.mxu0 %v620
    %636 = vmatpush.bf16.msra.mxu0 %v619
    %637 = vmatpush.bf16.msra.mxu0 %v618
    %638 = vmatmul.bf16.gmra.mxu0 %v628
    %v639 = vpop.f32.mrf.mxu0
    %v640 = vadd.f32 0.0, %v639
    %v641 = vpop.f32.mrf.mxu0
    %642 = vdwg.mxu0
    %v651 = vunpack.c.l.b16 %v431
    %v652 = vunpack.c.l.b16 %v432
    %v653 = vunpack.c.l.b16 %v433
    %v654 = vunpack.c.l.b16 %v434
    %v655 = vunpack.c.l.b16 %v435
    %v656 = vunpack.c.l.b16 %v436
    %v657 = vunpack.c.l.b16 %v437
    %v658 = vunpack.c.l.b16 %v438
    %v659 = vpack.c.b16 %v652, %v651
    %v660 = vpack.c.b16 %v654, %v653
    %v661 = vpack.c.b16 %v656, %v655
    %v662 = vpack.c.b16 %v658, %v657
    %v668 = vsel %vm626, %v430, 0
    %670 = vmatpush.bf16.msra.mxu0 0
    %671 = vmatpush.bf16.msra.mxu0 0
    %672 = vmatpush.bf16.msra.mxu0 0
    %673 = vmatpush.bf16.msra.mxu0 0
    %674 = vmatpush.bf16.msra.mxu0 %v662
    %675 = vmatpush.bf16.msra.mxu0 %v661
    %676 = vmatpush.bf16.msra.mxu0 %v660
    %677 = vmatpush.bf16.msra.mxu0 %v659
    %678 = vmatmul.bf16.gmra.mxu0 %v668
    %v679 = vpop.f32.mrf.mxu0
    %v680 = vadd.f32 %v640, %v679
    %v681 = vpop.f32.mrf.mxu0
    %682 = vdwg.mxu0
    %v683 = vld [vmem:[#allocation8] sm:$0x1]
    %v685 = vperm.slane %v683, 0
    %v687 = vadd.f32 %v680, %v685
    %v688 = vmax.f32 %v687, 0.0
    %v689 = vld [vmem:[%s1] sm:$0xf]
    %v690 = vld [vmem:[#allocation10] sm:$0xff]
    %v691 = vld [vmem:[#allocation10 + $0x8] sm:$0xff]
    %v692 = vld [vmem:[#allocation10 + $0x10] sm:$0xff]
    %v693 = vld [vmem:[#allocation10 + $0x18] sm:$0xff]
    %v694 = vld [vmem:[#allocation10 + $0x20] sm:$0xff]
    %v695 = vld [vmem:[#allocation10 + $0x28] sm:$0xff]
    %v696 = vld [vmem:[#allocation10 + $0x30] sm:$0xff]
    %v697 = vld [vmem:[#allocation10 + $0x38] sm:$0xff]
    %v698 = vld [vmem:[#allocation10 + $0x40] sm:$0xff]
    %v699 = vld [vmem:[#allocation10 + $0x48] sm:$0xff]
    %v700 = vld [vmem:[#allocation10 + $0x50] sm:$0xff]
    %v701 = vld [vmem:[#allocation10 + $0x58] sm:$0xff]
    %v702 = vld [vmem:[#allocation10 + $0x60] sm:$0xff]
    %v703 = vld [vmem:[#allocation10 + $0x68] sm:$0xff]
    %v704 = vld [vmem:[#allocation10 + $0x70] sm:$0xff]
    %v705 = vld [vmem:[#allocation10 + $0x78] sm:$0xff]
    %v706 = vld [vmem:[#allocation11] sm:$0x3]
    %v708 = vperm.slane %v706, 0
    %v709 = vperm.slane %v706, 1
    %v728 = vunpack.c.l.b16 %v690
    %v729 = vunpack.c.h.b16 %v690
    %v730 = vunpack.c.l.b16 %v691
    %v731 = vunpack.c.h.b16 %v691
    %v732 = vunpack.c.l.b16 %v692
    %v733 = vunpack.c.h.b16 %v692
    %v734 = vunpack.c.l.b16 %v693
    %v735 = vunpack.c.h.b16 %v693
    %v736 = vunpack.c.l.b16 %v694
    %v737 = vunpack.c.h.b16 %v694
    %v738 = vunpack.c.l.b16 %v695
    %v739 = vunpack.c.h.b16 %v695
    %v740 = vunpack.c.l.b16 %v696
    %v741 = vunpack.c.h.b16 %v696
    %v742 = vunpack.c.l.b16 %v697
    %v743 = vunpack.c.h.b16 %v697
    %v744 = vunpack.c.l.b16 %v698
    %v745 = vunpack.c.h.b16 %v698
    %v746 = vunpack.c.l.b16 %v699
    %v747 = vunpack.c.h.b16 %v699
    %v748 = vunpack.c.l.b16 %v700
    %v749 = vunpack.c.h.b16 %v700
    %v750 = vunpack.c.l.b16 %v701
    %v751 = vunpack.c.h.b16 %v701
    %v752 = vunpack.c.l.b16 %v702
    %v753 = vunpack.c.h.b16 %v702
    %v754 = vunpack.c.l.b16 %v703
    %v755 = vunpack.c.h.b16 %v703
    %v756 = vunpack.c.l.b16 %v704
    %v757 = vunpack.c.h.b16 %v704
    %v758 = vunpack.c.l.b16 %v705
    %v759 = vunpack.c.h.b16 %v705
    %v760 = vpack.c.b16 %v730, %v728
    %v761 = vpack.c.b16 %v731, %v729
    %v762 = vpack.c.b16 %v734, %v732
    %v763 = vpack.c.b16 %v735, %v733
    %v764 = vpack.c.b16 %v738, %v736
    %v765 = vpack.c.b16 %v739, %v737
    %v766 = vpack.c.b16 %v742, %v740
    %v767 = vpack.c.b16 %v743, %v741
    %v768 = vpack.c.b16 %v746, %v744
    %v769 = vpack.c.b16 %v747, %v745
    %v770 = vpack.c.b16 %v750, %v748
    %v771 = vpack.c.b16 %v751, %v749
    %v772 = vpack.c.b16 %v754, %v752
    %v773 = vpack.c.b16 %v755, %v753
    %v774 = vpack.c.b16 %v758, %v756
    %v775 = vpack.c.b16 %v759, %v757
    %792 = vmatpush.bf16.msra.mxu0 %v774
    %793 = vmatpush.bf16.msra.mxu0 %v772
    %794 = vmatpush.bf16.msra.mxu0 %v770
    %795 = vmatpush.bf16.msra.mxu0 %v768
    %796 = vmatpush.bf16.msra.mxu0 %v766
    %797 = vmatpush.bf16.msra.mxu0 %v764
    %798 = vmatpush.bf16.msra.mxu0 %v762
    %799 = vmatpush.bf16.msra.mxu0 %v760
    %800 = vmatmul.bf16.gmra.mxu0 %v689
    %v801 = vpop.f32.mrf.mxu0
    %v802 = vadd.f32 %v708, %v801
    %v803 = vpop.f32.mrf.mxu0
    %804 = vdwg.mxu0
    %805 = vmatpush.bf16.msra.mxu0 %v775
    %806 = vmatpush.bf16.msra.mxu0 %v773
    %807 = vmatpush.bf16.msra.mxu0 %v771
    %808 = vmatpush.bf16.msra.mxu0 %v769
    %809 = vmatpush.bf16.msra.mxu0 %v767
    %810 = vmatpush.bf16.msra.mxu0 %v765
    %811 = vmatpush.bf16.msra.mxu0 %v763
    %812 = vmatpush.bf16.msra.mxu0 %v761
    %813 = vmatmul.bf16.gmra.mxu0 %v689
    %v814 = vpop.f32.mrf.mxu0
    %v815 = vadd.f32 %v709, %v814
    %v816 = vpop.f32.mrf.mxu0
    %817 = vdwg.mxu0
    %v818 = vmax.f32 %v802, 0.0
    %v819 = vmax.f32 %v815, 0.0
    %v820 = vpack.c.bf16 %v818, %v818
    %v821 = vpack.c.bf16 %v819, %v819
    %v822 = vld [vmem:[#allocation13] sm:$0xff]
    %v823 = vld [vmem:[#allocation13 + $0x8] sm:$0xff]
    %v824 = vld [vmem:[#allocation13 + $0x10] sm:$0xff]
    %v825 = vld [vmem:[#allocation13 + $0x18] sm:$0xff]
    %v826 = vld [vmem:[#allocation13 + $0x20] sm:$0xff]
    %v827 = vld [vmem:[#allocation13 + $0x28] sm:$0xff]
    %v828 = vld [vmem:[#allocation13 + $0x30] sm:$0xff]
    %v829 = vld [vmem:[#allocation13 + $0x38] sm:$0xff]
    %v830 = vld [vmem:[#allocation13 + $0x40] sm:$0xff]
    %v831 = vld [vmem:[#allocation13 + $0x48] sm:$0xff]
    %v832 = vld [vmem:[#allocation13 + $0x50] sm:$0xff]
    %v833 = vld [vmem:[#allocation13 + $0x58] sm:$0xff]
    %v834 = vld [vmem:[#allocation13 + $0x60] sm:$0xff]
    %v835 = vld [vmem:[#allocation13 + $0x68] sm:$0xff]
    %v836 = vld [vmem:[#allocation13 + $0x70] sm:$0xff]
    %v837 = vld [vmem:[#allocation13 + $0x78] sm:$0xff]
    %v838 = vld [vmem:[#allocation13 + $0x80] sm:$0xff]
    %v839 = vld [vmem:[#allocation13 + $0x88] sm:$0xff]
    %v840 = vld [vmem:[#allocation13 + $0x90] sm:$0xff]
    %v841 = vld [vmem:[#allocation13 + $0x98] sm:$0xff]
    %v842 = vld [vmem:[#allocation13 + $0xa0] sm:$0xff]
    %v843 = vld [vmem:[#allocation13 + $0xa8] sm:$0xff]
    %v844 = vld [vmem:[#allocation13 + $0xb0] sm:$0xff]
    %v845 = vld [vmem:[#allocation13 + $0xb8] sm:$0xff]
    %v846 = vld [vmem:[#allocation13 + $0xc0] sm:$0xff]
    %v847 = vld [vmem:[#allocation13 + $0xc8] sm:$0xff]
    %v848 = vld [vmem:[#allocation13 + $0xd0] sm:$0xff]
    %v849 = vld [vmem:[#allocation13 + $0xd8] sm:$0xff]
    %v850 = vld [vmem:[#allocation13 + $0xe0] sm:$0xff]
    %v851 = vld [vmem:[#allocation13 + $0xe8] sm:$0xff]
    %v852 = vld [vmem:[#allocation13 + $0xf0] sm:$0xff]
    %v853 = vld [vmem:[#allocation13 + $0xf8] sm:$0xff]
    %v854 = vld [vmem:[#allocation14] sm:$0x3]
    %v856 = vperm.slane %v854, 0
    %v857 = vperm.slane %v854, 1
    %v892 = vunpack.c.l.b16 %v822
    %v893 = vunpack.c.h.b16 %v822
    %v894 = vunpack.c.l.b16 %v823
    %v895 = vunpack.c.h.b16 %v823
    %v896 = vunpack.c.l.b16 %v824
    %v897 = vunpack.c.h.b16 %v824
    %v898 = vunpack.c.l.b16 %v825
    %v899 = vunpack.c.h.b16 %v825
    %v900 = vunpack.c.l.b16 %v826
    %v901 = vunpack.c.h.b16 %v826
    %v902 = vunpack.c.l.b16 %v827
    %v903 = vunpack.c.h.b16 %v827
    %v904 = vunpack.c.l.b16 %v828
    %v905 = vunpack.c.h.b16 %v828
    %v906 = vunpack.c.l.b16 %v829
    %v907 = vunpack.c.h.b16 %v829
    %v908 = vunpack.c.l.b16 %v830
    %v909 = vunpack.c.h.b16 %v830
    %v910 = vunpack.c.l.b16 %v831
    %v911 = vunpack.c.h.b16 %v831
    %v912 = vunpack.c.l.b16 %v832
    %v913 = vunpack.c.h.b16 %v832
    %v914 = vunpack.c.l.b16 %v833
    %v915 = vunpack.c.h.b16 %v833
    %v916 = vunpack.c.l.b16 %v834
    %v917 = vunpack.c.h.b16 %v834
    %v918 = vunpack.c.l.b16 %v835
    %v919 = vunpack.c.h.b16 %v835
    %v920 = vunpack.c.l.b16 %v836
    %v921 = vunpack.c.h.b16 %v836
    %v922 = vunpack.c.l.b16 %v837
    %v923 = vunpack.c.h.b16 %v837
    %v924 = vunpack.c.l.b16 %v838
    %v925 = vunpack.c.h.b16 %v838
    %v926 = vunpack.c.l.b16 %v839
    %v927 = vunpack.c.h.b16 %v839
    %v928 = vunpack.c.l.b16 %v840
    %v929 = vunpack.c.h.b16 %v840
    %v930 = vunpack.c.l.b16 %v841
    %v931 = vunpack.c.h.b16 %v841
    %v932 = vunpack.c.l.b16 %v842
    %v933 = vunpack.c.h.b16 %v842
    %v934 = vunpack.c.l.b16 %v843
    %v935 = vunpack.c.h.b16 %v843
    %v936 = vunpack.c.l.b16 %v844
    %v937 = vunpack.c.h.b16 %v844
    %v938 = vunpack.c.l.b16 %v845
    %v939 = vunpack.c.h.b16 %v845
    %v940 = vunpack.c.l.b16 %v846
    %v941 = vunpack.c.h.b16 %v846
    %v942 = vunpack.c.l.b16 %v847
    %v943 = vunpack.c.h.b16 %v847
    %v944 = vunpack.c.l.b16 %v848
    %v945 = vunpack.c.h.b16 %v848
    %v946 = vunpack.c.l.b16 %v849
    %v947 = vunpack.c.h.b16 %v849
    %v948 = vunpack.c.l.b16 %v850
    %v949 = vunpack.c.h.b16 %v850
    %v950 = vunpack.c.l.b16 %v851
    %v951 = vunpack.c.h.b16 %v851
    %v952 = vunpack.c.l.b16 %v852
    %v953 = vunpack.c.h.b16 %v852
    %v954 = vunpack.c.l.b16 %v853
    %v955 = vunpack.c.h.b16 %v853
    %v956 = vpack.c.b16 %v894, %v892
    %v957 = vpack.c.b16 %v895, %v893
    %v958 = vpack.c.b16 %v898, %v896
    %v959 = vpack.c.b16 %v899, %v897
    %v960 = vpack.c.b16 %v902, %v900
    %v961 = vpack.c.b16 %v903, %v901
    %v962 = vpack.c.b16 %v906, %v904
    %v963 = vpack.c.b16 %v907, %v905
    %v964 = vpack.c.b16 %v910, %v908
    %v965 = vpack.c.b16 %v911, %v909
    %v966 = vpack.c.b16 %v914, %v912
    %v967 = vpack.c.b16 %v915, %v913
    %v968 = vpack.c.b16 %v918, %v916
    %v969 = vpack.c.b16 %v919, %v917
    %v970 = vpack.c.b16 %v922, %v920
    %v971 = vpack.c.b16 %v923, %v921
    %v972 = vpack.c.b16 %v926, %v924
    %v973 = vpack.c.b16 %v927, %v925
    %v974 = vpack.c.b16 %v930, %v928
    %v975 = vpack.c.b16 %v931, %v929
    %v976 = vpack.c.b16 %v934, %v932
    %v977 = vpack.c.b16 %v935, %v933
    %v978 = vpack.c.b16 %v938, %v936
    %v979 = vpack.c.b16 %v939, %v937
    %v980 = vpack.c.b16 %v942, %v940
    %v981 = vpack.c.b16 %v943, %v941
    %v982 = vpack.c.b16 %v946, %v944
    %v983 = vpack.c.b16 %v947, %v945
    %v984 = vpack.c.b16 %v950, %v948
    %v985 = vpack.c.b16 %v951, %v949
    %v986 = vpack.c.b16 %v954, %v952
    %v987 = vpack.c.b16 %v955, %v953
    %1020 = vmatpush.bf16.msra.mxu0 %v970
    %1021 = vmatpush.bf16.msra.mxu0 %v968
    %1022 = vmatpush.bf16.msra.mxu0 %v966
    %1023 = vmatpush.bf16.msra.mxu0 %v964
    %1024 = vmatpush.bf16.msra.mxu0 %v962
    %1025 = vmatpush.bf16.msra.mxu0 %v960
    %1026 = vmatpush.bf16.msra.mxu0 %v958
    %1027 = vmatpush.bf16.msra.mxu0 %v956
    %1028 = vmatmul.bf16.gmra.mxu0 %v820
    %v1029 = vpop.f32.mrf.mxu0
    %v1030 = vadd.f32 %v856, %v1029
    %v1031 = vpop.f32.mrf.mxu0
    %1032 = vdwg.mxu0
    %1033 = vmatpush.bf16.msra.mxu0 %v986
    %1034 = vmatpush.bf16.msra.mxu0 %v984
    %1035 = vmatpush.bf16.msra.mxu0 %v982
    %1036 = vmatpush.bf16.msra.mxu0 %v980
    %1037 = vmatpush.bf16.msra.mxu0 %v978
    %1038 = vmatpush.bf16.msra.mxu0 %v976
    %1039 = vmatpush.bf16.msra.mxu0 %v974
    %1040 = vmatpush.bf16.msra.mxu0 %v972
    %1041 = vmatmul.bf16.gmra.mxu0 %v821
    %v1042 = vpop.f32.mrf.mxu0
    %v1043 = vadd.f32 %v1030, %v1042
    %v1044 = vpop.f32.mrf.mxu0
    %1045 = vdwg.mxu0
    %1046 = vmatpush.bf16.msra.mxu0 %v971
    %1047 = vmatpush.bf16.msra.mxu0 %v969
    %1048 = vmatpush.bf16.msra.mxu0 %v967
    %1049 = vmatpush.bf16.msra.mxu0 %v965
    %1050 = vmatpush.bf16.msra.mxu0 %v963
    %1051 = vmatpush.bf16.msra.mxu0 %v961
    %1052 = vmatpush.bf16.msra.mxu0 %v959
    %1053 = vmatpush.bf16.msra.mxu0 %v957
    %1054 = vmatmul.bf16.gmra.mxu0 %v820
    %v1055 = vpop.f32.mrf.mxu0
    %v1056 = vadd.f32 %v857, %v1055
    %v1057 = vpop.f32.mrf.mxu0
    %1058 = vdwg.mxu0
    %1059 = vmatpush.bf16.msra.mxu0 %v987
    %1060 = vmatpush.bf16.msra.mxu0 %v985
    %1061 = vmatpush.bf16.msra.mxu0 %v983
    %1062 = vmatpush.bf16.msra.mxu0 %v981
    %1063 = vmatpush.bf16.msra.mxu0 %v979
    %1064 = vmatpush.bf16.msra.mxu0 %v977
    %1065 = vmatpush.bf16.msra.mxu0 %v975
    %1066 = vmatpush.bf16.msra.mxu0 %v973
    %1067 = vmatmul.bf16.gmra.mxu0 %v821
    %v1068 = vpop.f32.mrf.mxu0
    %v1069 = vadd.f32 %v1056, %v1068
    %v1070 = vpop.f32.mrf.mxu0
    %1071 = vdwg.mxu0
    %v1072 = vmax.f32 %v1043, 0.0
    %v1073 = vmax.f32 %v1069, 0.0
    %v1074 = vld [vmem:[%s0] sm:$0xff]
    %v1075 = vld [vmem:[%s0 + $0x8] sm:$0xff]
    %v1076 = vld [vmem:[%s0 + $0x10] sm:$0xff]
    %v1077 = vld [vmem:[%s0 + $0x18] sm:$0xff]
    %v1078 = vld [vmem:[#allocation16] sm:$0xff]
    %v1079 = vld [vmem:[#allocation16 + $0x8] sm:$0xff]
    %v1080 = vld [vmem:[#allocation16 + $0x10] sm:$0xff]
    %v1081 = vld [vmem:[#allocation16 + $0x18] sm:$0xff]
    %v1082 = vld [vmem:[#allocation16 + $0x20] sm:$0xff]
    %v1083 = vld [vmem:[#allocation16 + $0x28] sm:$0xff]
    %v1084 = vld [vmem:[#allocation16 + $0x30] sm:$0xff]
    %v1085 = vld [vmem:[#allocation16 + $0x38] sm:$0xff]
    %v1086 = vld [vmem:[#allocation16 + $0x40] sm:$0xff]
    %v1087 = vld [vmem:[#allocation16 + $0x48] sm:$0xff]
    %v1088 = vld [vmem:[#allocation16 + $0x50] sm:$0xff]
    %v1089 = vld [vmem:[#allocation16 + $0x58] sm:$0xff]
    %v1090 = vld [vmem:[#allocation16 + $0x60] sm:$0xff]
    %v1091 = vld [vmem:[#allocation16 + $0x68] sm:$0xff]
    %v1092 = vld [vmem:[#allocation16 + $0x70] sm:$0xff]
    %v1093 = vld [vmem:[#allocation16 + $0x78] sm:$0xff]
    %v1094 = vld [vmem:[#allocation16 + $0x80] sm:$0xff]
    %v1095 = vld [vmem:[#allocation16 + $0x88] sm:$0xff]
    %v1096 = vld [vmem:[#allocation16 + $0x90] sm:$0xff]
    %v1097 = vld [vmem:[#allocation16 + $0x98] sm:$0xff]
    %v1098 = vld [vmem:[#allocation16 + $0xa0] sm:$0xff]
    %v1099 = vld [vmem:[#allocation16 + $0xa8] sm:$0xff]
    %v1100 = vld [vmem:[#allocation16 + $0xb0] sm:$0xff]
    %v1101 = vld [vmem:[#allocation16 + $0xb8] sm:$0xff]
    %v1102 = vld [vmem:[#allocation16 + $0xc0] sm:$0xff]
    %v1103 = vld [vmem:[#allocation16 + $0xc8] sm:$0xff]
    %v1104 = vld [vmem:[#allocation16 + $0xd0] sm:$0xff]
    %v1105 = vld [vmem:[#allocation16 + $0xd8] sm:$0xff]
    %v1106 = vld [vmem:[#allocation16 + $0xe0] sm:$0xff]
    %v1107 = vld [vmem:[#allocation16 + $0xe8] sm:$0xff]
    %v1108 = vld [vmem:[#allocation16 + $0xf0] sm:$0xff]
    %v1109 = vld [vmem:[#allocation16 + $0xf8] sm:$0xff]
    %v1110 = vld [vmem:[#allocation16 + $0x100] sm:$0xff]
    %v1111 = vld [vmem:[#allocation16 + $0x108] sm:$0xff]
    %v1112 = vld [vmem:[#allocation16 + $0x110] sm:$0xff]
    %v1113 = vld [vmem:[#allocation16 + $0x118] sm:$0xff]
    %v1114 = vld [vmem:[#allocation16 + $0x120] sm:$0xff]
    %v1115 = vld [vmem:[#allocation16 + $0x128] sm:$0xff]
    %v1116 = vld [vmem:[#allocation16 + $0x130] sm:$0xff]
    %v1117 = vld [vmem:[#allocation16 + $0x138] sm:$0xff]
    %v1118 = vld [vmem:[#allocation16 + $0x140] sm:$0xff]
    %v1119 = vld [vmem:[#allocation16 + $0x148] sm:$0xff]
    %v1120 = vld [vmem:[#allocation16 + $0x150] sm:$0xff]
    %v1121 = vld [vmem:[#allocation16 + $0x158] sm:$0xff]
    %v1122 = vld [vmem:[#allocation16 + $0x160] sm:$0xff]
    %v1123 = vld [vmem:[#allocation16 + $0x168] sm:$0xff]
    %v1124 = vld [vmem:[#allocation16 + $0x170] sm:$0xff]
    %v1125 = vld [vmem:[#allocation16 + $0x178] sm:$0xff]
    %v1126 = vld [vmem:[#allocation16 + $0x180] sm:$0xff]
    %v1127 = vld [vmem:[#allocation16 + $0x188] sm:$0xff]
    %v1128 = vld [vmem:[#allocation16 + $0x190] sm:$0xff]
    %v1129 = vld [vmem:[#allocation16 + $0x198] sm:$0xff]
    %v1130 = vld [vmem:[#allocation16 + $0x1a0] sm:$0xff]
    %v1131 = vld [vmem:[#allocation16 + $0x1a8] sm:$0xff]
    %v1132 = vld [vmem:[#allocation16 + $0x1b0] sm:$0xff]
    %v1133 = vld [vmem:[#allocation16 + $0x1b8] sm:$0xff]
    %v1134 = vld [vmem:[#allocation16 + $0x1c0] sm:$0xff]
    %v1135 = vld [vmem:[#allocation16 + $0x1c8] sm:$0xff]
    %v1136 = vld [vmem:[#allocation16 + $0x1d0] sm:$0xff]
    %v1137 = vld [vmem:[#allocation16 + $0x1d8] sm:$0xff]
    %v1138 = vld [vmem:[#allocation16 + $0x1e0] sm:$0xff]
    %v1139 = vld [vmem:[#allocation16 + $0x1e8] sm:$0xff]
    %v1140 = vld [vmem:[#allocation16 + $0x1f0] sm:$0xff]
    %v1141 = vld [vmem:[#allocation16 + $0x1f8] sm:$0xff]
    %v1142 = vld [vmem:[#allocation16 + $0x200] sm:$0xff]
    %v1143 = vld [vmem:[#allocation16 + $0x208] sm:$0xff]
    %v1144 = vld [vmem:[#allocation16 + $0x210] sm:$0xff]
    %v1145 = vld [vmem:[#allocation16 + $0x218] sm:$0xff]
    %v1146 = vld [vmem:[#allocation16 + $0x220] sm:$0xff]
    %v1147 = vld [vmem:[#allocation16 + $0x228] sm:$0xff]
    %v1148 = vld [vmem:[#allocation16 + $0x230] sm:$0xff]
    %v1149 = vld [vmem:[#allocation16 + $0x238] sm:$0xff]
    %v1150 = vld [vmem:[#allocation16 + $0x240] sm:$0xff]
    %v1151 = vld [vmem:[#allocation16 + $0x248] sm:$0xff]
    %v1152 = vld [vmem:[#allocation16 + $0x250] sm:$0xff]
    %v1153 = vld [vmem:[#allocation16 + $0x258] sm:$0xff]
    %v1154 = vld [vmem:[#allocation16 + $0x260] sm:$0xff]
    %v1155 = vld [vmem:[#allocation16 + $0x268] sm:$0xff]
    %v1156 = vld [vmem:[#allocation16 + $0x270] sm:$0xff]
    %v1157 = vld [vmem:[#allocation16 + $0x278] sm:$0xff]
    %v1158 = vld [vmem:[#allocation16 + $0x280] sm:$0xff]
    %v1159 = vld [vmem:[#allocation16 + $0x288] sm:$0xff]
    %v1160 = vld [vmem:[#allocation16 + $0x290] sm:$0xff]
    %v1161 = vld [vmem:[#allocation16 + $0x298] sm:$0xff]
    %v1162 = vld [vmem:[#allocation16 + $0x2a0] sm:$0xff]
    %v1163 = vld [vmem:[#allocation16 + $0x2a8] sm:$0xff]
    %v1164 = vld [vmem:[#allocation16 + $0x2b0] sm:$0xff]
    %v1165 = vld [vmem:[#allocation16 + $0x2b8] sm:$0xff]
    %v1166 = vld [vmem:[#allocation16 + $0x2c0] sm:$0xff]
    %v1167 = vld [vmem:[#allocation16 + $0x2c8] sm:$0xff]
    %v1168 = vld [vmem:[#allocation16 + $0x2d0] sm:$0xff]
    %v1169 = vld [vmem:[#allocation16 + $0x2d8] sm:$0xff]
    %v1170 = vld [vmem:[#allocation16 + $0x2e0] sm:$0xff]
    %v1171 = vld [vmem:[#allocation16 + $0x2e8] sm:$0xff]
    %v1172 = vld [vmem:[#allocation16 + $0x2f0] sm:$0xff]
    %v1173 = vld [vmem:[#allocation16 + $0x2f8] sm:$0xff]
    %v1174 = vld [vmem:[#allocation16 + $0x300] sm:$0xff]
    %v1175 = vld [vmem:[#allocation16 + $0x308] sm:$0xff]
    %v1176 = vld [vmem:[#allocation16 + $0x310] sm:$0xff]
    %v1177 = vld [vmem:[#allocation16 + $0x318] sm:$0xff]
    %v1178 = vld [vmem:[#allocation16 + $0x320] sm:$0xff]
    %v1179 = vld [vmem:[#allocation16 + $0x328] sm:$0xff]
    %v1180 = vld [vmem:[#allocation16 + $0x330] sm:$0xff]
    %v1181 = vld [vmem:[#allocation16 + $0x338] sm:$0xff]
    %v1182 = vld [vmem:[#allocation16 + $0x340] sm:$0xff]
    %v1183 = vld [vmem:[#allocation16 + $0x348] sm:$0xff]
    %v1184 = vld [vmem:[#allocation16 + $0x350] sm:$0xff]
    %v1185 = vld [vmem:[#allocation16 + $0x358] sm:$0xff]
    %v1186 = vld [vmem:[#allocation16 + $0x360] sm:$0xff]
    %v1187 = vld [vmem:[#allocation16 + $0x368] sm:$0xff]
    %v1188 = vld [vmem:[#allocation16 + $0x370] sm:$0xff]
    %v1189 = vld [vmem:[#allocation16 + $0x378] sm:$0xff]
    %v1190 = vld [vmem:[#allocation16 + $0x380] sm:$0xff]
    %v1191 = vld [vmem:[#allocation16 + $0x388] sm:$0xff]
    %v1192 = vld [vmem:[#allocation16 + $0x390] sm:$0xff]
    %v1193 = vld [vmem:[#allocation16 + $0x398] sm:$0xff]
    %v1194 = vld [vmem:[#allocation16 + $0x3a0] sm:$0xff]
    %v1195 = vld [vmem:[#allocation16 + $0x3a8] sm:$0xff]
    %v1196 = vld [vmem:[#allocation16 + $0x3b0] sm:$0xff]
    %v1197 = vld [vmem:[#allocation16 + $0x3b8] sm:$0xff]
    %v1198 = vld [vmem:[#allocation16 + $0x3c0] sm:$0xff]
    %v1199 = vld [vmem:[#allocation16 + $0x3c8] sm:$0xff]
    %v1200 = vld [vmem:[#allocation16 + $0x3d0] sm:$0xff]
    %v1201 = vld [vmem:[#allocation16 + $0x3d8] sm:$0xff]
    %v1202 = vld [vmem:[#allocation16 + $0x3e0] sm:$0xff]
    %v1203 = vld [vmem:[#allocation16 + $0x3e8] sm:$0xff]
    %v1204 = vld [vmem:[#allocation16 + $0x3f0] sm:$0xff]
    %v1205 = vld [vmem:[#allocation16 + $0x3f8] sm:$0xff]
    %v1206 = vld [vmem:[#allocation16 + $0x400] sm:$0xff]
    %v1207 = vld [vmem:[#allocation16 + $0x408] sm:$0xff]
    %v1208 = vld [vmem:[#allocation16 + $0x410] sm:$0xff]
    %v1209 = vld [vmem:[#allocation16 + $0x418] sm:$0xff]
    %v1210 = vld [vmem:[#allocation16 + $0x420] sm:$0xff]
    %v1211 = vld [vmem:[#allocation16 + $0x428] sm:$0xff]
    %v1212 = vld [vmem:[#allocation16 + $0x430] sm:$0xff]
    %v1213 = vld [vmem:[#allocation16 + $0x438] sm:$0xff]
    %v1214 = vld [vmem:[#allocation16 + $0x440] sm:$0xff]
    %v1215 = vld [vmem:[#allocation16 + $0x448] sm:$0xff]
    %v1216 = vld [vmem:[#allocation16 + $0x450] sm:$0xff]
    %v1217 = vld [vmem:[#allocation16 + $0x458] sm:$0xff]
    %v1218 = vld [vmem:[#allocation16 + $0x460] sm:$0xff]
    %v1219 = vld [vmem:[#allocation16 + $0x468] sm:$0xff]
    %v1220 = vld [vmem:[#allocation16 + $0x470] sm:$0xff]
    %v1221 = vld [vmem:[#allocation16 + $0x478] sm:$0xff]
    %v1222 = vld [vmem:[#allocation16 + $0x480] sm:$0xff]
    %v1223 = vld [vmem:[#allocation16 + $0x488] sm:$0xff]
    %v1224 = vld [vmem:[#allocation16 + $0x490] sm:$0xff]
    %v1225 = vld [vmem:[#allocation16 + $0x498] sm:$0xff]
    %v1226 = vld [vmem:[#allocation16 + $0x4a0] sm:$0xff]
    %v1227 = vld [vmem:[#allocation16 + $0x4a8] sm:$0xff]
    %v1228 = vld [vmem:[#allocation16 + $0x4b0] sm:$0xff]
    %v1229 = vld [vmem:[#allocation16 + $0x4b8] sm:$0xff]
    %v1230 = vld [vmem:[#allocation16 + $0x4c0] sm:$0xff]
    %v1231 = vld [vmem:[#allocation16 + $0x4c8] sm:$0xff]
    %v1232 = vld [vmem:[#allocation16 + $0x4d0] sm:$0xff]
    %v1233 = vld [vmem:[#allocation16 + $0x4d8] sm:$0xff]
    %v1234 = vld [vmem:[#allocation16 + $0x4e0] sm:$0xff]
    %v1235 = vld [vmem:[#allocation16 + $0x4e8] sm:$0xff]
    %v1236 = vld [vmem:[#allocation16 + $0x4f0] sm:$0xff]
    %v1237 = vld [vmem:[#allocation16 + $0x4f8] sm:$0xff]
    %v1238 = vld [vmem:[#allocation16 + $0x500] sm:$0xff]
    %v1239 = vld [vmem:[#allocation16 + $0x508] sm:$0xff]
    %v1240 = vld [vmem:[#allocation16 + $0x510] sm:$0xff]
    %v1241 = vld [vmem:[#allocation16 + $0x518] sm:$0xff]
    %v1242 = vld [vmem:[#allocation16 + $0x520] sm:$0xff]
    %v1243 = vld [vmem:[#allocation16 + $0x528] sm:$0xff]
    %v1244 = vld [vmem:[#allocation16 + $0x530] sm:$0xff]
    %v1245 = vld [vmem:[#allocation16 + $0x538] sm:$0xff]
    %v1246 = vld [vmem:[#allocation16 + $0x540] sm:$0xff]
    %v1247 = vld [vmem:[#allocation16 + $0x548] sm:$0xff]
    %v1248 = vld [vmem:[#allocation16 + $0x550] sm:$0xff]
    %v1249 = vld [vmem:[#allocation16 + $0x558] sm:$0xff]
    %v1250 = vld [vmem:[#allocation16 + $0x560] sm:$0xff]
    %v1251 = vld [vmem:[#allocation16 + $0x568] sm:$0xff]
    %v1252 = vld [vmem:[#allocation16 + $0x570] sm:$0xff]
    %v1253 = vld [vmem:[#allocation16 + $0x578] sm:$0xff]
    %v1254 = vld [vmem:[#allocation16 + $0x580] sm:$0xff]
    %v1255 = vld [vmem:[#allocation16 + $0x588] sm:$0xff]
    %v1256 = vld [vmem:[#allocation16 + $0x590] sm:$0xff]
    %v1257 = vld [vmem:[#allocation16 + $0x598] sm:$0xff]
    %v1258 = vld [vmem:[#allocation16 + $0x5a0] sm:$0xff]
    %v1259 = vld [vmem:[#allocation16 + $0x5a8] sm:$0xff]
    %v1260 = vld [vmem:[#allocation16 + $0x5b0] sm:$0xff]
    %v1261 = vld [vmem:[#allocation16 + $0x5b8] sm:$0xff]
    %v1262 = vld [vmem:[#allocation16 + $0x5c0] sm:$0xff]
    %v1263 = vld [vmem:[#allocation16 + $0x5c8] sm:$0xff]
    %v1264 = vld [vmem:[#allocation16 + $0x5d0] sm:$0xff]
    %v1265 = vld [vmem:[#allocation16 + $0x5d8] sm:$0xff]
    %v1266 = vld [vmem:[#allocation16 + $0x5e0] sm:$0xff]
    %v1267 = vld [vmem:[#allocation16 + $0x5e8] sm:$0xff]
    %v1268 = vld [vmem:[#allocation16 + $0x5f0] sm:$0xff]
    %v1269 = vld [vmem:[#allocation16 + $0x5f8] sm:$0xff]
    %v1270 = vld [vmem:[#allocation16 + $0x600] sm:$0xff]
    %v1271 = vld [vmem:[#allocation16 + $0x608] sm:$0xff]
    %v1272 = vld [vmem:[#allocation16 + $0x610] sm:$0xff]
    %v1273 = vld [vmem:[#allocation16 + $0x618] sm:$0xff]
    %v1274 = vld [vmem:[#allocation16 + $0x620] sm:$0xff]
    %v1275 = vld [vmem:[#allocation16 + $0x628] sm:$0xff]
    %v1276 = vld [vmem:[#allocation16 + $0x630] sm:$0xff]
    %v1277 = vld [vmem:[#allocation16 + $0x638] sm:$0xff]
    %v1278 = vld [vmem:[#allocation16 + $0x640] sm:$0xff]
    %v1279 = vld [vmem:[#allocation16 + $0x648] sm:$0xff]
    %v1280 = vld [vmem:[#allocation16 + $0x650] sm:$0xff]
    %v1281 = vld [vmem:[#allocation16 + $0x658] sm:$0xff]
    %v1282 = vld [vmem:[#allocation16 + $0x660] sm:$0xff]
    %v1283 = vld [vmem:[#allocation16 + $0x668] sm:$0xff]
    %v1284 = vld [vmem:[#allocation16 + $0x670] sm:$0xff]
    %v1285 = vld [vmem:[#allocation16 + $0x678] sm:$0xff]
    %v1286 = vld [vmem:[#allocation16 + $0x680] sm:$0xff]
    %v1287 = vld [vmem:[#allocation16 + $0x688] sm:$0xff]
    %v1288 = vld [vmem:[#allocation16 + $0x690] sm:$0xff]
    %v1289 = vld [vmem:[#allocation16 + $0x698] sm:$0xff]
    %v1290 = vld [vmem:[#allocation16 + $0x6a0] sm:$0xff]
    %v1291 = vld [vmem:[#allocation16 + $0x6a8] sm:$0xff]
    %v1292 = vld [vmem:[#allocation16 + $0x6b0] sm:$0xff]
    %v1293 = vld [vmem:[#allocation16 + $0x6b8] sm:$0xff]
    %v1294 = vld [vmem:[#allocation16 + $0x6c0] sm:$0xff]
    %v1295 = vld [vmem:[#allocation16 + $0x6c8] sm:$0xff]
    %v1296 = vld [vmem:[#allocation16 + $0x6d0] sm:$0xff]
    %v1297 = vld [vmem:[#allocation16 + $0x6d8] sm:$0xff]
    %v1298 = vld [vmem:[#allocation16 + $0x6e0] sm:$0xff]
    %v1299 = vld [vmem:[#allocation16 + $0x6e8] sm:$0xff]
    %v1300 = vld [vmem:[#allocation16 + $0x6f0] sm:$0xff]
    %v1301 = vld [vmem:[#allocation16 + $0x6f8] sm:$0xff]
    %v1302 = vld [vmem:[#allocation16 + $0x700] sm:$0xff]
    %v1303 = vld [vmem:[#allocation16 + $0x708] sm:$0xff]
    %v1304 = vld [vmem:[#allocation16 + $0x710] sm:$0xff]
    %v1305 = vld [vmem:[#allocation16 + $0x718] sm:$0xff]
    %v1306 = vld [vmem:[#allocation16 + $0x720] sm:$0xff]
    %v1307 = vld [vmem:[#allocation16 + $0x728] sm:$0xff]
    %v1308 = vld [vmem:[#allocation16 + $0x730] sm:$0xff]
    %v1309 = vld [vmem:[#allocation16 + $0x738] sm:$0xff]
    %v1310 = vld [vmem:[#allocation16 + $0x740] sm:$0xff]
    %v1311 = vld [vmem:[#allocation16 + $0x748] sm:$0xff]
    %v1312 = vld [vmem:[#allocation16 + $0x750] sm:$0xff]
    %v1313 = vld [vmem:[#allocation16 + $0x758] sm:$0xff]
    %v1314 = vld [vmem:[#allocation16 + $0x760] sm:$0xff]
    %v1315 = vld [vmem:[#allocation16 + $0x768] sm:$0xff]
    %v1316 = vld [vmem:[#allocation16 + $0x770] sm:$0xff]
    %v1317 = vld [vmem:[#allocation16 + $0x778] sm:$0xff]
    %v1318 = vld [vmem:[#allocation16 + $0x780] sm:$0xff]
    %v1319 = vld [vmem:[#allocation16 + $0x788] sm:$0xff]
    %v1320 = vld [vmem:[#allocation16 + $0x790] sm:$0xff]
    %v1321 = vld [vmem:[#allocation16 + $0x798] sm:$0xff]
    %v1322 = vld [vmem:[#allocation16 + $0x7a0] sm:$0xff]
    %v1323 = vld [vmem:[#allocation16 + $0x7a8] sm:$0xff]
    %v1324 = vld [vmem:[#allocation16 + $0x7b0] sm:$0xff]
    %v1325 = vld [vmem:[#allocation16 + $0x7b8] sm:$0xff]
    %v1326 = vld [vmem:[#allocation16 + $0x7c0] sm:$0xff]
    %v1327 = vld [vmem:[#allocation16 + $0x7c8] sm:$0xff]
    %v1328 = vld [vmem:[#allocation16 + $0x7d0] sm:$0xff]
    %v1329 = vld [vmem:[#allocation16 + $0x7d8] sm:$0xff]
    %v1330 = vld [vmem:[#allocation16 + $0x7e0] sm:$0xff]
    %v1331 = vld [vmem:[#allocation16 + $0x7e8] sm:$0xff]
    %v1332 = vld [vmem:[#allocation16 + $0x7f0] sm:$0xff]
    %v1333 = vld [vmem:[#allocation16 + $0x7f8] sm:$0xff]
    %v1334 = vld [vmem:[#allocation16 + $0x800] sm:$0xff]
    %v1335 = vld [vmem:[#allocation16 + $0x808] sm:$0xff]
    %v1336 = vld [vmem:[#allocation16 + $0x810] sm:$0xff]
    %v1337 = vld [vmem:[#allocation16 + $0x818] sm:$0xff]
    %v1338 = vld [vmem:[#allocation16 + $0x820] sm:$0xff]
    %v1339 = vld [vmem:[#allocation16 + $0x828] sm:$0xff]
    %v1340 = vld [vmem:[#allocation16 + $0x830] sm:$0xff]
    %v1341 = vld [vmem:[#allocation16 + $0x838] sm:$0xff]
    %v1342 = vld [vmem:[#allocation16 + $0x840] sm:$0xff]
    %v1343 = vld [vmem:[#allocation16 + $0x848] sm:$0xff]
    %v1344 = vld [vmem:[#allocation16 + $0x850] sm:$0xff]
    %v1345 = vld [vmem:[#allocation16 + $0x858] sm:$0xff]
    %v1346 = vld [vmem:[#allocation16 + $0x860] sm:$0xff]
    %v1347 = vld [vmem:[#allocation16 + $0x868] sm:$0xff]
    %v1348 = vld [vmem:[#allocation16 + $0x870] sm:$0xff]
    %v1349 = vld [vmem:[#allocation16 + $0x878] sm:$0xff]
    %v1350 = vld [vmem:[#allocation16 + $0x880] sm:$0xff]
    %v1351 = vld [vmem:[#allocation16 + $0x888] sm:$0xff]
    %v1352 = vld [vmem:[#allocation16 + $0x890] sm:$0xff]
    %v1353 = vld [vmem:[#allocation16 + $0x898] sm:$0xff]
    %v1354 = vld [vmem:[#allocation16 + $0x8a0] sm:$0xff]
    %v1355 = vld [vmem:[#allocation16 + $0x8a8] sm:$0xff]
    %v1356 = vld [vmem:[#allocation16 + $0x8b0] sm:$0xff]
    %v1357 = vld [vmem:[#allocation16 + $0x8b8] sm:$0xff]
    %v1358 = vld [vmem:[#allocation16 + $0x8c0] sm:$0xff]
    %v1359 = vld [vmem:[#allocation16 + $0x8c8] sm:$0xff]
    %v1360 = vld [vmem:[#allocation16 + $0x8d0] sm:$0xff]
    %v1361 = vld [vmem:[#allocation16 + $0x8d8] sm:$0xff]
    %v1362 = vld [vmem:[#allocation16 + $0x8e0] sm:$0xff]
    %v1363 = vld [vmem:[#allocation16 + $0x8e8] sm:$0xff]
    %v1364 = vld [vmem:[#allocation16 + $0x8f0] sm:$0xff]
    %v1365 = vld [vmem:[#allocation16 + $0x8f8] sm:$0xff]
    %v1366 = vld [vmem:[#allocation16 + $0x900] sm:$0xff]
    %v1367 = vld [vmem:[#allocation16 + $0x908] sm:$0xff]
    %v1368 = vld [vmem:[#allocation16 + $0x910] sm:$0xff]
    %v1369 = vld [vmem:[#allocation16 + $0x918] sm:$0xff]
    %v1370 = vld [vmem:[#allocation16 + $0x920] sm:$0xff]
    %v1371 = vld [vmem:[#allocation16 + $0x928] sm:$0xff]
    %v1372 = vld [vmem:[#allocation16 + $0x930] sm:$0xff]
    %v1373 = vld [vmem:[#allocation16 + $0x938] sm:$0xff]
    %v1374 = vld [vmem:[#allocation16 + $0x940] sm:$0xff]
    %v1375 = vld [vmem:[#allocation16 + $0x948] sm:$0xff]
    %v1376 = vld [vmem:[#allocation16 + $0x950] sm:$0xff]
    %v1377 = vld [vmem:[#allocation16 + $0x958] sm:$0xff]
    %v1378 = vld [vmem:[#allocation16 + $0x960] sm:$0xff]
    %v1379 = vld [vmem:[#allocation16 + $0x968] sm:$0xff]
    %v1380 = vld [vmem:[#allocation16 + $0x970] sm:$0xff]
    %v1381 = vld [vmem:[#allocation16 + $0x978] sm:$0xff]
    %v1382 = vld [vmem:[#allocation16 + $0x980] sm:$0xff]
    %v1383 = vld [vmem:[#allocation16 + $0x988] sm:$0xff]
    %v1384 = vld [vmem:[#allocation16 + $0x990] sm:$0xff]
    %v1385 = vld [vmem:[#allocation16 + $0x998] sm:$0xff]
    %v1386 = vld [vmem:[#allocation16 + $0x9a0] sm:$0xff]
    %v1387 = vld [vmem:[#allocation16 + $0x9a8] sm:$0xff]
    %v1388 = vld [vmem:[#allocation16 + $0x9b0] sm:$0xff]
    %v1389 = vld [vmem:[#allocation16 + $0x9b8] sm:$0xff]
    %v1390 = vld [vmem:[#allocation16 + $0x9c0] sm:$0xff]
    %v1391 = vld [vmem:[#allocation16 + $0x9c8] sm:$0xff]
    %v1392 = vld [vmem:[#allocation16 + $0x9d0] sm:$0xff]
    %v1393 = vld [vmem:[#allocation16 + $0x9d8] sm:$0xff]
    %v1394 = vld [vmem:[#allocation16 + $0x9e0] sm:$0xff]
    %v1395 = vld [vmem:[#allocation16 + $0x9e8] sm:$0xff]
    %v1396 = vld [vmem:[#allocation16 + $0x9f0] sm:$0xff]
    %v1397 = vld [vmem:[#allocation16 + $0x9f8] sm:$0xff]
    %v1398 = vld [vmem:[#allocation16 + $0xa00] sm:$0xff]
    %v1399 = vld [vmem:[#allocation16 + $0xa08] sm:$0xff]
    %v1400 = vld [vmem:[#allocation16 + $0xa10] sm:$0xff]
    %v1401 = vld [vmem:[#allocation16 + $0xa18] sm:$0xff]
    %v1402 = vld [vmem:[#allocation16 + $0xa20] sm:$0xff]
    %v1403 = vld [vmem:[#allocation16 + $0xa28] sm:$0xff]
    %v1404 = vld [vmem:[#allocation16 + $0xa30] sm:$0xff]
    %v1405 = vld [vmem:[#allocation16 + $0xa38] sm:$0xff]
    %v1406 = vld [vmem:[#allocation16 + $0xa40] sm:$0xff]
    %v1407 = vld [vmem:[#allocation16 + $0xa48] sm:$0xff]
    %v1408 = vld [vmem:[#allocation16 + $0xa50] sm:$0xff]
    %v1409 = vld [vmem:[#allocation16 + $0xa58] sm:$0xff]
    %v1410 = vld [vmem:[#allocation16 + $0xa60] sm:$0xff]
    %v1411 = vld [vmem:[#allocation16 + $0xa68] sm:$0xff]
    %v1412 = vld [vmem:[#allocation16 + $0xa70] sm:$0xff]
    %v1413 = vld [vmem:[#allocation16 + $0xa78] sm:$0xff]
    %v1414 = vld [vmem:[#allocation16 + $0xa80] sm:$0xff]
    %v1415 = vld [vmem:[#allocation16 + $0xa88] sm:$0xff]
    %v1416 = vld [vmem:[#allocation16 + $0xa90] sm:$0xff]
    %v1417 = vld [vmem:[#allocation16 + $0xa98] sm:$0xff]
    %v1418 = vld [vmem:[#allocation16 + $0xaa0] sm:$0xff]
    %v1419 = vld [vmem:[#allocation16 + $0xaa8] sm:$0xff]
    %v1420 = vld [vmem:[#allocation16 + $0xab0] sm:$0xff]
    %v1421 = vld [vmem:[#allocation16 + $0xab8] sm:$0xff]
    %v1422 = vld [vmem:[#allocation16 + $0xac0] sm:$0xff]
    %v1423 = vld [vmem:[#allocation16 + $0xac8] sm:$0xff]
    %v1424 = vld [vmem:[#allocation16 + $0xad0] sm:$0xff]
    %v1425 = vld [vmem:[#allocation16 + $0xad8] sm:$0xff]
    %v1426 = vld [vmem:[#allocation16 + $0xae0] sm:$0xff]
    %v1427 = vld [vmem:[#allocation16 + $0xae8] sm:$0xff]
    %v1428 = vld [vmem:[#allocation16 + $0xaf0] sm:$0xff]
    %v1429 = vld [vmem:[#allocation16 + $0xaf8] sm:$0xff]
    %v1430 = vld [vmem:[#allocation16 + $0xb00] sm:$0xff]
    %v1431 = vld [vmem:[#allocation16 + $0xb08] sm:$0xff]
    %v1432 = vld [vmem:[#allocation16 + $0xb10] sm:$0xff]
    %v1433 = vld [vmem:[#allocation16 + $0xb18] sm:$0xff]
    %v1434 = vld [vmem:[#allocation16 + $0xb20] sm:$0xff]
    %v1435 = vld [vmem:[#allocation16 + $0xb28] sm:$0xff]
    %v1436 = vld [vmem:[#allocation16 + $0xb30] sm:$0xff]
    %v1437 = vld [vmem:[#allocation16 + $0xb38] sm:$0xff]
    %v1438 = vld [vmem:[#allocation16 + $0xb40] sm:$0xff]
    %v1439 = vld [vmem:[#allocation16 + $0xb48] sm:$0xff]
    %v1440 = vld [vmem:[#allocation16 + $0xb50] sm:$0xff]
    %v1441 = vld [vmem:[#allocation16 + $0xb58] sm:$0xff]
    %v1442 = vld [vmem:[#allocation16 + $0xb60] sm:$0xff]
    %v1443 = vld [vmem:[#allocation16 + $0xb68] sm:$0xff]
    %v1444 = vld [vmem:[#allocation16 + $0xb70] sm:$0xff]
    %v1445 = vld [vmem:[#allocation16 + $0xb78] sm:$0xff]
    %v1446 = vld [vmem:[#allocation16 + $0xb80] sm:$0xff]
    %v1447 = vld [vmem:[#allocation16 + $0xb88] sm:$0xff]
    %v1448 = vld [vmem:[#allocation16 + $0xb90] sm:$0xff]
    %v1449 = vld [vmem:[#allocation16 + $0xb98] sm:$0xff]
    %v1450 = vld [vmem:[#allocation16 + $0xba0] sm:$0xff]
    %v1451 = vld [vmem:[#allocation16 + $0xba8] sm:$0xff]
    %v1452 = vld [vmem:[#allocation16 + $0xbb0] sm:$0xff]
    %v1453 = vld [vmem:[#allocation16 + $0xbb8] sm:$0xff]
    %v1454 = vld [vmem:[#allocation16 + $0xbc0] sm:$0xff]
    %v1455 = vld [vmem:[#allocation16 + $0xbc8] sm:$0xff]
    %v1456 = vld [vmem:[#allocation16 + $0xbd0] sm:$0xff]
    %v1457 = vld [vmem:[#allocation16 + $0xbd8] sm:$0xff]
    %v1458 = vld [vmem:[#allocation16 + $0xbe0] sm:$0xff]
    %v1459 = vld [vmem:[#allocation16 + $0xbe8] sm:$0xff]
    %v1460 = vld [vmem:[#allocation16 + $0xbf0] sm:$0xff]
    %v1461 = vld [vmem:[#allocation16 + $0xbf8] sm:$0xff]
    %v1462 = vpack.c.bf16 %v688, %v688
    %v1463 = vld [vmem:[#allocation17] sm:$0xff]
    %v1464 = vld [vmem:[#allocation17 + $0x8] sm:$0xff]
    %v1465 = vld [vmem:[#allocation17 + $0x10] sm:$0xff]
    %v1466 = vld [vmem:[#allocation17 + $0x18] sm:$0xff]
    %v1467 = vld [vmem:[#allocation17 + $0x20] sm:$0xff]
    %v1468 = vld [vmem:[#allocation17 + $0x28] sm:$0xff]
    %v1469 = vld [vmem:[#allocation17 + $0x30] sm:$0xff]
    %v1470 = vld [vmem:[#allocation17 + $0x38] sm:$0xff]
    %v1471 = vld [vmem:[#allocation17 + $0x40] sm:$0xff]
    %v1472 = vld [vmem:[#allocation17 + $0x48] sm:$0xff]
    %v1473 = vld [vmem:[#allocation17 + $0x50] sm:$0xff]
    %v1474 = vld [vmem:[#allocation17 + $0x58] sm:$0xff]
    %v1475 = vld [vmem:[#allocation17 + $0x60] sm:$0xff]
    %v1476 = vld [vmem:[#allocation17 + $0x68] sm:$0xff]
    %v1477 = vld [vmem:[#allocation17 + $0x70] sm:$0xff]
    %v1478 = vld [vmem:[#allocation17 + $0x78] sm:$0xff]
    %v1479 = vld [vmem:[#allocation17 + $0x80] sm:$0xff]
    %v1480 = vld [vmem:[#allocation17 + $0x88] sm:$0xff]
    %v1481 = vld [vmem:[#allocation17 + $0x90] sm:$0xff]
    %v1482 = vld [vmem:[#allocation17 + $0x98] sm:$0xff]
    %v1483 = vld [vmem:[#allocation17 + $0xa0] sm:$0xff]
    %v1484 = vld [vmem:[#allocation17 + $0xa8] sm:$0xff]
    %v1485 = vld [vmem:[#allocation17 + $0xb0] sm:$0xff]
    %v1486 = vld [vmem:[#allocation17 + $0xb8] sm:$0xff]
    %v1487 = vld [vmem:[#allocation17 + $0xc0] sm:$0xff]
    %v1488 = vld [vmem:[#allocation17 + $0xc8] sm:$0xff]
    %v1489 = vld [vmem:[#allocation17 + $0xd0] sm:$0xff]
    %v1490 = vld [vmem:[#allocation17 + $0xd8] sm:$0xff]
    %v1491 = vld [vmem:[#allocation17 + $0xe0] sm:$0xff]
    %v1492 = vld [vmem:[#allocation17 + $0xe8] sm:$0xff]
    %v1493 = vld [vmem:[#allocation17 + $0xf0] sm:$0xff]
    %v1494 = vld [vmem:[#allocation17 + $0xf8] sm:$0xff]
    %v1495 = vld [vmem:[#allocation17 + $0x100] sm:$0xff]
    %v1496 = vld [vmem:[#allocation17 + $0x108] sm:$0xff]
    %v1497 = vld [vmem:[#allocation17 + $0x110] sm:$0xff]
    %v1498 = vld [vmem:[#allocation17 + $0x118] sm:$0xff]
    %v1499 = vld [vmem:[#allocation17 + $0x120] sm:$0xff]
    %v1500 = vld [vmem:[#allocation17 + $0x128] sm:$0xff]
    %v1501 = vld [vmem:[#allocation17 + $0x130] sm:$0xff]
    %v1502 = vld [vmem:[#allocation17 + $0x138] sm:$0xff]
    %v1503 = vld [vmem:[#allocation17 + $0x140] sm:$0xff]
    %v1504 = vld [vmem:[#allocation17 + $0x148] sm:$0xff]
    %v1505 = vld [vmem:[#allocation17 + $0x150] sm:$0xff]
    %v1506 = vld [vmem:[#allocation17 + $0x158] sm:$0xff]
    %v1507 = vld [vmem:[#allocation17 + $0x160] sm:$0xff]
    %v1508 = vld [vmem:[#allocation17 + $0x168] sm:$0xff]
    %v1509 = vld [vmem:[#allocation17 + $0x170] sm:$0xff]
    %v1510 = vld [vmem:[#allocation17 + $0x178] sm:$0xff]
    %v1559 = vunpack.c.l.b16 %v1463
    %v1560 = vunpack.c.h.b16 %v1463
    %v1561 = vunpack.c.l.b16 %v1464
    %v1562 = vunpack.c.h.b16 %v1464
    %v1563 = vunpack.c.l.b16 %v1465
    %v1564 = vunpack.c.h.b16 %v1465
    %v1565 = vunpack.c.l.b16 %v1466
    %v1566 = vunpack.c.h.b16 %v1466
    %v1567 = vunpack.c.l.b16 %v1467
    %v1568 = vunpack.c.h.b16 %v1467
    %v1569 = vunpack.c.l.b16 %v1468
    %v1570 = vunpack.c.h.b16 %v1468
    %v1571 = vunpack.c.l.b16 %v1469
    %v1572 = vunpack.c.h.b16 %v1469
    %v1573 = vunpack.c.l.b16 %v1470
    %v1574 = vunpack.c.h.b16 %v1470
    %v1575 = vunpack.c.l.b16 %v1471
    %v1576 = vunpack.c.h.b16 %v1471
    %v1577 = vunpack.c.l.b16 %v1472
    %v1578 = vunpack.c.h.b16 %v1472
    %v1579 = vunpack.c.l.b16 %v1473
    %v1580 = vunpack.c.h.b16 %v1473
    %v1581 = vunpack.c.l.b16 %v1474
    %v1582 = vunpack.c.h.b16 %v1474
    %v1583 = vunpack.c.l.b16 %v1475
    %v1584 = vunpack.c.h.b16 %v1475
    %v1585 = vunpack.c.l.b16 %v1476
    %v1586 = vunpack.c.h.b16 %v1476
    %v1587 = vunpack.c.l.b16 %v1477
    %v1588 = vunpack.c.h.b16 %v1477
    %v1589 = vunpack.c.l.b16 %v1478
    %v1590 = vunpack.c.h.b16 %v1478
    %v1591 = vunpack.c.l.b16 %v1479
    %v1592 = vunpack.c.h.b16 %v1479
    %v1593 = vunpack.c.l.b16 %v1480
    %v1594 = vunpack.c.h.b16 %v1480
    %v1595 = vunpack.c.l.b16 %v1481
    %v1596 = vunpack.c.h.b16 %v1481
    %v1597 = vunpack.c.l.b16 %v1482
    %v1598 = vunpack.c.h.b16 %v1482
    %v1599 = vunpack.c.l.b16 %v1483
    %v1600 = vunpack.c.h.b16 %v1483
    %v1601 = vunpack.c.l.b16 %v1484
    %v1602 = vunpack.c.h.b16 %v1484
    %v1603 = vunpack.c.l.b16 %v1485
    %v1604 = vunpack.c.h.b16 %v1485
    %v1605 = vunpack.c.l.b16 %v1486
    %v1606 = vunpack.c.h.b16 %v1486
    %v1607 = vunpack.c.l.b16 %v1487
    %v1608 = vunpack.c.h.b16 %v1487
    %v1609 = vunpack.c.l.b16 %v1488
    %v1610 = vunpack.c.h.b16 %v1488
    %v1611 = vunpack.c.l.b16 %v1489
    %v1612 = vunpack.c.h.b16 %v1489
    %v1613 = vunpack.c.l.b16 %v1490
    %v1614 = vunpack.c.h.b16 %v1490
    %v1615 = vunpack.c.l.b16 %v1491
    %v1616 = vunpack.c.h.b16 %v1491
    %v1617 = vunpack.c.l.b16 %v1492
    %v1618 = vunpack.c.h.b16 %v1492
    %v1619 = vunpack.c.l.b16 %v1493
    %v1620 = vunpack.c.h.b16 %v1493
    %v1621 = vunpack.c.l.b16 %v1494
    %v1622 = vunpack.c.h.b16 %v1494
    %v1623 = vunpack.c.l.b16 %v1495
    %v1624 = vunpack.c.h.b16 %v1495
    %v1625 = vunpack.c.l.b16 %v1496
    %v1626 = vunpack.c.h.b16 %v1496
    %v1627 = vunpack.c.l.b16 %v1497
    %v1628 = vunpack.c.h.b16 %v1497
    %v1629 = vunpack.c.l.b16 %v1498
    %v1630 = vunpack.c.h.b16 %v1498
    %v1631 = vunpack.c.l.b16 %v1499
    %v1632 = vunpack.c.h.b16 %v1499
    %v1633 = vunpack.c.l.b16 %v1500
    %v1634 = vunpack.c.h.b16 %v1500
    %v1635 = vunpack.c.l.b16 %v1501
    %v1636 = vunpack.c.h.b16 %v1501
    %v1637 = vunpack.c.l.b16 %v1502
    %v1638 = vunpack.c.h.b16 %v1502
    %v1639 = vunpack.c.l.b16 %v1503
    %v1640 = vunpack.c.h.b16 %v1503
    %v1641 = vunpack.c.l.b16 %v1504
    %v1642 = vunpack.c.h.b16 %v1504
    %v1643 = vunpack.c.l.b16 %v1505
    %v1644 = vunpack.c.h.b16 %v1505
    %v1645 = vunpack.c.l.b16 %v1506
    %v1646 = vunpack.c.h.b16 %v1506
    %v1647 = vunpack.c.l.b16 %v1507
    %v1648 = vunpack.c.h.b16 %v1507
    %v1649 = vunpack.c.l.b16 %v1508
    %v1650 = vunpack.c.h.b16 %v1508
    %v1651 = vunpack.c.l.b16 %v1509
    %v1652 = vunpack.c.h.b16 %v1509
    %v1653 = vunpack.c.l.b16 %v1510
    %v1654 = vunpack.c.h.b16 %v1510
    %v1655 = vpack.c.b16 %v1565, %v1559
    %v1656 = vpack.c.b16 %v1566, %v1560
    %v1657 = vpack.c.b16 %v1567, %v1561
    %v1658 = vpack.c.b16 %v1568, %v1562
    %v1659 = vpack.c.b16 %v1569, %v1563
    %v1660 = vpack.c.b16 %v1570, %v1564
    %v1661 = vpack.c.b16 %v1577, %v1571
    %v1662 = vpack.c.b16 %v1578, %v1572
    %v1663 = vpack.c.b16 %v1579, %v1573
    %v1664 = vpack.c.b16 %v1580, %v1574
    %v1665 = vpack.c.b16 %v1581, %v1575
    %v1666 = vpack.c.b16 %v1582, %v1576
    %v1667 = vpack.c.b16 %v1589, %v1583
    %v1668 = vpack.c.b16 %v1590, %v1584
    %v1669 = vpack.c.b16 %v1591, %v1585
    %v1670 = vpack.c.b16 %v1592, %v1586
    %v1671 = vpack.c.b16 %v1593, %v1587
    %v1672 = vpack.c.b16 %v1594, %v1588
    %v1673 = vpack.c.b16 %v1601, %v1595
    %v1674 = vpack.c.b16 %v1602, %v1596
    %v1675 = vpack.c.b16 %v1603, %v1597
    %v1676 = vpack.c.b16 %v1604, %v1598
    %v1677 = vpack.c.b16 %v1605, %v1599
    %v1678 = vpack.c.b16 %v1606, %v1600
    %v1679 = vpack.c.b16 %v1613, %v1607
    %v1680 = vpack.c.b16 %v1614, %v1608
    %v1681 = vpack.c.b16 %v1615, %v1609
    %v1682 = vpack.c.b16 %v1616, %v1610
    %v1683 = vpack.c.b16 %v1617, %v1611
    %v1684 = vpack.c.b16 %v1618, %v1612
    %v1685 = vpack.c.b16 %v1625, %v1619
    %v1686 = vpack.c.b16 %v1626, %v1620
    %v1687 = vpack.c.b16 %v1627, %v1621
    %v1688 = vpack.c.b16 %v1628, %v1622
    %v1689 = vpack.c.b16 %v1629, %v1623
    %v1690 = vpack.c.b16 %v1630, %v1624
    %v1691 = vpack.c.b16 %v1637, %v1631
    %v1692 = vpack.c.b16 %v1638, %v1632
    %v1693 = vpack.c.b16 %v1639, %v1633
    %v1694 = vpack.c.b16 %v1640, %v1634
    %v1695 = vpack.c.b16 %v1641, %v1635
    %v1696 = vpack.c.b16 %v1642, %v1636
    %v1697 = vpack.c.b16 %v1649, %v1643
    %v1698 = vpack.c.b16 %v1650, %v1644
    %v1699 = vpack.c.b16 %v1651, %v1645
    %v1700 = vpack.c.b16 %v1652, %v1646
    %v1701 = vpack.c.b16 %v1653, %v1647
    %v1702 = vpack.c.b16 %v1654, %v1648
    %1751 = vmatpush.bf16.msra.mxu0 %v1697
    %1752 = vmatpush.bf16.msra.mxu0 %v1691
    %1753 = vmatpush.bf16.msra.mxu0 %v1685
    %1754 = vmatpush.bf16.msra.mxu0 %v1679
    %1755 = vmatpush.bf16.msra.mxu0 %v1673
    %1756 = vmatpush.bf16.msra.mxu0 %v1667
    %1757 = vmatpush.bf16.msra.mxu0 %v1661
    %1758 = vmatpush.bf16.msra.mxu0 %v1655
    %1759 = vmatmul.bf16.gmra.mxu0 %v1462
    %v1760 = vpop.f32.mrf.mxu0
    %v1761 = vadd.f32 0.0, %v1760
    %v1762 = vpop.f32.mrf.mxu0
    %1763 = vdwg.mxu0
    %1764 = vmatpush.bf16.msra.mxu0 %v1698
    %1765 = vmatpush.bf16.msra.mxu0 %v1692
    %1766 = vmatpush.bf16.msra.mxu0 %v1686
    %1767 = vmatpush.bf16.msra.mxu0 %v1680
    %1768 = vmatpush.bf16.msra.mxu0 %v1674
    %1769 = vmatpush.bf16.msra.mxu0 %v1668
    %1770 = vmatpush.bf16.msra.mxu0 %v1662
    %1771 = vmatpush.bf16.msra.mxu0 %v1656
    %1772 = vmatmul.bf16.gmra.mxu0 %v1462
    %v1773 = vpop.f32.mrf.mxu0
    %v1774 = vadd.f32 0.0, %v1773
    %v1775 = vpop.f32.mrf.mxu0
    %1776 = vdwg.mxu0
    %1777 = vmatpush.bf16.msra.mxu0 %v1699
    %1778 = vmatpush.bf16.msra.mxu0 %v1693
    %1779 = vmatpush.bf16.msra.mxu0 %v1687
    %1780 = vmatpush.bf16.msra.mxu0 %v1681
    %1781 = vmatpush.bf16.msra.mxu0 %v1675
    %1782 = vmatpush.bf16.msra.mxu0 %v1669
    %1783 = vmatpush.bf16.msra.mxu0 %v1663
    %1784 = vmatpush.bf16.msra.mxu0 %v1657
    %1785 = vmatmul.bf16.gmra.mxu0 %v1462
    %v1786 = vpop.f32.mrf.mxu0
    %v1787 = vadd.f32 0.0, %v1786
    %v1788 = vpop.f32.mrf.mxu0
    %1789 = vdwg.mxu0
    %1790 = vmatpush.bf16.msra.mxu0 %v1700
    %1791 = vmatpush.bf16.msra.mxu0 %v1694
    %1792 = vmatpush.bf16.msra.mxu0 %v1688
    %1793 = vmatpush.bf16.msra.mxu0 %v1682
    %1794 = vmatpush.bf16.msra.mxu0 %v1676
    %1795 = vmatpush.bf16.msra.mxu0 %v1670
    %1796 = vmatpush.bf16.msra.mxu0 %v1664
    %1797 = vmatpush.bf16.msra.mxu0 %v1658
    %1798 = vmatmul.bf16.gmra.mxu0 %v1462
    %v1799 = vpop.f32.mrf.mxu0
    %v1800 = vadd.f32 0.0, %v1799
    %v1801 = vpop.f32.mrf.mxu0
    %1802 = vdwg.mxu0
    %1803 = vmatpush.bf16.msra.mxu0 %v1701
    %1804 = vmatpush.bf16.msra.mxu0 %v1695
    %1805 = vmatpush.bf16.msra.mxu0 %v1689
    %1806 = vmatpush.bf16.msra.mxu0 %v1683
    %1807 = vmatpush.bf16.msra.mxu0 %v1677
    %1808 = vmatpush.bf16.msra.mxu0 %v1671
    %1809 = vmatpush.bf16.msra.mxu0 %v1665
    %1810 = vmatpush.bf16.msra.mxu0 %v1659
    %1811 = vmatmul.bf16.gmra.mxu0 %v1462
    %v1812 = vpop.f32.mrf.mxu0
    %v1813 = vadd.f32 0.0, %v1812
    %v1814 = vpop.f32.mrf.mxu0
    %1815 = vdwg.mxu0
    %1816 = vmatpush.bf16.msra.mxu0 %v1702
    %1817 = vmatpush.bf16.msra.mxu0 %v1696
    %1818 = vmatpush.bf16.msra.mxu0 %v1690
    %1819 = vmatpush.bf16.msra.mxu0 %v1684
    %1820 = vmatpush.bf16.msra.mxu0 %v1678
    %1821 = vmatpush.bf16.msra.mxu0 %v1672
    %1822 = vmatpush.bf16.msra.mxu0 %v1666
    %1823 = vmatpush.bf16.msra.mxu0 %v1660
    %1824 = vmatmul.bf16.gmra.mxu0 %v1462
    %v1825 = vpop.f32.mrf.mxu0
    %v1826 = vadd.f32 0.0, %v1825
    %v1827 = vpop.f32.mrf.mxu0
    %1828 = vdwg.mxu0
    %v1833 = vunpack.c.l.b16 %v1074
    %v1834 = vunpack.c.h.b16 %v1074
    %v1835 = vunpack.c.l.b16 %v1075
    %v1836 = vunpack.c.h.b16 %v1075
    %v1837 = vunpack.c.l.b16 %v1076
    %v1838 = vunpack.c.h.b16 %v1076
    %v1839 = vunpack.c.l.b16 %v1077
    %v1840 = vunpack.c.h.b16 %v1077
    %v1841 = vpack.c.b16 %v1833, %v1833
    %v1842 = vpack.c.b16 %v1834, %v1834
    %v1843 = vpack.c.b16 %v1835, %v1835
    %v1844 = vpack.c.b16 %v1836, %v1836
    %v1845 = vpack.c.b16 %v1837, %v1837
    %v1846 = vpack.c.b16 %v1838, %v1838
    %v1847 = vpack.c.b16 %v1839, %v1839
    %v1848 = vpack.c.b16 %v1840, %v1840
    %v2241 = vunpack.c.l.b16 %v1078
    %v2242 = vunpack.c.h.b16 %v1078
    %v2243 = vunpack.c.l.b16 %v1079
    %v2244 = vunpack.c.h.b16 %v1079
    %v2245 = vunpack.c.l.b16 %v1080
    %v2246 = vunpack.c.h.b16 %v1080
    %v2247 = vunpack.c.l.b16 %v1081
    %v2248 = vunpack.c.h.b16 %v1081
    %v2249 = vunpack.c.l.b16 %v1082
    %v2250 = vunpack.c.h.b16 %v1082
    %v2251 = vunpack.c.l.b16 %v1083
    %v2252 = vunpack.c.h.b16 %v1083
    %v2253 = vunpack.c.l.b16 %v1084
    %v2254 = vunpack.c.h.b16 %v1084
    %v2255 = vunpack.c.l.b16 %v1085
    %v2256 = vunpack.c.h.b16 %v1085
    %v2257 = vunpack.c.l.b16 %v1086
    %v2258 = vunpack.c.h.b16 %v1086
    %v2259 = vunpack.c.l.b16 %v1087
    %v2260 = vunpack.c.h.b16 %v1087
    %v2261 = vunpack.c.l.b16 %v1088
    %v2262 = vunpack.c.h.b16 %v1088
    %v2263 = vunpack.c.l.b16 %v1089
    %v2264 = vunpack.c.h.b16 %v1089
    %v2265 = vunpack.c.l.b16 %v1090
    %v2266 = vunpack.c.h.b16 %v1090
    %v2267 = vunpack.c.l.b16 %v1091
    %v2268 = vunpack.c.h.b16 %v1091
    %v2269 = vunpack.c.l.b16 %v1092
    %v2270 = vunpack.c.h.b16 %v1092
    %v2271 = vunpack.c.l.b16 %v1093
    %v2272 = vunpack.c.h.b16 %v1093
    %v2273 = vunpack.c.l.b16 %v1094
    %v2274 = vunpack.c.h.b16 %v1094
    %v2275 = vunpack.c.l.b16 %v1095
    %v2276 = vunpack.c.h.b16 %v1095
    %v2277 = vunpack.c.l.b16 %v1096
    %v2278 = vunpack.c.h.b16 %v1096
    %v2279 = vunpack.c.l.b16 %v1097
    %v2280 = vunpack.c.h.b16 %v1097
    %v2281 = vunpack.c.l.b16 %v1098
    %v2282 = vunpack.c.h.b16 %v1098
    %v2283 = vunpack.c.l.b16 %v1099
    %v2284 = vunpack.c.h.b16 %v1099
    %v2285 = vunpack.c.l.b16 %v1100
    %v2286 = vunpack.c.h.b16 %v1100
    %v2287 = vunpack.c.l.b16 %v1101
    %v2288 = vunpack.c.h.b16 %v1101
    %v2289 = vunpack.c.l.b16 %v1102
    %v2290 = vunpack.c.h.b16 %v1102
    %v2291 = vunpack.c.l.b16 %v1103
    %v2292 = vunpack.c.h.b16 %v1103
    %v2293 = vunpack.c.l.b16 %v1104
    %v2294 = vunpack.c.h.b16 %v1104
    %v2295 = vunpack.c.l.b16 %v1105
    %v2296 = vunpack.c.h.b16 %v1105
    %v2297 = vunpack.c.l.b16 %v1106
    %v2298 = vunpack.c.h.b16 %v1106
    %v2299 = vunpack.c.l.b16 %v1107
    %v2300 = vunpack.c.h.b16 %v1107
    %v2301 = vunpack.c.l.b16 %v1108
    %v2302 = vunpack.c.h.b16 %v1108
    %v2303 = vunpack.c.l.b16 %v1109
    %v2304 = vunpack.c.h.b16 %v1109
    %v2305 = vunpack.c.l.b16 %v1110
    %v2306 = vunpack.c.h.b16 %v1110
    %v2307 = vunpack.c.l.b16 %v1111
    %v2308 = vunpack.c.h.b16 %v1111
    %v2309 = vunpack.c.l.b16 %v1112
    %v2310 = vunpack.c.h.b16 %v1112
    %v2311 = vunpack.c.l.b16 %v1113
    %v2312 = vunpack.c.h.b16 %v1113
    %v2313 = vunpack.c.l.b16 %v1114
    %v2314 = vunpack.c.h.b16 %v1114
    %v2315 = vunpack.c.l.b16 %v1115
    %v2316 = vunpack.c.h.b16 %v1115
    %v2317 = vunpack.c.l.b16 %v1116
    %v2318 = vunpack.c.h.b16 %v1116
    %v2319 = vunpack.c.l.b16 %v1117
    %v2320 = vunpack.c.h.b16 %v1117
    %v2321 = vunpack.c.l.b16 %v1118
    %v2322 = vunpack.c.h.b16 %v1118
    %v2323 = vunpack.c.l.b16 %v1119
    %v2324 = vunpack.c.h.b16 %v1119
    %v2325 = vunpack.c.l.b16 %v1120
    %v2326 = vunpack.c.h.b16 %v1120
    %v2327 = vunpack.c.l.b16 %v1121
    %v2328 = vunpack.c.h.b16 %v1121
    %v2329 = vunpack.c.l.b16 %v1122
    %v2330 = vunpack.c.h.b16 %v1122
    %v2331 = vunpack.c.l.b16 %v1123
    %v2332 = vunpack.c.h.b16 %v1123
    %v2333 = vunpack.c.l.b16 %v1124
    %v2334 = vunpack.c.h.b16 %v1124
    %v2335 = vunpack.c.l.b16 %v1125
    %v2336 = vunpack.c.h.b16 %v1125
    %v2337 = vunpack.c.l.b16 %v1126
    %v2338 = vunpack.c.h.b16 %v1126
    %v2339 = vunpack.c.l.b16 %v1127
    %v2340 = vunpack.c.h.b16 %v1127
    %v2341 = vunpack.c.l.b16 %v1128
    %v2342 = vunpack.c.h.b16 %v1128
    %v2343 = vunpack.c.l.b16 %v1129
    %v2344 = vunpack.c.h.b16 %v1129
    %v2345 = vunpack.c.l.b16 %v1130
    %v2346 = vunpack.c.h.b16 %v1130
    %v2347 = vunpack.c.l.b16 %v1131
    %v2348 = vunpack.c.h.b16 %v1131
    %v2349 = vunpack.c.l.b16 %v1132
    %v2350 = vunpack.c.h.b16 %v1132
    %v2351 = vunpack.c.l.b16 %v1133
    %v2352 = vunpack.c.h.b16 %v1133
    %v2353 = vunpack.c.l.b16 %v1134
    %v2354 = vunpack.c.h.b16 %v1134
    %v2355 = vunpack.c.l.b16 %v1135
    %v2356 = vunpack.c.h.b16 %v1135
    %v2357 = vunpack.c.l.b16 %v1136
    %v2358 = vunpack.c.h.b16 %v1136
    %v2359 = vunpack.c.l.b16 %v1137
    %v2360 = vunpack.c.h.b16 %v1137
    %v2361 = vunpack.c.l.b16 %v1138
    %v2362 = vunpack.c.h.b16 %v1138
    %v2363 = vunpack.c.l.b16 %v1139
    %v2364 = vunpack.c.h.b16 %v1139
    %v2365 = vunpack.c.l.b16 %v1140
    %v2366 = vunpack.c.h.b16 %v1140
    %v2367 = vunpack.c.l.b16 %v1141
    %v2368 = vunpack.c.h.b16 %v1141
    %v2369 = vunpack.c.l.b16 %v1142
    %v2370 = vunpack.c.h.b16 %v1142
    %v2371 = vunpack.c.l.b16 %v1143
    %v2372 = vunpack.c.h.b16 %v1143
    %v2373 = vunpack.c.l.b16 %v1144
    %v2374 = vunpack.c.h.b16 %v1144
    %v2375 = vunpack.c.l.b16 %v1145
    %v2376 = vunpack.c.h.b16 %v1145
    %v2377 = vunpack.c.l.b16 %v1146
    %v2378 = vunpack.c.h.b16 %v1146
    %v2379 = vunpack.c.l.b16 %v1147
    %v2380 = vunpack.c.h.b16 %v1147
    %v2381 = vunpack.c.l.b16 %v1148
    %v2382 = vunpack.c.h.b16 %v1148
    %v2383 = vunpack.c.l.b16 %v1149
    %v2384 = vunpack.c.h.b16 %v1149
    %v2385 = vunpack.c.l.b16 %v1150
    %v2386 = vunpack.c.h.b16 %v1150
    %v2387 = vunpack.c.l.b16 %v1151
    %v2388 = vunpack.c.h.b16 %v1151
    %v2389 = vunpack.c.l.b16 %v1152
    %v2390 = vunpack.c.h.b16 %v1152
    %v2391 = vunpack.c.l.b16 %v1153
    %v2392 = vunpack.c.h.b16 %v1153
    %v2393 = vunpack.c.l.b16 %v1154
    %v2394 = vunpack.c.h.b16 %v1154
    %v2395 = vunpack.c.l.b16 %v1155
    %v2396 = vunpack.c.h.b16 %v1155
    %v2397 = vunpack.c.l.b16 %v1156
    %v2398 = vunpack.c.h.b16 %v1156
    %v2399 = vunpack.c.l.b16 %v1157
    %v2400 = vunpack.c.h.b16 %v1157
    %v2401 = vunpack.c.l.b16 %v1158
    %v2402 = vunpack.c.h.b16 %v1158
    %v2403 = vunpack.c.l.b16 %v1159
    %v2404 = vunpack.c.h.b16 %v1159
    %v2405 = vunpack.c.l.b16 %v1160
    %v2406 = vunpack.c.h.b16 %v1160
    %v2407 = vunpack.c.l.b16 %v1161
    %v2408 = vunpack.c.h.b16 %v1161
    %v2409 = vunpack.c.l.b16 %v1162
    %v2410 = vunpack.c.h.b16 %v1162
    %v2411 = vunpack.c.l.b16 %v1163
    %v2412 = vunpack.c.h.b16 %v1163
    %v2413 = vunpack.c.l.b16 %v1164
    %v2414 = vunpack.c.h.b16 %v1164
    %v2415 = vunpack.c.l.b16 %v1165
    %v2416 = vunpack.c.h.b16 %v1165
    %v2417 = vunpack.c.l.b16 %v1166
    %v2418 = vunpack.c.h.b16 %v1166
    %v2419 = vunpack.c.l.b16 %v1167
    %v2420 = vunpack.c.h.b16 %v1167
    %v2421 = vunpack.c.l.b16 %v1168
    %v2422 = vunpack.c.h.b16 %v1168
    %v2423 = vunpack.c.l.b16 %v1169
    %v2424 = vunpack.c.h.b16 %v1169
    %v2425 = vunpack.c.l.b16 %v1170
    %v2426 = vunpack.c.h.b16 %v1170
    %v2427 = vunpack.c.l.b16 %v1171
    %v2428 = vunpack.c.h.b16 %v1171
    %v2429 = vunpack.c.l.b16 %v1172
    %v2430 = vunpack.c.h.b16 %v1172
    %v2431 = vunpack.c.l.b16 %v1173
    %v2432 = vunpack.c.h.b16 %v1173
    %v2433 = vunpack.c.l.b16 %v1174
    %v2434 = vunpack.c.h.b16 %v1174
    %v2435 = vunpack.c.l.b16 %v1175
    %v2436 = vunpack.c.h.b16 %v1175
    %v2437 = vunpack.c.l.b16 %v1176
    %v2438 = vunpack.c.h.b16 %v1176
    %v2439 = vunpack.c.l.b16 %v1177
    %v2440 = vunpack.c.h.b16 %v1177
    %v2441 = vunpack.c.l.b16 %v1178
    %v2442 = vunpack.c.h.b16 %v1178
    %v2443 = vunpack.c.l.b16 %v1179
    %v2444 = vunpack.c.h.b16 %v1179
    %v2445 = vunpack.c.l.b16 %v1180
    %v2446 = vunpack.c.h.b16 %v1180
    %v2447 = vunpack.c.l.b16 %v1181
    %v2448 = vunpack.c.h.b16 %v1181
    %v2449 = vunpack.c.l.b16 %v1182
    %v2450 = vunpack.c.h.b16 %v1182
    %v2451 = vunpack.c.l.b16 %v1183
    %v2452 = vunpack.c.h.b16 %v1183
    %v2453 = vunpack.c.l.b16 %v1184
    %v2454 = vunpack.c.h.b16 %v1184
    %v2455 = vunpack.c.l.b16 %v1185
    %v2456 = vunpack.c.h.b16 %v1185
    %v2457 = vunpack.c.l.b16 %v1186
    %v2458 = vunpack.c.h.b16 %v1186
    %v2459 = vunpack.c.l.b16 %v1187
    %v2460 = vunpack.c.h.b16 %v1187
    %v2461 = vunpack.c.l.b16 %v1188
    %v2462 = vunpack.c.h.b16 %v1188
    %v2463 = vunpack.c.l.b16 %v1189
    %v2464 = vunpack.c.h.b16 %v1189
    %v2465 = vunpack.c.l.b16 %v1190
    %v2466 = vunpack.c.h.b16 %v1190
    %v2467 = vunpack.c.l.b16 %v1191
    %v2468 = vunpack.c.h.b16 %v1191
    %v2469 = vunpack.c.l.b16 %v1192
    %v2470 = vunpack.c.h.b16 %v1192
    %v2471 = vunpack.c.l.b16 %v1193
    %v2472 = vunpack.c.h.b16 %v1193
    %v2473 = vunpack.c.l.b16 %v1194
    %v2474 = vunpack.c.h.b16 %v1194
    %v2475 = vunpack.c.l.b16 %v1195
    %v2476 = vunpack.c.h.b16 %v1195
    %v2477 = vunpack.c.l.b16 %v1196
    %v2478 = vunpack.c.h.b16 %v1196
    %v2479 = vunpack.c.l.b16 %v1197
    %v2480 = vunpack.c.h.b16 %v1197
    %v2481 = vunpack.c.l.b16 %v1198
    %v2482 = vunpack.c.h.b16 %v1198
    %v2483 = vunpack.c.l.b16 %v1199
    %v2484 = vunpack.c.h.b16 %v1199
    %v2485 = vunpack.c.l.b16 %v1200
    %v2486 = vunpack.c.h.b16 %v1200
    %v2487 = vunpack.c.l.b16 %v1201
    %v2488 = vunpack.c.h.b16 %v1201
    %v2489 = vunpack.c.l.b16 %v1202
    %v2490 = vunpack.c.h.b16 %v1202
    %v2491 = vunpack.c.l.b16 %v1203
    %v2492 = vunpack.c.h.b16 %v1203
    %v2493 = vunpack.c.l.b16 %v1204
    %v2494 = vunpack.c.h.b16 %v1204
    %v2495 = vunpack.c.l.b16 %v1205
    %v2496 = vunpack.c.h.b16 %v1205
    %v2497 = vunpack.c.l.b16 %v1206
    %v2498 = vunpack.c.h.b16 %v1206
    %v2499 = vunpack.c.l.b16 %v1207
    %v2500 = vunpack.c.h.b16 %v1207
    %v2501 = vunpack.c.l.b16 %v1208
    %v2502 = vunpack.c.h.b16 %v1208
    %v2503 = vunpack.c.l.b16 %v1209
    %v2504 = vunpack.c.h.b16 %v1209
    %v2505 = vunpack.c.l.b16 %v1210
    %v2506 = vunpack.c.h.b16 %v1210
    %v2507 = vunpack.c.l.b16 %v1211
    %v2508 = vunpack.c.h.b16 %v1211
    %v2509 = vunpack.c.l.b16 %v1212
    %v2510 = vunpack.c.h.b16 %v1212
    %v2511 = vunpack.c.l.b16 %v1213
    %v2512 = vunpack.c.h.b16 %v1213
    %v2513 = vunpack.c.l.b16 %v1214
    %v2514 = vunpack.c.h.b16 %v1214
    %v2515 = vunpack.c.l.b16 %v1215
    %v2516 = vunpack.c.h.b16 %v1215
    %v2517 = vunpack.c.l.b16 %v1216
    %v2518 = vunpack.c.h.b16 %v1216
    %v2519 = vunpack.c.l.b16 %v1217
    %v2520 = vunpack.c.h.b16 %v1217
    %v2521 = vunpack.c.l.b16 %v1218
    %v2522 = vunpack.c.h.b16 %v1218
    %v2523 = vunpack.c.l.b16 %v1219
    %v2524 = vunpack.c.h.b16 %v1219
    %v2525 = vunpack.c.l.b16 %v1220
    %v2526 = vunpack.c.h.b16 %v1220
    %v2527 = vunpack.c.l.b16 %v1221
    %v2528 = vunpack.c.h.b16 %v1221
    %v2529 = vunpack.c.l.b16 %v1222
    %v2530 = vunpack.c.h.b16 %v1222
    %v2531 = vunpack.c.l.b16 %v1223
    %v2532 = vunpack.c.h.b16 %v1223
    %v2533 = vunpack.c.l.b16 %v1224
    %v2534 = vunpack.c.h.b16 %v1224
    %v2535 = vunpack.c.l.b16 %v1225
    %v2536 = vunpack.c.h.b16 %v1225
    %v2537 = vunpack.c.l.b16 %v1226
    %v2538 = vunpack.c.h.b16 %v1226
    %v2539 = vunpack.c.l.b16 %v1227
    %v2540 = vunpack.c.h.b16 %v1227
    %v2541 = vunpack.c.l.b16 %v1228
    %v2542 = vunpack.c.h.b16 %v1228
    %v2543 = vunpack.c.l.b16 %v1229
    %v2544 = vunpack.c.h.b16 %v1229
    %v2545 = vunpack.c.l.b16 %v1230
    %v2546 = vunpack.c.h.b16 %v1230
    %v2547 = vunpack.c.l.b16 %v1231
    %v2548 = vunpack.c.h.b16 %v1231
    %v2549 = vunpack.c.l.b16 %v1232
    %v2550 = vunpack.c.h.b16 %v1232
    %v2551 = vunpack.c.l.b16 %v1233
    %v2552 = vunpack.c.h.b16 %v1233
    %v2553 = vunpack.c.l.b16 %v1234
    %v2554 = vunpack.c.h.b16 %v1234
    %v2555 = vunpack.c.l.b16 %v1235
    %v2556 = vunpack.c.h.b16 %v1235
    %v2557 = vunpack.c.l.b16 %v1236
    %v2558 = vunpack.c.h.b16 %v1236
    %v2559 = vunpack.c.l.b16 %v1237
    %v2560 = vunpack.c.h.b16 %v1237
    %v2561 = vunpack.c.l.b16 %v1238
    %v2562 = vunpack.c.h.b16 %v1238
    %v2563 = vunpack.c.l.b16 %v1239
    %v2564 = vunpack.c.h.b16 %v1239
    %v2565 = vunpack.c.l.b16 %v1240
    %v2566 = vunpack.c.h.b16 %v1240
    %v2567 = vunpack.c.l.b16 %v1241
    %v2568 = vunpack.c.h.b16 %v1241
    %v2569 = vunpack.c.l.b16 %v1242
    %v2570 = vunpack.c.h.b16 %v1242
    %v2571 = vunpack.c.l.b16 %v1243
    %v2572 = vunpack.c.h.b16 %v1243
    %v2573 = vunpack.c.l.b16 %v1244
    %v2574 = vunpack.c.h.b16 %v1244
    %v2575 = vunpack.c.l.b16 %v1245
    %v2576 = vunpack.c.h.b16 %v1245
    %v2577 = vunpack.c.l.b16 %v1246
    %v2578 = vunpack.c.h.b16 %v1246
    %v2579 = vunpack.c.l.b16 %v1247
    %v2580 = vunpack.c.h.b16 %v1247
    %v2581 = vunpack.c.l.b16 %v1248
    %v2582 = vunpack.c.h.b16 %v1248
    %v2583 = vunpack.c.l.b16 %v1249
    %v2584 = vunpack.c.h.b16 %v1249
    %v2585 = vunpack.c.l.b16 %v1250
    %v2586 = vunpack.c.h.b16 %v1250
    %v2587 = vunpack.c.l.b16 %v1251
    %v2588 = vunpack.c.h.b16 %v1251
    %v2589 = vunpack.c.l.b16 %v1252
    %v2590 = vunpack.c.h.b16 %v1252
    %v2591 = vunpack.c.l.b16 %v1253
    %v2592 = vunpack.c.h.b16 %v1253
    %v2593 = vunpack.c.l.b16 %v1254
    %v2594 = vunpack.c.h.b16 %v1254
    %v2595 = vunpack.c.l.b16 %v1255
    %v2596 = vunpack.c.h.b16 %v1255
    %v2597 = vunpack.c.l.b16 %v1256
    %v2598 = vunpack.c.h.b16 %v1256
    %v2599 = vunpack.c.l.b16 %v1257
    %v2600 = vunpack.c.h.b16 %v1257
    %v2601 = vunpack.c.l.b16 %v1258
    %v2602 = vunpack.c.h.b16 %v1258
    %v2603 = vunpack.c.l.b16 %v1259
    %v2604 = vunpack.c.h.b16 %v1259
    %v2605 = vunpack.c.l.b16 %v1260
    %v2606 = vunpack.c.h.b16 %v1260
    %v2607 = vunpack.c.l.b16 %v1261
    %v2608 = vunpack.c.h.b16 %v1261
    %v2609 = vunpack.c.l.b16 %v1262
    %v2610 = vunpack.c.h.b16 %v1262
    %v2611 = vunpack.c.l.b16 %v1263
    %v2612 = vunpack.c.h.b16 %v1263
    %v2613 = vunpack.c.l.b16 %v1264
    %v2614 = vunpack.c.h.b16 %v1264
    %v2615 = vunpack.c.l.b16 %v1265
    %v2616 = vunpack.c.h.b16 %v1265
    %v2617 = vunpack.c.l.b16 %v1266
    %v2618 = vunpack.c.h.b16 %v1266
    %v2619 = vunpack.c.l.b16 %v1267
    %v2620 = vunpack.c.h.b16 %v1267
    %v2621 = vunpack.c.l.b16 %v1268
    %v2622 = vunpack.c.h.b16 %v1268
    %v2623 = vunpack.c.l.b16 %v1269
    %v2624 = vunpack.c.h.b16 %v1269
    %v2625 = vunpack.c.l.b16 %v1270
    %v2626 = vunpack.c.h.b16 %v1270
    %v2627 = vunpack.c.l.b16 %v1271
    %v2628 = vunpack.c.h.b16 %v1271
    %v2629 = vunpack.c.l.b16 %v1272
    %v2630 = vunpack.c.h.b16 %v1272
    %v2631 = vunpack.c.l.b16 %v1273
    %v2632 = vunpack.c.h.b16 %v1273
    %v2633 = vunpack.c.l.b16 %v1274
    %v2634 = vunpack.c.h.b16 %v1274
    %v2635 = vunpack.c.l.b16 %v1275
    %v2636 = vunpack.c.h.b16 %v1275
    %v2637 = vunpack.c.l.b16 %v1276
    %v2638 = vunpack.c.h.b16 %v1276
    %v2639 = vunpack.c.l.b16 %v1277
    %v2640 = vunpack.c.h.b16 %v1277
    %v2641 = vunpack.c.l.b16 %v1278
    %v2642 = vunpack.c.h.b16 %v1278
    %v2643 = vunpack.c.l.b16 %v1279
    %v2644 = vunpack.c.h.b16 %v1279
    %v2645 = vunpack.c.l.b16 %v1280
    %v2646 = vunpack.c.h.b16 %v1280
    %v2647 = vunpack.c.l.b16 %v1281
    %v2648 = vunpack.c.h.b16 %v1281
    %v2649 = vunpack.c.l.b16 %v1282
    %v2650 = vunpack.c.h.b16 %v1282
    %v2651 = vunpack.c.l.b16 %v1283
    %v2652 = vunpack.c.h.b16 %v1283
    %v2653 = vunpack.c.l.b16 %v1284
    %v2654 = vunpack.c.h.b16 %v1284
    %v2655 = vunpack.c.l.b16 %v1285
    %v2656 = vunpack.c.h.b16 %v1285
    %v2657 = vunpack.c.l.b16 %v1286
    %v2658 = vunpack.c.h.b16 %v1286
    %v2659 = vunpack.c.l.b16 %v1287
    %v2660 = vunpack.c.h.b16 %v1287
    %v2661 = vunpack.c.l.b16 %v1288
    %v2662 = vunpack.c.h.b16 %v1288
    %v2663 = vunpack.c.l.b16 %v1289
    %v2664 = vunpack.c.h.b16 %v1289
    %v2665 = vunpack.c.l.b16 %v1290
    %v2666 = vunpack.c.h.b16 %v1290
    %v2667 = vunpack.c.l.b16 %v1291
    %v2668 = vunpack.c.h.b16 %v1291
    %v2669 = vunpack.c.l.b16 %v1292
    %v2670 = vunpack.c.h.b16 %v1292
    %v2671 = vunpack.c.l.b16 %v1293
    %v2672 = vunpack.c.h.b16 %v1293
    %v2673 = vunpack.c.l.b16 %v1294
    %v2674 = vunpack.c.h.b16 %v1294
    %v2675 = vunpack.c.l.b16 %v1295
    %v2676 = vunpack.c.h.b16 %v1295
    %v2677 = vunpack.c.l.b16 %v1296
    %v2678 = vunpack.c.h.b16 %v1296
    %v2679 = vunpack.c.l.b16 %v1297
    %v2680 = vunpack.c.h.b16 %v1297
    %v2681 = vunpack.c.l.b16 %v1298
    %v2682 = vunpack.c.h.b16 %v1298
    %v2683 = vunpack.c.l.b16 %v1299
    %v2684 = vunpack.c.h.b16 %v1299
    %v2685 = vunpack.c.l.b16 %v1300
    %v2686 = vunpack.c.h.b16 %v1300
    %v2687 = vunpack.c.l.b16 %v1301
    %v2688 = vunpack.c.h.b16 %v1301
    %v2689 = vunpack.c.l.b16 %v1302
    %v2690 = vunpack.c.h.b16 %v1302
    %v2691 = vunpack.c.l.b16 %v1303
    %v2692 = vunpack.c.h.b16 %v1303
    %v2693 = vunpack.c.l.b16 %v1304
    %v2694 = vunpack.c.h.b16 %v1304
    %v2695 = vunpack.c.l.b16 %v1305
    %v2696 = vunpack.c.h.b16 %v1305
    %v2697 = vunpack.c.l.b16 %v1306
    %v2698 = vunpack.c.h.b16 %v1306
    %v2699 = vunpack.c.l.b16 %v1307
    %v2700 = vunpack.c.h.b16 %v1307
    %v2701 = vunpack.c.l.b16 %v1308
    %v2702 = vunpack.c.h.b16 %v1308
    %v2703 = vunpack.c.l.b16 %v1309
    %v2704 = vunpack.c.h.b16 %v1309
    %v2705 = vunpack.c.l.b16 %v1310
    %v2706 = vunpack.c.h.b16 %v1310
    %v2707 = vunpack.c.l.b16 %v1311
    %v2708 = vunpack.c.h.b16 %v1311
    %v2709 = vunpack.c.l.b16 %v1312
    %v2710 = vunpack.c.h.b16 %v1312
    %v2711 = vunpack.c.l.b16 %v1313
    %v2712 = vunpack.c.h.b16 %v1313
    %v2713 = vunpack.c.l.b16 %v1314
    %v2714 = vunpack.c.h.b16 %v1314
    %v2715 = vunpack.c.l.b16 %v1315
    %v2716 = vunpack.c.h.b16 %v1315
    %v2717 = vunpack.c.l.b16 %v1316
    %v2718 = vunpack.c.h.b16 %v1316
    %v2719 = vunpack.c.l.b16 %v1317
    %v2720 = vunpack.c.h.b16 %v1317
    %v2721 = vunpack.c.l.b16 %v1318
    %v2722 = vunpack.c.h.b16 %v1318
    %v2723 = vunpack.c.l.b16 %v1319
    %v2724 = vunpack.c.h.b16 %v1319
    %v2725 = vunpack.c.l.b16 %v1320
    %v2726 = vunpack.c.h.b16 %v1320
    %v2727 = vunpack.c.l.b16 %v1321
    %v2728 = vunpack.c.h.b16 %v1321
    %v2729 = vunpack.c.l.b16 %v1322
    %v2730 = vunpack.c.h.b16 %v1322
    %v2731 = vunpack.c.l.b16 %v1323
    %v2732 = vunpack.c.h.b16 %v1323
    %v2733 = vunpack.c.l.b16 %v1324
    %v2734 = vunpack.c.h.b16 %v1324
    %v2735 = vunpack.c.l.b16 %v1325
    %v2736 = vunpack.c.h.b16 %v1325
    %v2737 = vunpack.c.l.b16 %v1326
    %v2738 = vunpack.c.h.b16 %v1326
    %v2739 = vunpack.c.l.b16 %v1327
    %v2740 = vunpack.c.h.b16 %v1327
    %v2741 = vunpack.c.l.b16 %v1328
    %v2742 = vunpack.c.h.b16 %v1328
    %v2743 = vunpack.c.l.b16 %v1329
    %v2744 = vunpack.c.h.b16 %v1329
    %v2745 = vunpack.c.l.b16 %v1330
    %v2746 = vunpack.c.h.b16 %v1330
    %v2747 = vunpack.c.l.b16 %v1331
    %v2748 = vunpack.c.h.b16 %v1331
    %v2749 = vunpack.c.l.b16 %v1332
    %v2750 = vunpack.c.h.b16 %v1332
    %v2751 = vunpack.c.l.b16 %v1333
    %v2752 = vunpack.c.h.b16 %v1333
    %v2753 = vunpack.c.l.b16 %v1334
    %v2754 = vunpack.c.h.b16 %v1334
    %v2755 = vunpack.c.l.b16 %v1335
    %v2756 = vunpack.c.h.b16 %v1335
    %v2757 = vunpack.c.l.b16 %v1336
    %v2758 = vunpack.c.h.b16 %v1336
    %v2759 = vunpack.c.l.b16 %v1337
    %v2760 = vunpack.c.h.b16 %v1337
    %v2761 = vunpack.c.l.b16 %v1338
    %v2762 = vunpack.c.h.b16 %v1338
    %v2763 = vunpack.c.l.b16 %v1339
    %v2764 = vunpack.c.h.b16 %v1339
    %v2765 = vunpack.c.l.b16 %v1340
    %v2766 = vunpack.c.h.b16 %v1340
    %v2767 = vunpack.c.l.b16 %v1341
    %v2768 = vunpack.c.h.b16 %v1341
    %v2769 = vunpack.c.l.b16 %v1342
    %v2770 = vunpack.c.h.b16 %v1342
    %v2771 = vunpack.c.l.b16 %v1343
    %v2772 = vunpack.c.h.b16 %v1343
    %v2773 = vunpack.c.l.b16 %v1344
    %v2774 = vunpack.c.h.b16 %v1344
    %v2775 = vunpack.c.l.b16 %v1345
    %v2776 = vunpack.c.h.b16 %v1345
    %v2777 = vunpack.c.l.b16 %v1346
    %v2778 = vunpack.c.h.b16 %v1346
    %v2779 = vunpack.c.l.b16 %v1347
    %v2780 = vunpack.c.h.b16 %v1347
    %v2781 = vunpack.c.l.b16 %v1348
    %v2782 = vunpack.c.h.b16 %v1348
    %v2783 = vunpack.c.l.b16 %v1349
    %v2784 = vunpack.c.h.b16 %v1349
    %v2785 = vunpack.c.l.b16 %v1350
    %v2786 = vunpack.c.h.b16 %v1350
    %v2787 = vunpack.c.l.b16 %v1351
    %v2788 = vunpack.c.h.b16 %v1351
    %v2789 = vunpack.c.l.b16 %v1352
    %v2790 = vunpack.c.h.b16 %v1352
    %v2791 = vunpack.c.l.b16 %v1353
    %v2792 = vunpack.c.h.b16 %v1353
    %v2793 = vunpack.c.l.b16 %v1354
    %v2794 = vunpack.c.h.b16 %v1354
    %v2795 = vunpack.c.l.b16 %v1355
    %v2796 = vunpack.c.h.b16 %v1355
    %v2797 = vunpack.c.l.b16 %v1356
    %v2798 = vunpack.c.h.b16 %v1356
    %v2799 = vunpack.c.l.b16 %v1357
    %v2800 = vunpack.c.h.b16 %v1357
    %v2801 = vunpack.c.l.b16 %v1358
    %v2802 = vunpack.c.h.b16 %v1358
    %v2803 = vunpack.c.l.b16 %v1359
    %v2804 = vunpack.c.h.b16 %v1359
    %v2805 = vunpack.c.l.b16 %v1360
    %v2806 = vunpack.c.h.b16 %v1360
    %v2807 = vunpack.c.l.b16 %v1361
    %v2808 = vunpack.c.h.b16 %v1361
    %v2809 = vunpack.c.l.b16 %v1362
    %v2810 = vunpack.c.h.b16 %v1362
    %v2811 = vunpack.c.l.b16 %v1363
    %v2812 = vunpack.c.h.b16 %v1363
    %v2813 = vunpack.c.l.b16 %v1364
    %v2814 = vunpack.c.h.b16 %v1364
    %v2815 = vunpack.c.l.b16 %v1365
    %v2816 = vunpack.c.h.b16 %v1365
    %v2817 = vunpack.c.l.b16 %v1366
    %v2818 = vunpack.c.h.b16 %v1366
    %v2819 = vunpack.c.l.b16 %v1367
    %v2820 = vunpack.c.h.b16 %v1367
    %v2821 = vunpack.c.l.b16 %v1368
    %v2822 = vunpack.c.h.b16 %v1368
    %v2823 = vunpack.c.l.b16 %v1369
    %v2824 = vunpack.c.h.b16 %v1369
    %v2825 = vunpack.c.l.b16 %v1370
    %v2826 = vunpack.c.h.b16 %v1370
    %v2827 = vunpack.c.l.b16 %v1371
    %v2828 = vunpack.c.h.b16 %v1371
    %v2829 = vunpack.c.l.b16 %v1372
    %v2830 = vunpack.c.h.b16 %v1372
    %v2831 = vunpack.c.l.b16 %v1373
    %v2832 = vunpack.c.h.b16 %v1373
    %v2833 = vunpack.c.l.b16 %v1374
    %v2834 = vunpack.c.h.b16 %v1374
    %v2835 = vunpack.c.l.b16 %v1375
    %v2836 = vunpack.c.h.b16 %v1375
    %v2837 = vunpack.c.l.b16 %v1376
    %v2838 = vunpack.c.h.b16 %v1376
    %v2839 = vunpack.c.l.b16 %v1377
    %v2840 = vunpack.c.h.b16 %v1377
    %v2841 = vunpack.c.l.b16 %v1378
    %v2842 = vunpack.c.h.b16 %v1378
    %v2843 = vunpack.c.l.b16 %v1379
    %v2844 = vunpack.c.h.b16 %v1379
    %v2845 = vunpack.c.l.b16 %v1380
    %v2846 = vunpack.c.h.b16 %v1380
    %v2847 = vunpack.c.l.b16 %v1381
    %v2848 = vunpack.c.h.b16 %v1381
    %v2849 = vunpack.c.l.b16 %v1382
    %v2850 = vunpack.c.h.b16 %v1382
    %v2851 = vunpack.c.l.b16 %v1383
    %v2852 = vunpack.c.h.b16 %v1383
    %v2853 = vunpack.c.l.b16 %v1384
    %v2854 = vunpack.c.h.b16 %v1384
    %v2855 = vunpack.c.l.b16 %v1385
    %v2856 = vunpack.c.h.b16 %v1385
    %v2857 = vunpack.c.l.b16 %v1386
    %v2858 = vunpack.c.h.b16 %v1386
    %v2859 = vunpack.c.l.b16 %v1387
    %v2860 = vunpack.c.h.b16 %v1387
    %v2861 = vunpack.c.l.b16 %v1388
    %v2862 = vunpack.c.h.b16 %v1388
    %v2863 = vunpack.c.l.b16 %v1389
    %v2864 = vunpack.c.h.b16 %v1389
    %v2865 = vunpack.c.l.b16 %v1390
    %v2866 = vunpack.c.h.b16 %v1390
    %v2867 = vunpack.c.l.b16 %v1391
    %v2868 = vunpack.c.h.b16 %v1391
    %v2869 = vunpack.c.l.b16 %v1392
    %v2870 = vunpack.c.h.b16 %v1392
    %v2871 = vunpack.c.l.b16 %v1393
    %v2872 = vunpack.c.h.b16 %v1393
    %v2873 = vunpack.c.l.b16 %v1394
    %v2874 = vunpack.c.h.b16 %v1394
    %v2875 = vunpack.c.l.b16 %v1395
    %v2876 = vunpack.c.h.b16 %v1395
    %v2877 = vunpack.c.l.b16 %v1396
    %v2878 = vunpack.c.h.b16 %v1396
    %v2879 = vunpack.c.l.b16 %v1397
    %v2880 = vunpack.c.h.b16 %v1397
    %v2881 = vunpack.c.l.b16 %v1398
    %v2882 = vunpack.c.h.b16 %v1398
    %v2883 = vunpack.c.l.b16 %v1399
    %v2884 = vunpack.c.h.b16 %v1399
    %v2885 = vunpack.c.l.b16 %v1400
    %v2886 = vunpack.c.h.b16 %v1400
    %v2887 = vunpack.c.l.b16 %v1401
    %v2888 = vunpack.c.h.b16 %v1401
    %v2889 = vunpack.c.l.b16 %v1402
    %v2890 = vunpack.c.h.b16 %v1402
    %v2891 = vunpack.c.l.b16 %v1403
    %v2892 = vunpack.c.h.b16 %v1403
    %v2893 = vunpack.c.l.b16 %v1404
    %v2894 = vunpack.c.h.b16 %v1404
    %v2895 = vunpack.c.l.b16 %v1405
    %v2896 = vunpack.c.h.b16 %v1405
    %v2897 = vunpack.c.l.b16 %v1406
    %v2898 = vunpack.c.h.b16 %v1406
    %v2899 = vunpack.c.l.b16 %v1407
    %v2900 = vunpack.c.h.b16 %v1407
    %v2901 = vunpack.c.l.b16 %v1408
    %v2902 = vunpack.c.h.b16 %v1408
    %v2903 = vunpack.c.l.b16 %v1409
    %v2904 = vunpack.c.h.b16 %v1409
    %v2905 = vunpack.c.l.b16 %v1410
    %v2906 = vunpack.c.h.b16 %v1410
    %v2907 = vunpack.c.l.b16 %v1411
    %v2908 = vunpack.c.h.b16 %v1411
    %v2909 = vunpack.c.l.b16 %v1412
    %v2910 = vunpack.c.h.b16 %v1412
    %v2911 = vunpack.c.l.b16 %v1413
    %v2912 = vunpack.c.h.b16 %v1413
    %v2913 = vunpack.c.l.b16 %v1414
    %v2914 = vunpack.c.h.b16 %v1414
    %v2915 = vunpack.c.l.b16 %v1415
    %v2916 = vunpack.c.h.b16 %v1415
    %v2917 = vunpack.c.l.b16 %v1416
    %v2918 = vunpack.c.h.b16 %v1416
    %v2919 = vunpack.c.l.b16 %v1417
    %v2920 = vunpack.c.h.b16 %v1417
    %v2921 = vunpack.c.l.b16 %v1418
    %v2922 = vunpack.c.h.b16 %v1418
    %v2923 = vunpack.c.l.b16 %v1419
    %v2924 = vunpack.c.h.b16 %v1419
    %v2925 = vunpack.c.l.b16 %v1420
    %v2926 = vunpack.c.h.b16 %v1420
    %v2927 = vunpack.c.l.b16 %v1421
    %v2928 = vunpack.c.h.b16 %v1421
    %v2929 = vunpack.c.l.b16 %v1422
    %v2930 = vunpack.c.h.b16 %v1422
    %v2931 = vunpack.c.l.b16 %v1423
    %v2932 = vunpack.c.h.b16 %v1423
    %v2933 = vunpack.c.l.b16 %v1424
    %v2934 = vunpack.c.h.b16 %v1424
    %v2935 = vunpack.c.l.b16 %v1425
    %v2936 = vunpack.c.h.b16 %v1425
    %v2937 = vunpack.c.l.b16 %v1426
    %v2938 = vunpack.c.h.b16 %v1426
    %v2939 = vunpack.c.l.b16 %v1427
    %v2940 = vunpack.c.h.b16 %v1427
    %v2941 = vunpack.c.l.b16 %v1428
    %v2942 = vunpack.c.h.b16 %v1428
    %v2943 = vunpack.c.l.b16 %v1429
    %v2944 = vunpack.c.h.b16 %v1429
    %v2945 = vunpack.c.l.b16 %v1430
    %v2946 = vunpack.c.h.b16 %v1430
    %v2947 = vunpack.c.l.b16 %v1431
    %v2948 = vunpack.c.h.b16 %v1431
    %v2949 = vunpack.c.l.b16 %v1432
    %v2950 = vunpack.c.h.b16 %v1432
    %v2951 = vunpack.c.l.b16 %v1433
    %v2952 = vunpack.c.h.b16 %v1433
    %v2953 = vunpack.c.l.b16 %v1434
    %v2954 = vunpack.c.h.b16 %v1434
    %v2955 = vunpack.c.l.b16 %v1435
    %v2956 = vunpack.c.h.b16 %v1435
    %v2957 = vunpack.c.l.b16 %v1436
    %v2958 = vunpack.c.h.b16 %v1436
    %v2959 = vunpack.c.l.b16 %v1437
    %v2960 = vunpack.c.h.b16 %v1437
    %v2961 = vunpack.c.l.b16 %v1438
    %v2962 = vunpack.c.h.b16 %v1438
    %v2963 = vunpack.c.l.b16 %v1439
    %v2964 = vunpack.c.h.b16 %v1439
    %v2965 = vunpack.c.l.b16 %v1440
    %v2966 = vunpack.c.h.b16 %v1440
    %v2967 = vunpack.c.l.b16 %v1441
    %v2968 = vunpack.c.h.b16 %v1441
    %v2969 = vunpack.c.l.b16 %v1442
    %v2970 = vunpack.c.h.b16 %v1442
    %v2971 = vunpack.c.l.b16 %v1443
    %v2972 = vunpack.c.h.b16 %v1443
    %v2973 = vunpack.c.l.b16 %v1444
    %v2974 = vunpack.c.h.b16 %v1444
    %v2975 = vunpack.c.l.b16 %v1445
    %v2976 = vunpack.c.h.b16 %v1445
    %v2977 = vunpack.c.l.b16 %v1446
    %v2978 = vunpack.c.h.b16 %v1446
    %v2979 = vunpack.c.l.b16 %v1447
    %v2980 = vunpack.c.h.b16 %v1447
    %v2981 = vunpack.c.l.b16 %v1448
    %v2982 = vunpack.c.h.b16 %v1448
    %v2983 = vunpack.c.l.b16 %v1449
    %v2984 = vunpack.c.h.b16 %v1449
    %v2985 = vunpack.c.l.b16 %v1450
    %v2986 = vunpack.c.h.b16 %v1450
    %v2987 = vunpack.c.l.b16 %v1451
    %v2988 = vunpack.c.h.b16 %v1451
    %v2989 = vunpack.c.l.b16 %v1452
    %v2990 = vunpack.c.h.b16 %v1452
    %v2991 = vunpack.c.l.b16 %v1453
    %v2992 = vunpack.c.h.b16 %v1453
    %v2993 = vunpack.c.l.b16 %v1454
    %v2994 = vunpack.c.h.b16 %v1454
    %v2995 = vunpack.c.l.b16 %v1455
    %v2996 = vunpack.c.h.b16 %v1455
    %v2997 = vunpack.c.l.b16 %v1456
    %v2998 = vunpack.c.h.b16 %v1456
    %v2999 = vunpack.c.l.b16 %v1457
    %v3000 = vunpack.c.h.b16 %v1457
    %v3001 = vunpack.c.l.b16 %v1458
    %v3002 = vunpack.c.h.b16 %v1458
    %v3003 = vunpack.c.l.b16 %v1459
    %v3004 = vunpack.c.h.b16 %v1459
    %v3005 = vunpack.c.l.b16 %v1460
    %v3006 = vunpack.c.h.b16 %v1460
    %v3007 = vunpack.c.l.b16 %v1461
    %v3008 = vunpack.c.h.b16 %v1461
    %v3009 = vpack.c.b16 %v2247, %v2241
    %v3010 = vpack.c.b16 %v2248, %v2242
    %v3011 = vpack.c.b16 %v2249, %v2243
    %v3012 = vpack.c.b16 %v2250, %v2244
    %v3013 = vpack.c.b16 %v2251, %v2245
    %v3014 = vpack.c.b16 %v2252, %v2246
    %v3015 = vpack.c.b16 %v2259, %v2253
    %v3016 = vpack.c.b16 %v2260, %v2254
    %v3017 = vpack.c.b16 %v2261, %v2255
    %v3018 = vpack.c.b16 %v2262, %v2256
    %v3019 = vpack.c.b16 %v2263, %v2257
    %v3020 = vpack.c.b16 %v2264, %v2258
    %v3021 = vpack.c.b16 %v2271, %v2265
    %v3022 = vpack.c.b16 %v2272, %v2266
    %v3023 = vpack.c.b16 %v2273, %v2267
    %v3024 = vpack.c.b16 %v2274, %v2268
    %v3025 = vpack.c.b16 %v2275, %v2269
    %v3026 = vpack.c.b16 %v2276, %v2270
    %v3027 = vpack.c.b16 %v2283, %v2277
    %v3028 = vpack.c.b16 %v2284, %v2278
    %v3029 = vpack.c.b16 %v2285, %v2279
    %v3030 = vpack.c.b16 %v2286, %v2280
    %v3031 = vpack.c.b16 %v2287, %v2281
    %v3032 = vpack.c.b16 %v2288, %v2282
    %v3033 = vpack.c.b16 %v2295, %v2289
    %v3034 = vpack.c.b16 %v2296, %v2290
    %v3035 = vpack.c.b16 %v2297, %v2291
    %v3036 = vpack.c.b16 %v2298, %v2292
    %v3037 = vpack.c.b16 %v2299, %v2293
    %v3038 = vpack.c.b16 %v2300, %v2294
    %v3039 = vpack.c.b16 %v2307, %v2301
    %v3040 = vpack.c.b16 %v2308, %v2302
    %v3041 = vpack.c.b16 %v2309, %v2303
    %v3042 = vpack.c.b16 %v2310, %v2304
    %v3043 = vpack.c.b16 %v2311, %v2305
    %v3044 = vpack.c.b16 %v2312, %v2306
    %v3045 = vpack.c.b16 %v2319, %v2313
    %v3046 = vpack.c.b16 %v2320, %v2314
    %v3047 = vpack.c.b16 %v2321, %v2315
    %v3048 = vpack.c.b16 %v2322, %v2316
    %v3049 = vpack.c.b16 %v2323, %v2317
    %v3050 = vpack.c.b16 %v2324, %v2318
    %v3051 = vpack.c.b16 %v2331, %v2325
    %v3052 = vpack.c.b16 %v2332, %v2326
    %v3053 = vpack.c.b16 %v2333, %v2327
    %v3054 = vpack.c.b16 %v2334, %v2328
    %v3055 = vpack.c.b16 %v2335, %v2329
    %v3056 = vpack.c.b16 %v2336, %v2330
    %v3057 = vpack.c.b16 %v2343, %v2337
    %v3058 = vpack.c.b16 %v2344, %v2338
    %v3059 = vpack.c.b16 %v2345, %v2339
    %v3060 = vpack.c.b16 %v2346, %v2340
    %v3061 = vpack.c.b16 %v2347, %v2341
    %v3062 = vpack.c.b16 %v2348, %v2342
    %v3063 = vpack.c.b16 %v2355, %v2349
    %v3064 = vpack.c.b16 %v2356, %v2350
    %v3065 = vpack.c.b16 %v2357, %v2351
    %v3066 = vpack.c.b16 %v2358, %v2352
    %v3067 = vpack.c.b16 %v2359, %v2353
    %v3068 = vpack.c.b16 %v2360, %v2354
    %v3069 = vpack.c.b16 %v2367, %v2361
    %v3070 = vpack.c.b16 %v2368, %v2362
    %v3071 = vpack.c.b16 %v2369, %v2363
    %v3072 = vpack.c.b16 %v2370, %v2364
    %v3073 = vpack.c.b16 %v2371, %v2365
    %v3074 = vpack.c.b16 %v2372, %v2366
    %v3075 = vpack.c.b16 %v2379, %v2373
    %v3076 = vpack.c.b16 %v2380, %v2374
    %v3077 = vpack.c.b16 %v2381, %v2375
    %v3078 = vpack.c.b16 %v2382, %v2376
    %v3079 = vpack.c.b16 %v2383, %v2377
    %v3080 = vpack.c.b16 %v2384, %v2378
    %v3081 = vpack.c.b16 %v2391, %v2385
    %v3082 = vpack.c.b16 %v2392, %v2386
    %v3083 = vpack.c.b16 %v2393, %v2387
    %v3084 = vpack.c.b16 %v2394, %v2388
    %v3085 = vpack.c.b16 %v2395, %v2389
    %v3086 = vpack.c.b16 %v2396, %v2390
    %v3087 = vpack.c.b16 %v2403, %v2397
    %v3088 = vpack.c.b16 %v2404, %v2398
    %v3089 = vpack.c.b16 %v2405, %v2399
    %v3090 = vpack.c.b16 %v2406, %v2400
    %v3091 = vpack.c.b16 %v2407, %v2401
    %v3092 = vpack.c.b16 %v2408, %v2402
    %v3093 = vpack.c.b16 %v2415, %v2409
    %v3094 = vpack.c.b16 %v2416, %v2410
    %v3095 = vpack.c.b16 %v2417, %v2411
    %v3096 = vpack.c.b16 %v2418, %v2412
    %v3097 = vpack.c.b16 %v2419, %v2413
    %v3098 = vpack.c.b16 %v2420, %v2414
    %v3099 = vpack.c.b16 %v2427, %v2421
    %v3100 = vpack.c.b16 %v2428, %v2422
    %v3101 = vpack.c.b16 %v2429, %v2423
    %v3102 = vpack.c.b16 %v2430, %v2424
    %v3103 = vpack.c.b16 %v2431, %v2425
    %v3104 = vpack.c.b16 %v2432, %v2426
    %v3105 = vpack.c.b16 %v2439, %v2433
    %v3106 = vpack.c.b16 %v2440, %v2434
    %v3107 = vpack.c.b16 %v2441, %v2435
    %v3108 = vpack.c.b16 %v2442, %v2436
    %v3109 = vpack.c.b16 %v2443, %v2437
    %v3110 = vpack.c.b16 %v2444, %v2438
    %v3111 = vpack.c.b16 %v2451, %v2445
    %v3112 = vpack.c.b16 %v2452, %v2446
    %v3113 = vpack.c.b16 %v2453, %v2447
    %v3114 = vpack.c.b16 %v2454, %v2448
    %v3115 = vpack.c.b16 %v2455, %v2449
    %v3116 = vpack.c.b16 %v2456, %v2450
    %v3117 = vpack.c.b16 %v2463, %v2457
    %v3118 = vpack.c.b16 %v2464, %v2458
    %v3119 = vpack.c.b16 %v2465, %v2459
    %v3120 = vpack.c.b16 %v2466, %v2460
    %v3121 = vpack.c.b16 %v2467, %v2461
    %v3122 = vpack.c.b16 %v2468, %v2462
    %v3123 = vpack.c.b16 %v2475, %v2469
    %v3124 = vpack.c.b16 %v2476, %v2470
    %v3125 = vpack.c.b16 %v2477, %v2471
    %v3126 = vpack.c.b16 %v2478, %v2472
    %v3127 = vpack.c.b16 %v2479, %v2473
    %v3128 = vpack.c.b16 %v2480, %v2474
    %v3129 = vpack.c.b16 %v2487, %v2481
    %v3130 = vpack.c.b16 %v2488, %v2482
    %v3131 = vpack.c.b16 %v2489, %v2483
    %v3132 = vpack.c.b16 %v2490, %v2484
    %v3133 = vpack.c.b16 %v2491, %v2485
    %v3134 = vpack.c.b16 %v2492, %v2486
    %v3135 = vpack.c.b16 %v2499, %v2493
    %v3136 = vpack.c.b16 %v2500, %v2494
    %v3137 = vpack.c.b16 %v2501, %v2495
    %v3138 = vpack.c.b16 %v2502, %v2496
    %v3139 = vpack.c.b16 %v2503, %v2497
    %v3140 = vpack.c.b16 %v2504, %v2498
    %v3141 = vpack.c.b16 %v2511, %v2505
    %v3142 = vpack.c.b16 %v2512, %v2506
    %v3143 = vpack.c.b16 %v2513, %v2507
    %v3144 = vpack.c.b16 %v2514, %v2508
    %v3145 = vpack.c.b16 %v2515, %v2509
    %v3146 = vpack.c.b16 %v2516, %v2510
    %v3147 = vpack.c.b16 %v2523, %v2517
    %v3148 = vpack.c.b16 %v2524, %v2518
    %v3149 = vpack.c.b16 %v2525, %v2519
    %v3150 = vpack.c.b16 %v2526, %v2520
    %v3151 = vpack.c.b16 %v2527, %v2521
    %v3152 = vpack.c.b16 %v2528, %v2522
    %v3153 = vpack.c.b16 %v2535, %v2529
    %v3154 = vpack.c.b16 %v2536, %v2530
    %v3155 = vpack.c.b16 %v2537, %v2531
    %v3156 = vpack.c.b16 %v2538, %v2532
    %v3157 = vpack.c.b16 %v2539, %v2533
    %v3158 = vpack.c.b16 %v2540, %v2534
    %v3159 = vpack.c.b16 %v2547, %v2541
    %v3160 = vpack.c.b16 %v2548, %v2542
    %v3161 = vpack.c.b16 %v2549, %v2543
    %v3162 = vpack.c.b16 %v2550, %v2544
    %v3163 = vpack.c.b16 %v2551, %v2545
    %v3164 = vpack.c.b16 %v2552, %v2546
    %v3165 = vpack.c.b16 %v2559, %v2553
    %v3166 = vpack.c.b16 %v2560, %v2554
    %v3167 = vpack.c.b16 %v2561, %v2555
    %v3168 = vpack.c.b16 %v2562, %v2556
    %v3169 = vpack.c.b16 %v2563, %v2557
    %v3170 = vpack.c.b16 %v2564, %v2558
    %v3171 = vpack.c.b16 %v2571, %v2565
    %v3172 = vpack.c.b16 %v2572, %v2566
    %v3173 = vpack.c.b16 %v2573, %v2567
    %v3174 = vpack.c.b16 %v2574, %v2568
    %v3175 = vpack.c.b16 %v2575, %v2569
    %v3176 = vpack.c.b16 %v2576, %v2570
    %v3177 = vpack.c.b16 %v2583, %v2577
    %v3178 = vpack.c.b16 %v2584, %v2578
    %v3179 = vpack.c.b16 %v2585, %v2579
    %v3180 = vpack.c.b16 %v2586, %v2580
    %v3181 = vpack.c.b16 %v2587, %v2581
    %v3182 = vpack.c.b16 %v2588, %v2582
    %v3183 = vpack.c.b16 %v2595, %v2589
    %v3184 = vpack.c.b16 %v2596, %v2590
    %v3185 = vpack.c.b16 %v2597, %v2591
    %v3186 = vpack.c.b16 %v2598, %v2592
    %v3187 = vpack.c.b16 %v2599, %v2593
    %v3188 = vpack.c.b16 %v2600, %v2594
    %v3189 = vpack.c.b16 %v2607, %v2601
    %v3190 = vpack.c.b16 %v2608, %v2602
    %v3191 = vpack.c.b16 %v2609, %v2603
    %v3192 = vpack.c.b16 %v2610, %v2604
    %v3193 = vpack.c.b16 %v2611, %v2605
    %v3194 = vpack.c.b16 %v2612, %v2606
    %v3195 = vpack.c.b16 %v2619, %v2613
    %v3196 = vpack.c.b16 %v2620, %v2614
    %v3197 = vpack.c.b16 %v2621, %v2615
    %v3198 = vpack.c.b16 %v2622, %v2616
    %v3199 = vpack.c.b16 %v2623, %v2617
    %v3200 = vpack.c.b16 %v2624, %v2618
    %v3201 = vpack.c.b16 %v2631, %v2625
    %v3202 = vpack.c.b16 %v2632, %v2626
    %v3203 = vpack.c.b16 %v2633, %v2627
    %v3204 = vpack.c.b16 %v2634, %v2628
    %v3205 = vpack.c.b16 %v2635, %v2629
    %v3206 = vpack.c.b16 %v2636, %v2630
    %v3207 = vpack.c.b16 %v2643, %v2637
    %v3208 = vpack.c.b16 %v2644, %v2638
    %v3209 = vpack.c.b16 %v2645, %v2639
    %v3210 = vpack.c.b16 %v2646, %v2640
    %v3211 = vpack.c.b16 %v2647, %v2641
    %v3212 = vpack.c.b16 %v2648, %v2642
    %v3213 = vpack.c.b16 %v2655, %v2649
    %v3214 = vpack.c.b16 %v2656, %v2650
    %v3215 = vpack.c.b16 %v2657, %v2651
    %v3216 = vpack.c.b16 %v2658, %v2652
    %v3217 = vpack.c.b16 %v2659, %v2653
    %v3218 = vpack.c.b16 %v2660, %v2654
    %v3219 = vpack.c.b16 %v2667, %v2661
    %v3220 = vpack.c.b16 %v2668, %v2662
    %v3221 = vpack.c.b16 %v2669, %v2663
    %v3222 = vpack.c.b16 %v2670, %v2664
    %v3223 = vpack.c.b16 %v2671, %v2665
    %v3224 = vpack.c.b16 %v2672, %v2666
    %v3225 = vpack.c.b16 %v2679, %v2673
    %v3226 = vpack.c.b16 %v2680, %v2674
    %v3227 = vpack.c.b16 %v2681, %v2675
    %v3228 = vpack.c.b16 %v2682, %v2676
    %v3229 = vpack.c.b16 %v2683, %v2677
    %v3230 = vpack.c.b16 %v2684, %v2678
    %v3231 = vpack.c.b16 %v2691, %v2685
    %v3232 = vpack.c.b16 %v2692, %v2686
    %v3233 = vpack.c.b16 %v2693, %v2687
    %v3234 = vpack.c.b16 %v2694, %v2688
    %v3235 = vpack.c.b16 %v2695, %v2689
    %v3236 = vpack.c.b16 %v2696, %v2690
    %v3237 = vpack.c.b16 %v2703, %v2697
    %v3238 = vpack.c.b16 %v2704, %v2698
    %v3239 = vpack.c.b16 %v2705, %v2699
    %v3240 = vpack.c.b16 %v2706, %v2700
    %v3241 = vpack.c.b16 %v2707, %v2701
    %v3242 = vpack.c.b16 %v2708, %v2702
    %v3243 = vpack.c.b16 %v2715, %v2709
    %v3244 = vpack.c.b16 %v2716, %v2710
    %v3245 = vpack.c.b16 %v2717, %v2711
    %v3246 = vpack.c.b16 %v2718, %v2712
    %v3247 = vpack.c.b16 %v2719, %v2713
    %v3248 = vpack.c.b16 %v2720, %v2714
    %v3249 = vpack.c.b16 %v2727, %v2721
    %v3250 = vpack.c.b16 %v2728, %v2722
    %v3251 = vpack.c.b16 %v2729, %v2723
    %v3252 = vpack.c.b16 %v2730, %v2724
    %v3253 = vpack.c.b16 %v2731, %v2725
    %v3254 = vpack.c.b16 %v2732, %v2726
    %v3255 = vpack.c.b16 %v2739, %v2733
    %v3256 = vpack.c.b16 %v2740, %v2734
    %v3257 = vpack.c.b16 %v2741, %v2735
    %v3258 = vpack.c.b16 %v2742, %v2736
    %v3259 = vpack.c.b16 %v2743, %v2737
    %v3260 = vpack.c.b16 %v2744, %v2738
    %v3261 = vpack.c.b16 %v2751, %v2745
    %v3262 = vpack.c.b16 %v2752, %v2746
    %v3263 = vpack.c.b16 %v2753, %v2747
    %v3264 = vpack.c.b16 %v2754, %v2748
    %v3265 = vpack.c.b16 %v2755, %v2749
    %v3266 = vpack.c.b16 %v2756, %v2750
    %v3267 = vpack.c.b16 %v2763, %v2757
    %v3268 = vpack.c.b16 %v2764, %v2758
    %v3269 = vpack.c.b16 %v2765, %v2759
    %v3270 = vpack.c.b16 %v2766, %v2760
    %v3271 = vpack.c.b16 %v2767, %v2761
    %v3272 = vpack.c.b16 %v2768, %v2762
    %v3273 = vpack.c.b16 %v2775, %v2769
    %v3274 = vpack.c.b16 %v2776, %v2770
    %v3275 = vpack.c.b16 %v2777, %v2771
    %v3276 = vpack.c.b16 %v2778, %v2772
    %v3277 = vpack.c.b16 %v2779, %v2773
    %v3278 = vpack.c.b16 %v2780, %v2774
    %v3279 = vpack.c.b16 %v2787, %v2781
    %v3280 = vpack.c.b16 %v2788, %v2782
    %v3281 = vpack.c.b16 %v2789, %v2783
    %v3282 = vpack.c.b16 %v2790, %v2784
    %v3283 = vpack.c.b16 %v2791, %v2785
    %v3284 = vpack.c.b16 %v2792, %v2786
    %v3285 = vpack.c.b16 %v2799, %v2793
    %v3286 = vpack.c.b16 %v2800, %v2794
    %v3287 = vpack.c.b16 %v2801, %v2795
    %v3288 = vpack.c.b16 %v2802, %v2796
    %v3289 = vpack.c.b16 %v2803, %v2797
    %v3290 = vpack.c.b16 %v2804, %v2798
    %v3291 = vpack.c.b16 %v2811, %v2805
    %v3292 = vpack.c.b16 %v2812, %v2806
    %v3293 = vpack.c.b16 %v2813, %v2807
    %v3294 = vpack.c.b16 %v2814, %v2808
    %v3295 = vpack.c.b16 %v2815, %v2809
    %v3296 = vpack.c.b16 %v2816, %v2810
    %v3297 = vpack.c.b16 %v2823, %v2817
    %v3298 = vpack.c.b16 %v2824, %v2818
    %v3299 = vpack.c.b16 %v2825, %v2819
    %v3300 = vpack.c.b16 %v2826, %v2820
    %v3301 = vpack.c.b16 %v2827, %v2821
    %v3302 = vpack.c.b16 %v2828, %v2822
    %v3303 = vpack.c.b16 %v2835, %v2829
    %v3304 = vpack.c.b16 %v2836, %v2830
    %v3305 = vpack.c.b16 %v2837, %v2831
    %v3306 = vpack.c.b16 %v2838, %v2832
    %v3307 = vpack.c.b16 %v2839, %v2833
    %v3308 = vpack.c.b16 %v2840, %v2834
    %v3309 = vpack.c.b16 %v2847, %v2841
    %v3310 = vpack.c.b16 %v2848, %v2842
    %v3311 = vpack.c.b16 %v2849, %v2843
    %v3312 = vpack.c.b16 %v2850, %v2844
    %v3313 = vpack.c.b16 %v2851, %v2845
    %v3314 = vpack.c.b16 %v2852, %v2846
    %v3315 = vpack.c.b16 %v2859, %v2853
    %v3316 = vpack.c.b16 %v2860, %v2854
    %v3317 = vpack.c.b16 %v2861, %v2855
    %v3318 = vpack.c.b16 %v2862, %v2856
    %v3319 = vpack.c.b16 %v2863, %v2857
    %v3320 = vpack.c.b16 %v2864, %v2858
    %v3321 = vpack.c.b16 %v2871, %v2865
    %v3322 = vpack.c.b16 %v2872, %v2866
    %v3323 = vpack.c.b16 %v2873, %v2867
    %v3324 = vpack.c.b16 %v2874, %v2868
    %v3325 = vpack.c.b16 %v2875, %v2869
    %v3326 = vpack.c.b16 %v2876, %v2870
    %v3327 = vpack.c.b16 %v2883, %v2877
    %v3328 = vpack.c.b16 %v2884, %v2878
    %v3329 = vpack.c.b16 %v2885, %v2879
    %v3330 = vpack.c.b16 %v2886, %v2880
    %v3331 = vpack.c.b16 %v2887, %v2881
    %v3332 = vpack.c.b16 %v2888, %v2882
    %v3333 = vpack.c.b16 %v2895, %v2889
    %v3334 = vpack.c.b16 %v2896, %v2890
    %v3335 = vpack.c.b16 %v2897, %v2891
    %v3336 = vpack.c.b16 %v2898, %v2892
    %v3337 = vpack.c.b16 %v2899, %v2893
    %v3338 = vpack.c.b16 %v2900, %v2894
    %v3339 = vpack.c.b16 %v2907, %v2901
    %v3340 = vpack.c.b16 %v2908, %v2902
    %v3341 = vpack.c.b16 %v2909, %v2903
    %v3342 = vpack.c.b16 %v2910, %v2904
    %v3343 = vpack.c.b16 %v2911, %v2905
    %v3344 = vpack.c.b16 %v2912, %v2906
    %v3345 = vpack.c.b16 %v2919, %v2913
    %v3346 = vpack.c.b16 %v2920, %v2914
    %v3347 = vpack.c.b16 %v2921, %v2915
    %v3348 = vpack.c.b16 %v2922, %v2916
    %v3349 = vpack.c.b16 %v2923, %v2917
    %v3350 = vpack.c.b16 %v2924, %v2918
    %v3351 = vpack.c.b16 %v2931, %v2925
    %v3352 = vpack.c.b16 %v2932, %v2926
    %v3353 = vpack.c.b16 %v2933, %v2927
    %v3354 = vpack.c.b16 %v2934, %v2928
    %v3355 = vpack.c.b16 %v2935, %v2929
    %v3356 = vpack.c.b16 %v2936, %v2930
    %v3357 = vpack.c.b16 %v2943, %v2937
    %v3358 = vpack.c.b16 %v2944, %v2938
    %v3359 = vpack.c.b16 %v2945, %v2939
    %v3360 = vpack.c.b16 %v2946, %v2940
    %v3361 = vpack.c.b16 %v2947, %v2941
    %v3362 = vpack.c.b16 %v2948, %v2942
    %v3363 = vpack.c.b16 %v2955, %v2949
    %v3364 = vpack.c.b16 %v2956, %v2950
    %v3365 = vpack.c.b16 %v2957, %v2951
    %v3366 = vpack.c.b16 %v2958, %v2952
    %v3367 = vpack.c.b16 %v2959, %v2953
    %v3368 = vpack.c.b16 %v2960, %v2954
    %v3369 = vpack.c.b16 %v2967, %v2961
    %v3370 = vpack.c.b16 %v2968, %v2962
    %v3371 = vpack.c.b16 %v2969, %v2963
    %v3372 = vpack.c.b16 %v2970, %v2964
    %v3373 = vpack.c.b16 %v2971, %v2965
    %v3374 = vpack.c.b16 %v2972, %v2966
    %v3375 = vpack.c.b16 %v2979, %v2973
    %v3376 = vpack.c.b16 %v2980, %v2974
    %v3377 = vpack.c.b16 %v2981, %v2975
    %v3378 = vpack.c.b16 %v2982, %v2976
    %v3379 = vpack.c.b16 %v2983, %v2977
    %v3380 = vpack.c.b16 %v2984, %v2978
    %v3381 = vpack.c.b16 %v2991, %v2985
    %v3382 = vpack.c.b16 %v2992, %v2986
    %v3383 = vpack.c.b16 %v2993, %v2987
    %v3384 = vpack.c.b16 %v2994, %v2988
    %v3385 = vpack.c.b16 %v2995, %v2989
    %v3386 = vpack.c.b16 %v2996, %v2990
    %v3387 = vpack.c.b16 %v3003, %v2997
    %v3388 = vpack.c.b16 %v3004, %v2998
    %v3389 = vpack.c.b16 %v3005, %v2999
    %v3390 = vpack.c.b16 %v3006, %v3000
    %v3391 = vpack.c.b16 %v3007, %v3001
    %v3392 = vpack.c.b16 %v3008, %v3002
    %3777 = vmatpush.bf16.msra.mxu0 %v3051
    %3778 = vmatpush.bf16.msra.mxu0 %v3045
    %3779 = vmatpush.bf16.msra.mxu0 %v3039
    %3780 = vmatpush.bf16.msra.mxu0 %v3033
    %3781 = vmatpush.bf16.msra.mxu0 %v3027
    %3782 = vmatpush.bf16.msra.mxu0 %v3021
    %3783 = vmatpush.bf16.msra.mxu0 %v3015
    %3784 = vmatpush.bf16.msra.mxu0 %v3009
    %3785 = vmatmul.bf16.gmra.mxu0 %v1841
    %v3786 = vpop.f32.mrf.mxu0
    %v3787 = vadd.f32 %v1761, %v3786
    %v3788 = vpop.f32.mrf.mxu0
    %3789 = vdwg.mxu0
    %3790 = vmatpush.bf16.msra.mxu0 %v3099
    %3791 = vmatpush.bf16.msra.mxu0 %v3093
    %3792 = vmatpush.bf16.msra.mxu0 %v3087
    %3793 = vmatpush.bf16.msra.mxu0 %v3081
    %3794 = vmatpush.bf16.msra.mxu0 %v3075
    %3795 = vmatpush.bf16.msra.mxu0 %v3069
    %3796 = vmatpush.bf16.msra.mxu0 %v3063
    %3797 = vmatpush.bf16.msra.mxu0 %v3057
    %3798 = vmatmul.bf16.gmra.mxu0 %v1842
    %v3799 = vpop.f32.mrf.mxu0
    %v3800 = vadd.f32 %v3787, %v3799
    %v3801 = vpop.f32.mrf.mxu0
    %3802 = vdwg.mxu0
    %3803 = vmatpush.bf16.msra.mxu0 %v3147
    %3804 = vmatpush.bf16.msra.mxu0 %v3141
    %3805 = vmatpush.bf16.msra.mxu0 %v3135
    %3806 = vmatpush.bf16.msra.mxu0 %v3129
    %3807 = vmatpush.bf16.msra.mxu0 %v3123
    %3808 = vmatpush.bf16.msra.mxu0 %v3117
    %3809 = vmatpush.bf16.msra.mxu0 %v3111
    %3810 = vmatpush.bf16.msra.mxu0 %v3105
    %3811 = vmatmul.bf16.gmra.mxu0 %v1843
    %v3812 = vpop.f32.mrf.mxu0
    %v3813 = vadd.f32 %v3800, %v3812
    %v3814 = vpop.f32.mrf.mxu0
    %3815 = vdwg.mxu0
    %3816 = vmatpush.bf16.msra.mxu0 %v3195
    %3817 = vmatpush.bf16.msra.mxu0 %v3189
    %3818 = vmatpush.bf16.msra.mxu0 %v3183
    %3819 = vmatpush.bf16.msra.mxu0 %v3177
    %3820 = vmatpush.bf16.msra.mxu0 %v3171
    %3821 = vmatpush.bf16.msra.mxu0 %v3165
    %3822 = vmatpush.bf16.msra.mxu0 %v3159
    %3823 = vmatpush.bf16.msra.mxu0 %v3153
    %3824 = vmatmul.bf16.gmra.mxu0 %v1844
    %v3825 = vpop.f32.mrf.mxu0
    %v3826 = vadd.f32 %v3813, %v3825
    %v3827 = vpop.f32.mrf.mxu0
    %3828 = vdwg.mxu0
    %3829 = vmatpush.bf16.msra.mxu0 %v3243
    %3830 = vmatpush.bf16.msra.mxu0 %v3237
    %3831 = vmatpush.bf16.msra.mxu0 %v3231
    %3832 = vmatpush.bf16.msra.mxu0 %v3225
    %3833 = vmatpush.bf16.msra.mxu0 %v3219
    %3834 = vmatpush.bf16.msra.mxu0 %v3213
    %3835 = vmatpush.bf16.msra.mxu0 %v3207
    %3836 = vmatpush.bf16.msra.mxu0 %v3201
    %3837 = vmatmul.bf16.gmra.mxu0 %v1845
    %v3838 = vpop.f32.mrf.mxu0
    %v3839 = vadd.f32 %v3826, %v3838
    %v3840 = vpop.f32.mrf.mxu0
    %3841 = vdwg.mxu0
    %3842 = vmatpush.bf16.msra.mxu0 %v3291
    %3843 = vmatpush.bf16.msra.mxu0 %v3285
    %3844 = vmatpush.bf16.msra.mxu0 %v3279
    %3845 = vmatpush.bf16.msra.mxu0 %v3273
    %3846 = vmatpush.bf16.msra.mxu0 %v3267
    %3847 = vmatpush.bf16.msra.mxu0 %v3261
    %3848 = vmatpush.bf16.msra.mxu0 %v3255
    %3849 = vmatpush.bf16.msra.mxu0 %v3249
    %3850 = vmatmul.bf16.gmra.mxu0 %v1846
    %v3851 = vpop.f32.mrf.mxu0
    %v3852 = vadd.f32 %v3839, %v3851
    %v3853 = vpop.f32.mrf.mxu0
    %3854 = vdwg.mxu0
    %3855 = vmatpush.bf16.msra.mxu0 %v3339
    %3856 = vmatpush.bf16.msra.mxu0 %v3333
    %3857 = vmatpush.bf16.msra.mxu0 %v3327
    %3858 = vmatpush.bf16.msra.mxu0 %v3321
    %3859 = vmatpush.bf16.msra.mxu0 %v3315
    %3860 = vmatpush.bf16.msra.mxu0 %v3309
    %3861 = vmatpush.bf16.msra.mxu0 %v3303
    %3862 = vmatpush.bf16.msra.mxu0 %v3297
    %3863 = vmatmul.bf16.gmra.mxu0 %v1847
    %v3864 = vpop.f32.mrf.mxu0
    %v3865 = vadd.f32 %v3852, %v3864
    %v3866 = vpop.f32.mrf.mxu0
    %3867 = vdwg.mxu0
    %3868 = vmatpush.bf16.msra.mxu0 %v3387
    %3869 = vmatpush.bf16.msra.mxu0 %v3381
    %3870 = vmatpush.bf16.msra.mxu0 %v3375
    %3871 = vmatpush.bf16.msra.mxu0 %v3369
    %3872 = vmatpush.bf16.msra.mxu0 %v3363
    %3873 = vmatpush.bf16.msra.mxu0 %v3357
    %3874 = vmatpush.bf16.msra.mxu0 %v3351
    %3875 = vmatpush.bf16.msra.mxu0 %v3345
    %3876 = vmatmul.bf16.gmra.mxu0 %v1848
    %v3877 = vpop.f32.mrf.mxu0
    %v3878 = vadd.f32 %v3865, %v3877
    %v3879 = vpop.f32.mrf.mxu0
    %3880 = vdwg.mxu0
    %3881 = vmatpush.bf16.msra.mxu0 %v3052
    %3882 = vmatpush.bf16.msra.mxu0 %v3046
    %3883 = vmatpush.bf16.msra.mxu0 %v3040
    %3884 = vmatpush.bf16.msra.mxu0 %v3034
    %3885 = vmatpush.bf16.msra.mxu0 %v3028
    %3886 = vmatpush.bf16.msra.mxu0 %v3022
    %3887 = vmatpush.bf16.msra.mxu0 %v3016
    %3888 = vmatpush.bf16.msra.mxu0 %v3010
    %3889 = vmatmul.bf16.gmra.mxu0 %v1841
    %v3890 = vpop.f32.mrf.mxu0
    %v3891 = vadd.f32 %v1774, %v3890
    %v3892 = vpop.f32.mrf.mxu0
    %3893 = vdwg.mxu0
    %3894 = vmatpush.bf16.msra.mxu0 %v3100
    %3895 = vmatpush.bf16.msra.mxu0 %v3094
    %3896 = vmatpush.bf16.msra.mxu0 %v3088
    %3897 = vmatpush.bf16.msra.mxu0 %v3082
    %3898 = vmatpush.bf16.msra.mxu0 %v3076
    %3899 = vmatpush.bf16.msra.mxu0 %v3070
    %3900 = vmatpush.bf16.msra.mxu0 %v3064
    %3901 = vmatpush.bf16.msra.mxu0 %v3058
    %3902 = vmatmul.bf16.gmra.mxu0 %v1842
    %v3903 = vpop.f32.mrf.mxu0
    %v3904 = vadd.f32 %v3891, %v3903
    %v3905 = vpop.f32.mrf.mxu0
    %3906 = vdwg.mxu0
    %3907 = vmatpush.bf16.msra.mxu0 %v3148
    %3908 = vmatpush.bf16.msra.mxu0 %v3142
    %3909 = vmatpush.bf16.msra.mxu0 %v3136
    %3910 = vmatpush.bf16.msra.mxu0 %v3130
    %3911 = vmatpush.bf16.msra.mxu0 %v3124
    %3912 = vmatpush.bf16.msra.mxu0 %v3118
    %3913 = vmatpush.bf16.msra.mxu0 %v3112
    %3914 = vmatpush.bf16.msra.mxu0 %v3106
    %3915 = vmatmul.bf16.gmra.mxu0 %v1843
    %v3916 = vpop.f32.mrf.mxu0
    %v3917 = vadd.f32 %v3904, %v3916
    %v3918 = vpop.f32.mrf.mxu0
    %3919 = vdwg.mxu0
    %3920 = vmatpush.bf16.msra.mxu0 %v3196
    %3921 = vmatpush.bf16.msra.mxu0 %v3190
    %3922 = vmatpush.bf16.msra.mxu0 %v3184
    %3923 = vmatpush.bf16.msra.mxu0 %v3178
    %3924 = vmatpush.bf16.msra.mxu0 %v3172
    %3925 = vmatpush.bf16.msra.mxu0 %v3166
    %3926 = vmatpush.bf16.msra.mxu0 %v3160
    %3927 = vmatpush.bf16.msra.mxu0 %v3154
    %3928 = vmatmul.bf16.gmra.mxu0 %v1844
    %v3929 = vpop.f32.mrf.mxu0
    %v3930 = vadd.f32 %v3917, %v3929
    %v3931 = vpop.f32.mrf.mxu0
    %3932 = vdwg.mxu0
    %3933 = vmatpush.bf16.msra.mxu0 %v3244
    %3934 = vmatpush.bf16.msra.mxu0 %v3238
    %3935 = vmatpush.bf16.msra.mxu0 %v3232
    %3936 = vmatpush.bf16.msra.mxu0 %v3226
    %3937 = vmatpush.bf16.msra.mxu0 %v3220
    %3938 = vmatpush.bf16.msra.mxu0 %v3214
    %3939 = vmatpush.bf16.msra.mxu0 %v3208
    %3940 = vmatpush.bf16.msra.mxu0 %v3202
    %3941 = vmatmul.bf16.gmra.mxu0 %v1845
    %v3942 = vpop.f32.mrf.mxu0
    %v3943 = vadd.f32 %v3930, %v3942
    %v3944 = vpop.f32.mrf.mxu0
    %3945 = vdwg.mxu0
    %3946 = vmatpush.bf16.msra.mxu0 %v3292
    %3947 = vmatpush.bf16.msra.mxu0 %v3286
    %3948 = vmatpush.bf16.msra.mxu0 %v3280
    %3949 = vmatpush.bf16.msra.mxu0 %v3274
    %3950 = vmatpush.bf16.msra.mxu0 %v3268
    %3951 = vmatpush.bf16.msra.mxu0 %v3262
    %3952 = vmatpush.bf16.msra.mxu0 %v3256
    %3953 = vmatpush.bf16.msra.mxu0 %v3250
    %3954 = vmatmul.bf16.gmra.mxu0 %v1846
    %v3955 = vpop.f32.mrf.mxu0
    %v3956 = vadd.f32 %v3943, %v3955
    %v3957 = vpop.f32.mrf.mxu0
    %3958 = vdwg.mxu0
    %3959 = vmatpush.bf16.msra.mxu0 %v3340
    %3960 = vmatpush.bf16.msra.mxu0 %v3334
    %3961 = vmatpush.bf16.msra.mxu0 %v3328
    %3962 = vmatpush.bf16.msra.mxu0 %v3322
    %3963 = vmatpush.bf16.msra.mxu0 %v3316
    %3964 = vmatpush.bf16.msra.mxu0 %v3310
    %3965 = vmatpush.bf16.msra.mxu0 %v3304
    %3966 = vmatpush.bf16.msra.mxu0 %v3298
    %3967 = vmatmul.bf16.gmra.mxu0 %v1847
    %v3968 = vpop.f32.mrf.mxu0
    %v3969 = vadd.f32 %v3956, %v3968
    %v3970 = vpop.f32.mrf.mxu0
    %3971 = vdwg.mxu0
    %3972 = vmatpush.bf16.msra.mxu0 %v3388
    %3973 = vmatpush.bf16.msra.mxu0 %v3382
    %3974 = vmatpush.bf16.msra.mxu0 %v3376
    %3975 = vmatpush.bf16.msra.mxu0 %v3370
    %3976 = vmatpush.bf16.msra.mxu0 %v3364
    %3977 = vmatpush.bf16.msra.mxu0 %v3358
    %3978 = vmatpush.bf16.msra.mxu0 %v3352
    %3979 = vmatpush.bf16.msra.mxu0 %v3346
    %3980 = vmatmul.bf16.gmra.mxu0 %v1848
    %v3981 = vpop.f32.mrf.mxu0
    %v3982 = vadd.f32 %v3969, %v3981
    %v3983 = vpop.f32.mrf.mxu0
    %3984 = vdwg.mxu0
    %3985 = vmatpush.bf16.msra.mxu0 %v3053
    %3986 = vmatpush.bf16.msra.mxu0 %v3047
    %3987 = vmatpush.bf16.msra.mxu0 %v3041
    %3988 = vmatpush.bf16.msra.mxu0 %v3035
    %3989 = vmatpush.bf16.msra.mxu0 %v3029
    %3990 = vmatpush.bf16.msra.mxu0 %v3023
    %3991 = vmatpush.bf16.msra.mxu0 %v3017
    %3992 = vmatpush.bf16.msra.mxu0 %v3011
    %3993 = vmatmul.bf16.gmra.mxu0 %v1841
    %v3994 = vpop.f32.mrf.mxu0
    %v3995 = vadd.f32 %v1787, %v3994
    %v3996 = vpop.f32.mrf.mxu0
    %3997 = vdwg.mxu0
    %3998 = vmatpush.bf16.msra.mxu0 %v3101
    %3999 = vmatpush.bf16.msra.mxu0 %v3095
    %4000 = vmatpush.bf16.msra.mxu0 %v3089
    %4001 = vmatpush.bf16.msra.mxu0 %v3083
    %4002 = vmatpush.bf16.msra.mxu0 %v3077
    %4003 = vmatpush.bf16.msra.mxu0 %v3071
    %4004 = vmatpush.bf16.msra.mxu0 %v3065
    %4005 = vmatpush.bf16.msra.mxu0 %v3059
    %4006 = vmatmul.bf16.gmra.mxu0 %v1842
    %v4007 = vpop.f32.mrf.mxu0
    %v4008 = vadd.f32 %v3995, %v4007
    %v4009 = vpop.f32.mrf.mxu0
    %4010 = vdwg.mxu0
    %4011 = vmatpush.bf16.msra.mxu0 %v3149
    %4012 = vmatpush.bf16.msra.mxu0 %v3143
    %4013 = vmatpush.bf16.msra.mxu0 %v3137
    %4014 = vmatpush.bf16.msra.mxu0 %v3131
    %4015 = vmatpush.bf16.msra.mxu0 %v3125
    %4016 = vmatpush.bf16.msra.mxu0 %v3119
    %4017 = vmatpush.bf16.msra.mxu0 %v3113
    %4018 = vmatpush.bf16.msra.mxu0 %v3107
    %4019 = vmatmul.bf16.gmra.mxu0 %v1843
    %v4020 = vpop.f32.mrf.mxu0
    %v4021 = vadd.f32 %v4008, %v4020
    %v4022 = vpop.f32.mrf.mxu0
    %4023 = vdwg.mxu0
    %4024 = vmatpush.bf16.msra.mxu0 %v3197
    %4025 = vmatpush.bf16.msra.mxu0 %v3191
    %4026 = vmatpush.bf16.msra.mxu0 %v3185
    %4027 = vmatpush.bf16.msra.mxu0 %v3179
    %4028 = vmatpush.bf16.msra.mxu0 %v3173
    %4029 = vmatpush.bf16.msra.mxu0 %v3167
    %4030 = vmatpush.bf16.msra.mxu0 %v3161
    %4031 = vmatpush.bf16.msra.mxu0 %v3155
    %4032 = vmatmul.bf16.gmra.mxu0 %v1844
    %v4033 = vpop.f32.mrf.mxu0
    %v4034 = vadd.f32 %v4021, %v4033
    %v4035 = vpop.f32.mrf.mxu0
    %4036 = vdwg.mxu0
    %4037 = vmatpush.bf16.msra.mxu0 %v3245
    %4038 = vmatpush.bf16.msra.mxu0 %v3239
    %4039 = vmatpush.bf16.msra.mxu0 %v3233
    %4040 = vmatpush.bf16.msra.mxu0 %v3227
    %4041 = vmatpush.bf16.msra.mxu0 %v3221
    %4042 = vmatpush.bf16.msra.mxu0 %v3215
    %4043 = vmatpush.bf16.msra.mxu0 %v3209
    %4044 = vmatpush.bf16.msra.mxu0 %v3203
    %4045 = vmatmul.bf16.gmra.mxu0 %v1845
    %v4046 = vpop.f32.mrf.mxu0
    %v4047 = vadd.f32 %v4034, %v4046
    %v4048 = vpop.f32.mrf.mxu0
    %4049 = vdwg.mxu0
    %4050 = vmatpush.bf16.msra.mxu0 %v3293
    %4051 = vmatpush.bf16.msra.mxu0 %v3287
    %4052 = vmatpush.bf16.msra.mxu0 %v3281
    %4053 = vmatpush.bf16.msra.mxu0 %v3275
    %4054 = vmatpush.bf16.msra.mxu0 %v3269
    %4055 = vmatpush.bf16.msra.mxu0 %v3263
    %4056 = vmatpush.bf16.msra.mxu0 %v3257
    %4057 = vmatpush.bf16.msra.mxu0 %v3251
    %4058 = vmatmul.bf16.gmra.mxu0 %v1846
    %v4059 = vpop.f32.mrf.mxu0
    %v4060 = vadd.f32 %v4047, %v4059
    %v4061 = vpop.f32.mrf.mxu0
    %4062 = vdwg.mxu0
    %4063 = vmatpush.bf16.msra.mxu0 %v3341
    %4064 = vmatpush.bf16.msra.mxu0 %v3335
    %4065 = vmatpush.bf16.msra.mxu0 %v3329
    %4066 = vmatpush.bf16.msra.mxu0 %v3323
    %4067 = vmatpush.bf16.msra.mxu0 %v3317
    %4068 = vmatpush.bf16.msra.mxu0 %v3311
    %4069 = vmatpush.bf16.msra.mxu0 %v3305
    %4070 = vmatpush.bf16.msra.mxu0 %v3299
    %4071 = vmatmul.bf16.gmra.mxu0 %v1847
    %v4072 = vpop.f32.mrf.mxu0
    %v4073 = vadd.f32 %v4060, %v4072
    %v4074 = vpop.f32.mrf.mxu0
    %4075 = vdwg.mxu0
    %4076 = vmatpush.bf16.msra.mxu0 %v3389
    %4077 = vmatpush.bf16.msra.mxu0 %v3383
    %4078 = vmatpush.bf16.msra.mxu0 %v3377
    %4079 = vmatpush.bf16.msra.mxu0 %v3371
    %4080 = vmatpush.bf16.msra.mxu0 %v3365
    %4081 = vmatpush.bf16.msra.mxu0 %v3359
    %4082 = vmatpush.bf16.msra.mxu0 %v3353
    %4083 = vmatpush.bf16.msra.mxu0 %v3347
    %4084 = vmatmul.bf16.gmra.mxu0 %v1848
    %v4085 = vpop.f32.mrf.mxu0
    %v4086 = vadd.f32 %v4073, %v4085
    %v4087 = vpop.f32.mrf.mxu0
    %4088 = vdwg.mxu0
    %4089 = vmatpush.bf16.msra.mxu0 %v3054
    %4090 = vmatpush.bf16.msra.mxu0 %v3048
    %4091 = vmatpush.bf16.msra.mxu0 %v3042
    %4092 = vmatpush.bf16.msra.mxu0 %v3036
    %4093 = vmatpush.bf16.msra.mxu0 %v3030
    %4094 = vmatpush.bf16.msra.mxu0 %v3024
    %4095 = vmatpush.bf16.msra.mxu0 %v3018
    %4096 = vmatpush.bf16.msra.mxu0 %v3012
    %4097 = vmatmul.bf16.gmra.mxu0 %v1841
    %v4098 = vpop.f32.mrf.mxu0
    %v4099 = vadd.f32 %v1800, %v4098
    %v4100 = vpop.f32.mrf.mxu0
    %4101 = vdwg.mxu0
    %4102 = vmatpush.bf16.msra.mxu0 %v3102
    %4103 = vmatpush.bf16.msra.mxu0 %v3096
    %4104 = vmatpush.bf16.msra.mxu0 %v3090
    %4105 = vmatpush.bf16.msra.mxu0 %v3084
    %4106 = vmatpush.bf16.msra.mxu0 %v3078
    %4107 = vmatpush.bf16.msra.mxu0 %v3072
    %4108 = vmatpush.bf16.msra.mxu0 %v3066
    %4109 = vmatpush.bf16.msra.mxu0 %v3060
    %4110 = vmatmul.bf16.gmra.mxu0 %v1842
    %v4111 = vpop.f32.mrf.mxu0
    %v4112 = vadd.f32 %v4099, %v4111
    %v4113 = vpop.f32.mrf.mxu0
    %4114 = vdwg.mxu0
    %4115 = vmatpush.bf16.msra.mxu0 %v3150
    %4116 = vmatpush.bf16.msra.mxu0 %v3144
    %4117 = vmatpush.bf16.msra.mxu0 %v3138
    %4118 = vmatpush.bf16.msra.mxu0 %v3132
    %4119 = vmatpush.bf16.msra.mxu0 %v3126
    %4120 = vmatpush.bf16.msra.mxu0 %v3120
    %4121 = vmatpush.bf16.msra.mxu0 %v3114
    %4122 = vmatpush.bf16.msra.mxu0 %v3108
    %4123 = vmatmul.bf16.gmra.mxu0 %v1843
    %v4124 = vpop.f32.mrf.mxu0
    %v4125 = vadd.f32 %v4112, %v4124
    %v4126 = vpop.f32.mrf.mxu0
    %4127 = vdwg.mxu0
    %4128 = vmatpush.bf16.msra.mxu0 %v3198
    %4129 = vmatpush.bf16.msra.mxu0 %v3192
    %4130 = vmatpush.bf16.msra.mxu0 %v3186
    %4131 = vmatpush.bf16.msra.mxu0 %v3180
    %4132 = vmatpush.bf16.msra.mxu0 %v3174
    %4133 = vmatpush.bf16.msra.mxu0 %v3168
    %4134 = vmatpush.bf16.msra.mxu0 %v3162
    %4135 = vmatpush.bf16.msra.mxu0 %v3156
    %4136 = vmatmul.bf16.gmra.mxu0 %v1844
    %v4137 = vpop.f32.mrf.mxu0
    %v4138 = vadd.f32 %v4125, %v4137
    %v4139 = vpop.f32.mrf.mxu0
    %4140 = vdwg.mxu0
    %4141 = vmatpush.bf16.msra.mxu0 %v3246
    %4142 = vmatpush.bf16.msra.mxu0 %v3240
    %4143 = vmatpush.bf16.msra.mxu0 %v3234
    %4144 = vmatpush.bf16.msra.mxu0 %v3228
    %4145 = vmatpush.bf16.msra.mxu0 %v3222
    %4146 = vmatpush.bf16.msra.mxu0 %v3216
    %4147 = vmatpush.bf16.msra.mxu0 %v3210
    %4148 = vmatpush.bf16.msra.mxu0 %v3204
    %4149 = vmatmul.bf16.gmra.mxu0 %v1845
    %v4150 = vpop.f32.mrf.mxu0
    %v4151 = vadd.f32 %v4138, %v4150
    %v4152 = vpop.f32.mrf.mxu0
    %4153 = vdwg.mxu0
    %4154 = vmatpush.bf16.msra.mxu0 %v3294
    %4155 = vmatpush.bf16.msra.mxu0 %v3288
    %4156 = vmatpush.bf16.msra.mxu0 %v3282
    %4157 = vmatpush.bf16.msra.mxu0 %v3276
    %4158 = vmatpush.bf16.msra.mxu0 %v3270
    %4159 = vmatpush.bf16.msra.mxu0 %v3264
    %4160 = vmatpush.bf16.msra.mxu0 %v3258
    %4161 = vmatpush.bf16.msra.mxu0 %v3252
    %4162 = vmatmul.bf16.gmra.mxu0 %v1846
    %v4163 = vpop.f32.mrf.mxu0
    %v4164 = vadd.f32 %v4151, %v4163
    %v4165 = vpop.f32.mrf.mxu0
    %4166 = vdwg.mxu0
    %4167 = vmatpush.bf16.msra.mxu0 %v3342
    %4168 = vmatpush.bf16.msra.mxu0 %v3336
    %4169 = vmatpush.bf16.msra.mxu0 %v3330
    %4170 = vmatpush.bf16.msra.mxu0 %v3324
    %4171 = vmatpush.bf16.msra.mxu0 %v3318
    %4172 = vmatpush.bf16.msra.mxu0 %v3312
    %4173 = vmatpush.bf16.msra.mxu0 %v3306
    %4174 = vmatpush.bf16.msra.mxu0 %v3300
    %4175 = vmatmul.bf16.gmra.mxu0 %v1847
    %v4176 = vpop.f32.mrf.mxu0
    %v4177 = vadd.f32 %v4164, %v4176
    %v4178 = vpop.f32.mrf.mxu0
    %4179 = vdwg.mxu0
    %4180 = vmatpush.bf16.msra.mxu0 %v3390
    %4181 = vmatpush.bf16.msra.mxu0 %v3384
    %4182 = vmatpush.bf16.msra.mxu0 %v3378
    %4183 = vmatpush.bf16.msra.mxu0 %v3372
    %4184 = vmatpush.bf16.msra.mxu0 %v3366
    %4185 = vmatpush.bf16.msra.mxu0 %v3360
    %4186 = vmatpush.bf16.msra.mxu0 %v3354
    %4187 = vmatpush.bf16.msra.mxu0 %v3348
    %4188 = vmatmul.bf16.gmra.mxu0 %v1848
    %v4189 = vpop.f32.mrf.mxu0
    %v4190 = vadd.f32 %v4177, %v4189
    %v4191 = vpop.f32.mrf.mxu0
    %4192 = vdwg.mxu0
    %4193 = vmatpush.bf16.msra.mxu0 %v3055
    %4194 = vmatpush.bf16.msra.mxu0 %v3049
    %4195 = vmatpush.bf16.msra.mxu0 %v3043
    %4196 = vmatpush.bf16.msra.mxu0 %v3037
    %4197 = vmatpush.bf16.msra.mxu0 %v3031
    %4198 = vmatpush.bf16.msra.mxu0 %v3025
    %4199 = vmatpush.bf16.msra.mxu0 %v3019
    %4200 = vmatpush.bf16.msra.mxu0 %v3013
    %4201 = vmatmul.bf16.gmra.mxu0 %v1841
    %v4202 = vpop.f32.mrf.mxu0
    %v4203 = vadd.f32 %v1813, %v4202
    %v4204 = vpop.f32.mrf.mxu0
    %4205 = vdwg.mxu0
    %4206 = vmatpush.bf16.msra.mxu0 %v3103
    %4207 = vmatpush.bf16.msra.mxu0 %v3097
    %4208 = vmatpush.bf16.msra.mxu0 %v3091
    %4209 = vmatpush.bf16.msra.mxu0 %v3085
    %4210 = vmatpush.bf16.msra.mxu0 %v3079
    %4211 = vmatpush.bf16.msra.mxu0 %v3073
    %4212 = vmatpush.bf16.msra.mxu0 %v3067
    %4213 = vmatpush.bf16.msra.mxu0 %v3061
    %4214 = vmatmul.bf16.gmra.mxu0 %v1842
    %v4215 = vpop.f32.mrf.mxu0
    %v4216 = vadd.f32 %v4203, %v4215
    %v4217 = vpop.f32.mrf.mxu0
    %4218 = vdwg.mxu0
    %4219 = vmatpush.bf16.msra.mxu0 %v3151
    %4220 = vmatpush.bf16.msra.mxu0 %v3145
    %4221 = vmatpush.bf16.msra.mxu0 %v3139
    %4222 = vmatpush.bf16.msra.mxu0 %v3133
    %4223 = vmatpush.bf16.msra.mxu0 %v3127
    %4224 = vmatpush.bf16.msra.mxu0 %v3121
    %4225 = vmatpush.bf16.msra.mxu0 %v3115
    %4226 = vmatpush.bf16.msra.mxu0 %v3109
    %4227 = vmatmul.bf16.gmra.mxu0 %v1843
    %v4228 = vpop.f32.mrf.mxu0
    %v4229 = vadd.f32 %v4216, %v4228
    %v4230 = vpop.f32.mrf.mxu0
    %4231 = vdwg.mxu0
    %4232 = vmatpush.bf16.msra.mxu0 %v3199
    %4233 = vmatpush.bf16.msra.mxu0 %v3193
    %4234 = vmatpush.bf16.msra.mxu0 %v3187
    %4235 = vmatpush.bf16.msra.mxu0 %v3181
    %4236 = vmatpush.bf16.msra.mxu0 %v3175
    %4237 = vmatpush.bf16.msra.mxu0 %v3169
    %4238 = vmatpush.bf16.msra.mxu0 %v3163
    %4239 = vmatpush.bf16.msra.mxu0 %v3157
    %4240 = vmatmul.bf16.gmra.mxu0 %v1844
    %v4241 = vpop.f32.mrf.mxu0
    %v4242 = vadd.f32 %v4229, %v4241
    %v4243 = vpop.f32.mrf.mxu0
    %4244 = vdwg.mxu0
    %4245 = vmatpush.bf16.msra.mxu0 %v3247
    %4246 = vmatpush.bf16.msra.mxu0 %v3241
    %4247 = vmatpush.bf16.msra.mxu0 %v3235
    %4248 = vmatpush.bf16.msra.mxu0 %v3229
    %4249 = vmatpush.bf16.msra.mxu0 %v3223
    %4250 = vmatpush.bf16.msra.mxu0 %v3217
    %4251 = vmatpush.bf16.msra.mxu0 %v3211
    %4252 = vmatpush.bf16.msra.mxu0 %v3205
    %4253 = vmatmul.bf16.gmra.mxu0 %v1845
    %v4254 = vpop.f32.mrf.mxu0
    %v4255 = vadd.f32 %v4242, %v4254
    %v4256 = vpop.f32.mrf.mxu0
    %4257 = vdwg.mxu0
    %4258 = vmatpush.bf16.msra.mxu0 %v3295
    %4259 = vmatpush.bf16.msra.mxu0 %v3289
    %4260 = vmatpush.bf16.msra.mxu0 %v3283
    %4261 = vmatpush.bf16.msra.mxu0 %v3277
    %4262 = vmatpush.bf16.msra.mxu0 %v3271
    %4263 = vmatpush.bf16.msra.mxu0 %v3265
    %4264 = vmatpush.bf16.msra.mxu0 %v3259
    %4265 = vmatpush.bf16.msra.mxu0 %v3253
    %4266 = vmatmul.bf16.gmra.mxu0 %v1846
    %v4267 = vpop.f32.mrf.mxu0
    %v4268 = vadd.f32 %v4255, %v4267
    %v4269 = vpop.f32.mrf.mxu0
    %4270 = vdwg.mxu0
    %4271 = vmatpush.bf16.msra.mxu0 %v3343
    %4272 = vmatpush.bf16.msra.mxu0 %v3337
    %4273 = vmatpush.bf16.msra.mxu0 %v3331
    %4274 = vmatpush.bf16.msra.mxu0 %v3325
    %4275 = vmatpush.bf16.msra.mxu0 %v3319
    %4276 = vmatpush.bf16.msra.mxu0 %v3313
    %4277 = vmatpush.bf16.msra.mxu0 %v3307
    %4278 = vmatpush.bf16.msra.mxu0 %v3301
    %4279 = vmatmul.bf16.gmra.mxu0 %v1847
    %v4280 = vpop.f32.mrf.mxu0
    %v4281 = vadd.f32 %v4268, %v4280
    %v4282 = vpop.f32.mrf.mxu0
    %4283 = vdwg.mxu0
    %4284 = vmatpush.bf16.msra.mxu0 %v3391
    %4285 = vmatpush.bf16.msra.mxu0 %v3385
    %4286 = vmatpush.bf16.msra.mxu0 %v3379
    %4287 = vmatpush.bf16.msra.mxu0 %v3373
    %4288 = vmatpush.bf16.msra.mxu0 %v3367
    %4289 = vmatpush.bf16.msra.mxu0 %v3361
    %4290 = vmatpush.bf16.msra.mxu0 %v3355
    %4291 = vmatpush.bf16.msra.mxu0 %v3349
    %4292 = vmatmul.bf16.gmra.mxu0 %v1848
    %v4293 = vpop.f32.mrf.mxu0
    %v4294 = vadd.f32 %v4281, %v4293
    %v4295 = vpop.f32.mrf.mxu0
    %4296 = vdwg.mxu0
    %4297 = vmatpush.bf16.msra.mxu0 %v3056
    %4298 = vmatpush.bf16.msra.mxu0 %v3050
    %4299 = vmatpush.bf16.msra.mxu0 %v3044
    %4300 = vmatpush.bf16.msra.mxu0 %v3038
    %4301 = vmatpush.bf16.msra.mxu0 %v3032
    %4302 = vmatpush.bf16.msra.mxu0 %v3026
    %4303 = vmatpush.bf16.msra.mxu0 %v3020
    %4304 = vmatpush.bf16.msra.mxu0 %v3014
    %4305 = vmatmul.bf16.gmra.mxu0 %v1841
    %v4306 = vpop.f32.mrf.mxu0
    %v4307 = vadd.f32 %v1826, %v4306
    %v4308 = vpop.f32.mrf.mxu0
    %4309 = vdwg.mxu0
    %4310 = vmatpush.bf16.msra.mxu0 %v3104
    %4311 = vmatpush.bf16.msra.mxu0 %v3098
    %4312 = vmatpush.bf16.msra.mxu0 %v3092
    %4313 = vmatpush.bf16.msra.mxu0 %v3086
    %4314 = vmatpush.bf16.msra.mxu0 %v3080
    %4315 = vmatpush.bf16.msra.mxu0 %v3074
    %4316 = vmatpush.bf16.msra.mxu0 %v3068
    %4317 = vmatpush.bf16.msra.mxu0 %v3062
    %4318 = vmatmul.bf16.gmra.mxu0 %v1842
    %v4319 = vpop.f32.mrf.mxu0
    %v4320 = vadd.f32 %v4307, %v4319
    %v4321 = vpop.f32.mrf.mxu0
    %4322 = vdwg.mxu0
    %4323 = vmatpush.bf16.msra.mxu0 %v3152
    %4324 = vmatpush.bf16.msra.mxu0 %v3146
    %4325 = vmatpush.bf16.msra.mxu0 %v3140
    %4326 = vmatpush.bf16.msra.mxu0 %v3134
    %4327 = vmatpush.bf16.msra.mxu0 %v3128
    %4328 = vmatpush.bf16.msra.mxu0 %v3122
    %4329 = vmatpush.bf16.msra.mxu0 %v3116
    %4330 = vmatpush.bf16.msra.mxu0 %v3110
    %4331 = vmatmul.bf16.gmra.mxu0 %v1843
    %v4332 = vpop.f32.mrf.mxu0
    %v4333 = vadd.f32 %v4320, %v4332
    %v4334 = vpop.f32.mrf.mxu0
    %4335 = vdwg.mxu0
    %4336 = vmatpush.bf16.msra.mxu0 %v3200
    %4337 = vmatpush.bf16.msra.mxu0 %v3194
    %4338 = vmatpush.bf16.msra.mxu0 %v3188
    %4339 = vmatpush.bf16.msra.mxu0 %v3182
    %4340 = vmatpush.bf16.msra.mxu0 %v3176
    %4341 = vmatpush.bf16.msra.mxu0 %v3170
    %4342 = vmatpush.bf16.msra.mxu0 %v3164
    %4343 = vmatpush.bf16.msra.mxu0 %v3158
    %4344 = vmatmul.bf16.gmra.mxu0 %v1844
    %v4345 = vpop.f32.mrf.mxu0
    %v4346 = vadd.f32 %v4333, %v4345
    %v4347 = vpop.f32.mrf.mxu0
    %4348 = vdwg.mxu0
    %4349 = vmatpush.bf16.msra.mxu0 %v3248
    %4350 = vmatpush.bf16.msra.mxu0 %v3242
    %4351 = vmatpush.bf16.msra.mxu0 %v3236
    %4352 = vmatpush.bf16.msra.mxu0 %v3230
    %4353 = vmatpush.bf16.msra.mxu0 %v3224
    %4354 = vmatpush.bf16.msra.mxu0 %v3218
    %4355 = vmatpush.bf16.msra.mxu0 %v3212
    %4356 = vmatpush.bf16.msra.mxu0 %v3206
    %4357 = vmatmul.bf16.gmra.mxu0 %v1845
    %v4358 = vpop.f32.mrf.mxu0
    %v4359 = vadd.f32 %v4346, %v4358
    %v4360 = vpop.f32.mrf.mxu0
    %4361 = vdwg.mxu0
    %4362 = vmatpush.bf16.msra.mxu0 %v3296
    %4363 = vmatpush.bf16.msra.mxu0 %v3290
    %4364 = vmatpush.bf16.msra.mxu0 %v3284
    %4365 = vmatpush.bf16.msra.mxu0 %v3278
    %4366 = vmatpush.bf16.msra.mxu0 %v3272
    %4367 = vmatpush.bf16.msra.mxu0 %v3266
    %4368 = vmatpush.bf16.msra.mxu0 %v3260
    %4369 = vmatpush.bf16.msra.mxu0 %v3254
    %4370 = vmatmul.bf16.gmra.mxu0 %v1846
    %v4371 = vpop.f32.mrf.mxu0
    %v4372 = vadd.f32 %v4359, %v4371
    %v4373 = vpop.f32.mrf.mxu0
    %4374 = vdwg.mxu0
    %4375 = vmatpush.bf16.msra.mxu0 %v3344
    %4376 = vmatpush.bf16.msra.mxu0 %v3338
    %4377 = vmatpush.bf16.msra.mxu0 %v3332
    %4378 = vmatpush.bf16.msra.mxu0 %v3326
    %4379 = vmatpush.bf16.msra.mxu0 %v3320
    %4380 = vmatpush.bf16.msra.mxu0 %v3314
    %4381 = vmatpush.bf16.msra.mxu0 %v3308
    %4382 = vmatpush.bf16.msra.mxu0 %v3302
    %4383 = vmatmul.bf16.gmra.mxu0 %v1847
    %v4384 = vpop.f32.mrf.mxu0
    %v4385 = vadd.f32 %v4372, %v4384
    %v4386 = vpop.f32.mrf.mxu0
    %4387 = vdwg.mxu0
    %4388 = vmatpush.bf16.msra.mxu0 %v3392
    %4389 = vmatpush.bf16.msra.mxu0 %v3386
    %4390 = vmatpush.bf16.msra.mxu0 %v3380
    %4391 = vmatpush.bf16.msra.mxu0 %v3374
    %4392 = vmatpush.bf16.msra.mxu0 %v3368
    %4393 = vmatpush.bf16.msra.mxu0 %v3362
    %4394 = vmatpush.bf16.msra.mxu0 %v3356
    %4395 = vmatpush.bf16.msra.mxu0 %v3350
    %4396 = vmatmul.bf16.gmra.mxu0 %v1848
    %v4397 = vpop.f32.mrf.mxu0
    %v4398 = vadd.f32 %v4385, %v4397
    %v4399 = vpop.f32.mrf.mxu0
    %4400 = vdwg.mxu0
    %v4401 = vpack.c.bf16 %v1072, %v1072
    %v4402 = vpack.c.bf16 %v1073, %v1073
    %v4403 = vld [vmem:[#allocation19] sm:$0xff]
    %v4404 = vld [vmem:[#allocation19 + $0x8] sm:$0xff]
    %v4405 = vld [vmem:[#allocation19 + $0x10] sm:$0xff]
    %v4406 = vld [vmem:[#allocation19 + $0x18] sm:$0xff]
    %v4407 = vld [vmem:[#allocation19 + $0x20] sm:$0xff]
    %v4408 = vld [vmem:[#allocation19 + $0x28] sm:$0xff]
    %v4409 = vld [vmem:[#allocation19 + $0x30] sm:$0xff]
    %v4410 = vld [vmem:[#allocation19 + $0x38] sm:$0xff]
    %v4411 = vld [vmem:[#allocation19 + $0x40] sm:$0xff]
    %v4412 = vld [vmem:[#allocation19 + $0x48] sm:$0xff]
    %v4413 = vld [vmem:[#allocation19 + $0x50] sm:$0xff]
    %v4414 = vld [vmem:[#allocation19 + $0x58] sm:$0xff]
    %v4415 = vld [vmem:[#allocation19 + $0x60] sm:$0xff]
    %v4416 = vld [vmem:[#allocation19 + $0x68] sm:$0xff]
    %v4417 = vld [vmem:[#allocation19 + $0x70] sm:$0xff]
    %v4418 = vld [vmem:[#allocation19 + $0x78] sm:$0xff]
    %v4419 = vld [vmem:[#allocation19 + $0x80] sm:$0xff]
    %v4420 = vld [vmem:[#allocation19 + $0x88] sm:$0xff]
    %v4421 = vld [vmem:[#allocation19 + $0x90] sm:$0xff]
    %v4422 = vld [vmem:[#allocation19 + $0x98] sm:$0xff]
    %v4423 = vld [vmem:[#allocation19 + $0xa0] sm:$0xff]
    %v4424 = vld [vmem:[#allocation19 + $0xa8] sm:$0xff]
    %v4425 = vld [vmem:[#allocation19 + $0xb0] sm:$0xff]
    %v4426 = vld [vmem:[#allocation19 + $0xb8] sm:$0xff]
    %v4427 = vld [vmem:[#allocation19 + $0xc0] sm:$0xff]
    %v4428 = vld [vmem:[#allocation19 + $0xc8] sm:$0xff]
    %v4429 = vld [vmem:[#allocation19 + $0xd0] sm:$0xff]
    %v4430 = vld [vmem:[#allocation19 + $0xd8] sm:$0xff]
    %v4431 = vld [vmem:[#allocation19 + $0xe0] sm:$0xff]
    %v4432 = vld [vmem:[#allocation19 + $0xe8] sm:$0xff]
    %v4433 = vld [vmem:[#allocation19 + $0xf0] sm:$0xff]
    %v4434 = vld [vmem:[#allocation19 + $0xf8] sm:$0xff]
    %v4435 = vld [vmem:[#allocation19 + $0x100] sm:$0xff]
    %v4436 = vld [vmem:[#allocation19 + $0x108] sm:$0xff]
    %v4437 = vld [vmem:[#allocation19 + $0x110] sm:$0xff]
    %v4438 = vld [vmem:[#allocation19 + $0x118] sm:$0xff]
    %v4439 = vld [vmem:[#allocation19 + $0x120] sm:$0xff]
    %v4440 = vld [vmem:[#allocation19 + $0x128] sm:$0xff]
    %v4441 = vld [vmem:[#allocation19 + $0x130] sm:$0xff]
    %v4442 = vld [vmem:[#allocation19 + $0x138] sm:$0xff]
    %v4443 = vld [vmem:[#allocation19 + $0x140] sm:$0xff]
    %v4444 = vld [vmem:[#allocation19 + $0x148] sm:$0xff]
    %v4445 = vld [vmem:[#allocation19 + $0x150] sm:$0xff]
    %v4446 = vld [vmem:[#allocation19 + $0x158] sm:$0xff]
    %v4447 = vld [vmem:[#allocation19 + $0x160] sm:$0xff]
    %v4448 = vld [vmem:[#allocation19 + $0x168] sm:$0xff]
    %v4449 = vld [vmem:[#allocation19 + $0x170] sm:$0xff]
    %v4450 = vld [vmem:[#allocation19 + $0x178] sm:$0xff]
    %v4451 = vld [vmem:[#allocation19 + $0x180] sm:$0xff]
    %v4452 = vld [vmem:[#allocation19 + $0x188] sm:$0xff]
    %v4453 = vld [vmem:[#allocation19 + $0x190] sm:$0xff]
    %v4454 = vld [vmem:[#allocation19 + $0x198] sm:$0xff]
    %v4455 = vld [vmem:[#allocation19 + $0x1a0] sm:$0xff]
    %v4456 = vld [vmem:[#allocation19 + $0x1a8] sm:$0xff]
    %v4457 = vld [vmem:[#allocation19 + $0x1b0] sm:$0xff]
    %v4458 = vld [vmem:[#allocation19 + $0x1b8] sm:$0xff]
    %v4459 = vld [vmem:[#allocation19 + $0x1c0] sm:$0xff]
    %v4460 = vld [vmem:[#allocation19 + $0x1c8] sm:$0xff]
    %v4461 = vld [vmem:[#allocation19 + $0x1d0] sm:$0xff]
    %v4462 = vld [vmem:[#allocation19 + $0x1d8] sm:$0xff]
    %v4463 = vld [vmem:[#allocation19 + $0x1e0] sm:$0xff]
    %v4464 = vld [vmem:[#allocation19 + $0x1e8] sm:$0xff]
    %v4465 = vld [vmem:[#allocation19 + $0x1f0] sm:$0xff]
    %v4466 = vld [vmem:[#allocation19 + $0x1f8] sm:$0xff]
    %v4467 = vld [vmem:[#allocation19 + $0x200] sm:$0xff]
    %v4468 = vld [vmem:[#allocation19 + $0x208] sm:$0xff]
    %v4469 = vld [vmem:[#allocation19 + $0x210] sm:$0xff]
    %v4470 = vld [vmem:[#allocation19 + $0x218] sm:$0xff]
    %v4471 = vld [vmem:[#allocation19 + $0x220] sm:$0xff]
    %v4472 = vld [vmem:[#allocation19 + $0x228] sm:$0xff]
    %v4473 = vld [vmem:[#allocation19 + $0x230] sm:$0xff]
    %v4474 = vld [vmem:[#allocation19 + $0x238] sm:$0xff]
    %v4475 = vld [vmem:[#allocation19 + $0x240] sm:$0xff]
    %v4476 = vld [vmem:[#allocation19 + $0x248] sm:$0xff]
    %v4477 = vld [vmem:[#allocation19 + $0x250] sm:$0xff]
    %v4478 = vld [vmem:[#allocation19 + $0x258] sm:$0xff]
    %v4479 = vld [vmem:[#allocation19 + $0x260] sm:$0xff]
    %v4480 = vld [vmem:[#allocation19 + $0x268] sm:$0xff]
    %v4481 = vld [vmem:[#allocation19 + $0x270] sm:$0xff]
    %v4482 = vld [vmem:[#allocation19 + $0x278] sm:$0xff]
    %v4483 = vld [vmem:[#allocation19 + $0x280] sm:$0xff]
    %v4484 = vld [vmem:[#allocation19 + $0x288] sm:$0xff]
    %v4485 = vld [vmem:[#allocation19 + $0x290] sm:$0xff]
    %v4486 = vld [vmem:[#allocation19 + $0x298] sm:$0xff]
    %v4487 = vld [vmem:[#allocation19 + $0x2a0] sm:$0xff]
    %v4488 = vld [vmem:[#allocation19 + $0x2a8] sm:$0xff]
    %v4489 = vld [vmem:[#allocation19 + $0x2b0] sm:$0xff]
    %v4490 = vld [vmem:[#allocation19 + $0x2b8] sm:$0xff]
    %v4491 = vld [vmem:[#allocation19 + $0x2c0] sm:$0xff]
    %v4492 = vld [vmem:[#allocation19 + $0x2c8] sm:$0xff]
    %v4493 = vld [vmem:[#allocation19 + $0x2d0] sm:$0xff]
    %v4494 = vld [vmem:[#allocation19 + $0x2d8] sm:$0xff]
    %v4495 = vld [vmem:[#allocation19 + $0x2e0] sm:$0xff]
    %v4496 = vld [vmem:[#allocation19 + $0x2e8] sm:$0xff]
    %v4497 = vld [vmem:[#allocation19 + $0x2f0] sm:$0xff]
    %v4498 = vld [vmem:[#allocation19 + $0x2f8] sm:$0xff]
    %v4595 = vunpack.c.l.b16 %v4403
    %v4596 = vunpack.c.h.b16 %v4403
    %v4597 = vunpack.c.l.b16 %v4404
    %v4598 = vunpack.c.h.b16 %v4404
    %v4599 = vunpack.c.l.b16 %v4405
    %v4600 = vunpack.c.h.b16 %v4405
    %v4601 = vunpack.c.l.b16 %v4406
    %v4602 = vunpack.c.h.b16 %v4406
    %v4603 = vunpack.c.l.b16 %v4407
    %v4604 = vunpack.c.h.b16 %v4407
    %v4605 = vunpack.c.l.b16 %v4408
    %v4606 = vunpack.c.h.b16 %v4408
    %v4607 = vunpack.c.l.b16 %v4409
    %v4608 = vunpack.c.h.b16 %v4409
    %v4609 = vunpack.c.l.b16 %v4410
    %v4610 = vunpack.c.h.b16 %v4410
    %v4611 = vunpack.c.l.b16 %v4411
    %v4612 = vunpack.c.h.b16 %v4411
    %v4613 = vunpack.c.l.b16 %v4412
    %v4614 = vunpack.c.h.b16 %v4412
    %v4615 = vunpack.c.l.b16 %v4413
    %v4616 = vunpack.c.h.b16 %v4413
    %v4617 = vunpack.c.l.b16 %v4414
    %v4618 = vunpack.c.h.b16 %v4414
    %v4619 = vunpack.c.l.b16 %v4415
    %v4620 = vunpack.c.h.b16 %v4415
    %v4621 = vunpack.c.l.b16 %v4416
    %v4622 = vunpack.c.h.b16 %v4416
    %v4623 = vunpack.c.l.b16 %v4417
    %v4624 = vunpack.c.h.b16 %v4417
    %v4625 = vunpack.c.l.b16 %v4418
    %v4626 = vunpack.c.h.b16 %v4418
    %v4627 = vunpack.c.l.b16 %v4419
    %v4628 = vunpack.c.h.b16 %v4419
    %v4629 = vunpack.c.l.b16 %v4420
    %v4630 = vunpack.c.h.b16 %v4420
    %v4631 = vunpack.c.l.b16 %v4421
    %v4632 = vunpack.c.h.b16 %v4421
    %v4633 = vunpack.c.l.b16 %v4422
    %v4634 = vunpack.c.h.b16 %v4422
    %v4635 = vunpack.c.l.b16 %v4423
    %v4636 = vunpack.c.h.b16 %v4423
    %v4637 = vunpack.c.l.b16 %v4424
    %v4638 = vunpack.c.h.b16 %v4424
    %v4639 = vunpack.c.l.b16 %v4425
    %v4640 = vunpack.c.h.b16 %v4425
    %v4641 = vunpack.c.l.b16 %v4426
    %v4642 = vunpack.c.h.b16 %v4426
    %v4643 = vunpack.c.l.b16 %v4427
    %v4644 = vunpack.c.h.b16 %v4427
    %v4645 = vunpack.c.l.b16 %v4428
    %v4646 = vunpack.c.h.b16 %v4428
    %v4647 = vunpack.c.l.b16 %v4429
    %v4648 = vunpack.c.h.b16 %v4429
    %v4649 = vunpack.c.l.b16 %v4430
    %v4650 = vunpack.c.h.b16 %v4430
    %v4651 = vunpack.c.l.b16 %v4431
    %v4652 = vunpack.c.h.b16 %v4431
    %v4653 = vunpack.c.l.b16 %v4432
    %v4654 = vunpack.c.h.b16 %v4432
    %v4655 = vunpack.c.l.b16 %v4433
    %v4656 = vunpack.c.h.b16 %v4433
    %v4657 = vunpack.c.l.b16 %v4434
    %v4658 = vunpack.c.h.b16 %v4434
    %v4659 = vunpack.c.l.b16 %v4435
    %v4660 = vunpack.c.h.b16 %v4435
    %v4661 = vunpack.c.l.b16 %v4436
    %v4662 = vunpack.c.h.b16 %v4436
    %v4663 = vunpack.c.l.b16 %v4437
    %v4664 = vunpack.c.h.b16 %v4437
    %v4665 = vunpack.c.l.b16 %v4438
    %v4666 = vunpack.c.h.b16 %v4438
    %v4667 = vunpack.c.l.b16 %v4439
    %v4668 = vunpack.c.h.b16 %v4439
    %v4669 = vunpack.c.l.b16 %v4440
    %v4670 = vunpack.c.h.b16 %v4440
    %v4671 = vunpack.c.l.b16 %v4441
    %v4672 = vunpack.c.h.b16 %v4441
    %v4673 = vunpack.c.l.b16 %v4442
    %v4674 = vunpack.c.h.b16 %v4442
    %v4675 = vunpack.c.l.b16 %v4443
    %v4676 = vunpack.c.h.b16 %v4443
    %v4677 = vunpack.c.l.b16 %v4444
    %v4678 = vunpack.c.h.b16 %v4444
    %v4679 = vunpack.c.l.b16 %v4445
    %v4680 = vunpack.c.h.b16 %v4445
    %v4681 = vunpack.c.l.b16 %v4446
    %v4682 = vunpack.c.h.b16 %v4446
    %v4683 = vunpack.c.l.b16 %v4447
    %v4684 = vunpack.c.h.b16 %v4447
    %v4685 = vunpack.c.l.b16 %v4448
    %v4686 = vunpack.c.h.b16 %v4448
    %v4687 = vunpack.c.l.b16 %v4449
    %v4688 = vunpack.c.h.b16 %v4449
    %v4689 = vunpack.c.l.b16 %v4450
    %v4690 = vunpack.c.h.b16 %v4450
    %v4691 = vunpack.c.l.b16 %v4451
    %v4692 = vunpack.c.h.b16 %v4451
    %v4693 = vunpack.c.l.b16 %v4452
    %v4694 = vunpack.c.h.b16 %v4452
    %v4695 = vunpack.c.l.b16 %v4453
    %v4696 = vunpack.c.h.b16 %v4453
    %v4697 = vunpack.c.l.b16 %v4454
    %v4698 = vunpack.c.h.b16 %v4454
    %v4699 = vunpack.c.l.b16 %v4455
    %v4700 = vunpack.c.h.b16 %v4455
    %v4701 = vunpack.c.l.b16 %v4456
    %v4702 = vunpack.c.h.b16 %v4456
    %v4703 = vunpack.c.l.b16 %v4457
    %v4704 = vunpack.c.h.b16 %v4457
    %v4705 = vunpack.c.l.b16 %v4458
    %v4706 = vunpack.c.h.b16 %v4458
    %v4707 = vunpack.c.l.b16 %v4459
    %v4708 = vunpack.c.h.b16 %v4459
    %v4709 = vunpack.c.l.b16 %v4460
    %v4710 = vunpack.c.h.b16 %v4460
    %v4711 = vunpack.c.l.b16 %v4461
    %v4712 = vunpack.c.h.b16 %v4461
    %v4713 = vunpack.c.l.b16 %v4462
    %v4714 = vunpack.c.h.b16 %v4462
    %v4715 = vunpack.c.l.b16 %v4463
    %v4716 = vunpack.c.h.b16 %v4463
    %v4717 = vunpack.c.l.b16 %v4464
    %v4718 = vunpack.c.h.b16 %v4464
    %v4719 = vunpack.c.l.b16 %v4465
    %v4720 = vunpack.c.h.b16 %v4465
    %v4721 = vunpack.c.l.b16 %v4466
    %v4722 = vunpack.c.h.b16 %v4466
    %v4723 = vunpack.c.l.b16 %v4467
    %v4724 = vunpack.c.h.b16 %v4467
    %v4725 = vunpack.c.l.b16 %v4468
    %v4726 = vunpack.c.h.b16 %v4468
    %v4727 = vunpack.c.l.b16 %v4469
    %v4728 = vunpack.c.h.b16 %v4469
    %v4729 = vunpack.c.l.b16 %v4470
    %v4730 = vunpack.c.h.b16 %v4470
    %v4731 = vunpack.c.l.b16 %v4471
    %v4732 = vunpack.c.h.b16 %v4471
    %v4733 = vunpack.c.l.b16 %v4472
    %v4734 = vunpack.c.h.b16 %v4472
    %v4735 = vunpack.c.l.b16 %v4473
    %v4736 = vunpack.c.h.b16 %v4473
    %v4737 = vunpack.c.l.b16 %v4474
    %v4738 = vunpack.c.h.b16 %v4474
    %v4739 = vunpack.c.l.b16 %v4475
    %v4740 = vunpack.c.h.b16 %v4475
    %v4741 = vunpack.c.l.b16 %v4476
    %v4742 = vunpack.c.h.b16 %v4476
    %v4743 = vunpack.c.l.b16 %v4477
    %v4744 = vunpack.c.h.b16 %v4477
    %v4745 = vunpack.c.l.b16 %v4478
    %v4746 = vunpack.c.h.b16 %v4478
    %v4747 = vunpack.c.l.b16 %v4479
    %v4748 = vunpack.c.h.b16 %v4479
    %v4749 = vunpack.c.l.b16 %v4480
    %v4750 = vunpack.c.h.b16 %v4480
    %v4751 = vunpack.c.l.b16 %v4481
    %v4752 = vunpack.c.h.b16 %v4481
    %v4753 = vunpack.c.l.b16 %v4482
    %v4754 = vunpack.c.h.b16 %v4482
    %v4755 = vunpack.c.l.b16 %v4483
    %v4756 = vunpack.c.h.b16 %v4483
    %v4757 = vunpack.c.l.b16 %v4484
    %v4758 = vunpack.c.h.b16 %v4484
    %v4759 = vunpack.c.l.b16 %v4485
    %v4760 = vunpack.c.h.b16 %v4485
    %v4761 = vunpack.c.l.b16 %v4486
    %v4762 = vunpack.c.h.b16 %v4486
    %v4763 = vunpack.c.l.b16 %v4487
    %v4764 = vunpack.c.h.b16 %v4487
    %v4765 = vunpack.c.l.b16 %v4488
    %v4766 = vunpack.c.h.b16 %v4488
    %v4767 = vunpack.c.l.b16 %v4489
    %v4768 = vunpack.c.h.b16 %v4489
    %v4769 = vunpack.c.l.b16 %v4490
    %v4770 = vunpack.c.h.b16 %v4490
    %v4771 = vunpack.c.l.b16 %v4491
    %v4772 = vunpack.c.h.b16 %v4491
    %v4773 = vunpack.c.l.b16 %v4492
    %v4774 = vunpack.c.h.b16 %v4492
    %v4775 = vunpack.c.l.b16 %v4493
    %v4776 = vunpack.c.h.b16 %v4493
    %v4777 = vunpack.c.l.b16 %v4494
    %v4778 = vunpack.c.h.b16 %v4494
    %v4779 = vunpack.c.l.b16 %v4495
    %v4780 = vunpack.c.h.b16 %v4495
    %v4781 = vunpack.c.l.b16 %v4496
    %v4782 = vunpack.c.h.b16 %v4496
    %v4783 = vunpack.c.l.b16 %v4497
    %v4784 = vunpack.c.h.b16 %v4497
    %v4785 = vunpack.c.l.b16 %v4498
    %v4786 = vunpack.c.h.b16 %v4498
    %v4787 = vpack.c.b16 %v4601, %v4595
    %v4788 = vpack.c.b16 %v4602, %v4596
    %v4789 = vpack.c.b16 %v4603, %v4597
    %v4790 = vpack.c.b16 %v4604, %v4598
    %v4791 = vpack.c.b16 %v4605, %v4599
    %v4792 = vpack.c.b16 %v4606, %v4600
    %v4793 = vpack.c.b16 %v4613, %v4607
    %v4794 = vpack.c.b16 %v4614, %v4608
    %v4795 = vpack.c.b16 %v4615, %v4609
    %v4796 = vpack.c.b16 %v4616, %v4610
    %v4797 = vpack.c.b16 %v4617, %v4611
    %v4798 = vpack.c.b16 %v4618, %v4612
    %v4799 = vpack.c.b16 %v4625, %v4619
    %v4800 = vpack.c.b16 %v4626, %v4620
    %v4801 = vpack.c.b16 %v4627, %v4621
    %v4802 = vpack.c.b16 %v4628, %v4622
    %v4803 = vpack.c.b16 %v4629, %v4623
    %v4804 = vpack.c.b16 %v4630, %v4624
    %v4805 = vpack.c.b16 %v4637, %v4631
    %v4806 = vpack.c.b16 %v4638, %v4632
    %v4807 = vpack.c.b16 %v4639, %v4633
    %v4808 = vpack.c.b16 %v4640, %v4634
    %v4809 = vpack.c.b16 %v4641, %v4635
    %v4810 = vpack.c.b16 %v4642, %v4636
    %v4811 = vpack.c.b16 %v4649, %v4643
    %v4812 = vpack.c.b16 %v4650, %v4644
    %v4813 = vpack.c.b16 %v4651, %v4645
    %v4814 = vpack.c.b16 %v4652, %v4646
    %v4815 = vpack.c.b16 %v4653, %v4647
    %v4816 = vpack.c.b16 %v4654, %v4648
    %v4817 = vpack.c.b16 %v4661, %v4655
    %v4818 = vpack.c.b16 %v4662, %v4656
    %v4819 = vpack.c.b16 %v4663, %v4657
    %v4820 = vpack.c.b16 %v4664, %v4658
    %v4821 = vpack.c.b16 %v4665, %v4659
    %v4822 = vpack.c.b16 %v4666, %v4660
    %v4823 = vpack.c.b16 %v4673, %v4667
    %v4824 = vpack.c.b16 %v4674, %v4668
    %v4825 = vpack.c.b16 %v4675, %v4669
    %v4826 = vpack.c.b16 %v4676, %v4670
    %v4827 = vpack.c.b16 %v4677, %v4671
    %v4828 = vpack.c.b16 %v4678, %v4672
    %v4829 = vpack.c.b16 %v4685, %v4679
    %v4830 = vpack.c.b16 %v4686, %v4680
    %v4831 = vpack.c.b16 %v4687, %v4681
    %v4832 = vpack.c.b16 %v4688, %v4682
    %v4833 = vpack.c.b16 %v4689, %v4683
    %v4834 = vpack.c.b16 %v4690, %v4684
    %v4835 = vpack.c.b16 %v4697, %v4691
    %v4836 = vpack.c.b16 %v4698, %v4692
    %v4837 = vpack.c.b16 %v4699, %v4693
    %v4838 = vpack.c.b16 %v4700, %v4694
    %v4839 = vpack.c.b16 %v4701, %v4695
    %v4840 = vpack.c.b16 %v4702, %v4696
    %v4841 = vpack.c.b16 %v4709, %v4703
    %v4842 = vpack.c.b16 %v4710, %v4704
    %v4843 = vpack.c.b16 %v4711, %v4705
    %v4844 = vpack.c.b16 %v4712, %v4706
    %v4845 = vpack.c.b16 %v4713, %v4707
    %v4846 = vpack.c.b16 %v4714, %v4708
    %v4847 = vpack.c.b16 %v4721, %v4715
    %v4848 = vpack.c.b16 %v4722, %v4716
    %v4849 = vpack.c.b16 %v4723, %v4717
    %v4850 = vpack.c.b16 %v4724, %v4718
    %v4851 = vpack.c.b16 %v4725, %v4719
    %v4852 = vpack.c.b16 %v4726, %v4720
    %v4853 = vpack.c.b16 %v4733, %v4727
    %v4854 = vpack.c.b16 %v4734, %v4728
    %v4855 = vpack.c.b16 %v4735, %v4729
    %v4856 = vpack.c.b16 %v4736, %v4730
    %v4857 = vpack.c.b16 %v4737, %v4731
    %v4858 = vpack.c.b16 %v4738, %v4732
    %v4859 = vpack.c.b16 %v4745, %v4739
    %v4860 = vpack.c.b16 %v4746, %v4740
    %v4861 = vpack.c.b16 %v4747, %v4741
    %v4862 = vpack.c.b16 %v4748, %v4742
    %v4863 = vpack.c.b16 %v4749, %v4743
    %v4864 = vpack.c.b16 %v4750, %v4744
    %v4865 = vpack.c.b16 %v4757, %v4751
    %v4866 = vpack.c.b16 %v4758, %v4752
    %v4867 = vpack.c.b16 %v4759, %v4753
    %v4868 = vpack.c.b16 %v4760, %v4754
    %v4869 = vpack.c.b16 %v4761, %v4755
    %v4870 = vpack.c.b16 %v4762, %v4756
    %v4871 = vpack.c.b16 %v4769, %v4763
    %v4872 = vpack.c.b16 %v4770, %v4764
    %v4873 = vpack.c.b16 %v4771, %v4765
    %v4874 = vpack.c.b16 %v4772, %v4766
    %v4875 = vpack.c.b16 %v4773, %v4767
    %v4876 = vpack.c.b16 %v4774, %v4768
    %v4877 = vpack.c.b16 %v4781, %v4775
    %v4878 = vpack.c.b16 %v4782, %v4776
    %v4879 = vpack.c.b16 %v4783, %v4777
    %v4880 = vpack.c.b16 %v4784, %v4778
    %v4881 = vpack.c.b16 %v4785, %v4779
    %v4882 = vpack.c.b16 %v4786, %v4780
    %4979 = vmatpush.bf16.msra.mxu0 %v4829
    %4980 = vmatpush.bf16.msra.mxu0 %v4823
    %4981 = vmatpush.bf16.msra.mxu0 %v4817
    %4982 = vmatpush.bf16.msra.mxu0 %v4811
    %4983 = vmatpush.bf16.msra.mxu0 %v4805
    %4984 = vmatpush.bf16.msra.mxu0 %v4799
    %4985 = vmatpush.bf16.msra.mxu0 %v4793
    %4986 = vmatpush.bf16.msra.mxu0 %v4787
    %4987 = vmatmul.bf16.gmra.mxu0 %v4401
    %v4988 = vpop.f32.mrf.mxu0
    %v4989 = vadd.f32 0.0, %v4988
    %v4990 = vpop.f32.mrf.mxu0
    %4991 = vdwg.mxu0
    %4992 = vmatpush.bf16.msra.mxu0 %v4877
    %4993 = vmatpush.bf16.msra.mxu0 %v4871
    %4994 = vmatpush.bf16.msra.mxu0 %v4865
    %4995 = vmatpush.bf16.msra.mxu0 %v4859
    %4996 = vmatpush.bf16.msra.mxu0 %v4853
    %4997 = vmatpush.bf16.msra.mxu0 %v4847
    %4998 = vmatpush.bf16.msra.mxu0 %v4841
    %4999 = vmatpush.bf16.msra.mxu0 %v4835
    %5000 = vmatmul.bf16.gmra.mxu0 %v4402
    %v5001 = vpop.f32.mrf.mxu0
    %v5002 = vadd.f32 %v4989, %v5001
    %v5003 = vpop.f32.mrf.mxu0
    %5004 = vdwg.mxu0
    %5005 = vmatpush.bf16.msra.mxu0 %v4830
    %5006 = vmatpush.bf16.msra.mxu0 %v4824
    %5007 = vmatpush.bf16.msra.mxu0 %v4818
    %5008 = vmatpush.bf16.msra.mxu0 %v4812
    %5009 = vmatpush.bf16.msra.mxu0 %v4806
    %5010 = vmatpush.bf16.msra.mxu0 %v4800
    %5011 = vmatpush.bf16.msra.mxu0 %v4794
    %5012 = vmatpush.bf16.msra.mxu0 %v4788
    %5013 = vmatmul.bf16.gmra.mxu0 %v4401
    %v5014 = vpop.f32.mrf.mxu0
    %v5015 = vadd.f32 0.0, %v5014
    %v5016 = vpop.f32.mrf.mxu0
    %5017 = vdwg.mxu0
    %5018 = vmatpush.bf16.msra.mxu0 %v4878
    %5019 = vmatpush.bf16.msra.mxu0 %v4872
    %5020 = vmatpush.bf16.msra.mxu0 %v4866
    %5021 = vmatpush.bf16.msra.mxu0 %v4860
    %5022 = vmatpush.bf16.msra.mxu0 %v4854
    %5023 = vmatpush.bf16.msra.mxu0 %v4848
    %5024 = vmatpush.bf16.msra.mxu0 %v4842
    %5025 = vmatpush.bf16.msra.mxu0 %v4836
    %5026 = vmatmul.bf16.gmra.mxu0 %v4402
    %v5027 = vpop.f32.mrf.mxu0
    %v5028 = vadd.f32 %v5015, %v5027
    %v5029 = vpop.f32.mrf.mxu0
    %5030 = vdwg.mxu0
    %5031 = vmatpush.bf16.msra.mxu0 %v4831
    %5032 = vmatpush.bf16.msra.mxu0 %v4825
    %5033 = vmatpush.bf16.msra.mxu0 %v4819
    %5034 = vmatpush.bf16.msra.mxu0 %v4813
    %5035 = vmatpush.bf16.msra.mxu0 %v4807
    %5036 = vmatpush.bf16.msra.mxu0 %v4801
    %5037 = vmatpush.bf16.msra.mxu0 %v4795
    %5038 = vmatpush.bf16.msra.mxu0 %v4789
    %5039 = vmatmul.bf16.gmra.mxu0 %v4401
    %v5040 = vpop.f32.mrf.mxu0
    %v5041 = vadd.f32 0.0, %v5040
    %v5042 = vpop.f32.mrf.mxu0
    %5043 = vdwg.mxu0
    %5044 = vmatpush.bf16.msra.mxu0 %v4879
    %5045 = vmatpush.bf16.msra.mxu0 %v4873
    %5046 = vmatpush.bf16.msra.mxu0 %v4867
    %5047 = vmatpush.bf16.msra.mxu0 %v4861
    %5048 = vmatpush.bf16.msra.mxu0 %v4855
    %5049 = vmatpush.bf16.msra.mxu0 %v4849
    %5050 = vmatpush.bf16.msra.mxu0 %v4843
    %5051 = vmatpush.bf16.msra.mxu0 %v4837
    %5052 = vmatmul.bf16.gmra.mxu0 %v4402
    %v5053 = vpop.f32.mrf.mxu0
    %v5054 = vadd.f32 %v5041, %v5053
    %v5055 = vpop.f32.mrf.mxu0
    %5056 = vdwg.mxu0
    %5057 = vmatpush.bf16.msra.mxu0 %v4832
    %5058 = vmatpush.bf16.msra.mxu0 %v4826
    %5059 = vmatpush.bf16.msra.mxu0 %v4820
    %5060 = vmatpush.bf16.msra.mxu0 %v4814
    %5061 = vmatpush.bf16.msra.mxu0 %v4808
    %5062 = vmatpush.bf16.msra.mxu0 %v4802
    %5063 = vmatpush.bf16.msra.mxu0 %v4796
    %5064 = vmatpush.bf16.msra.mxu0 %v4790
    %5065 = vmatmul.bf16.gmra.mxu0 %v4401
    %v5066 = vpop.f32.mrf.mxu0
    %v5067 = vadd.f32 0.0, %v5066
    %v5068 = vpop.f32.mrf.mxu0
    %5069 = vdwg.mxu0
    %5070 = vmatpush.bf16.msra.mxu0 %v4880
    %5071 = vmatpush.bf16.msra.mxu0 %v4874
    %5072 = vmatpush.bf16.msra.mxu0 %v4868
    %5073 = vmatpush.bf16.msra.mxu0 %v4862
    %5074 = vmatpush.bf16.msra.mxu0 %v4856
    %5075 = vmatpush.bf16.msra.mxu0 %v4850
    %5076 = vmatpush.bf16.msra.mxu0 %v4844
    %5077 = vmatpush.bf16.msra.mxu0 %v4838
    %5078 = vmatmul.bf16.gmra.mxu0 %v4402
    %v5079 = vpop.f32.mrf.mxu0
    %v5080 = vadd.f32 %v5067, %v5079
    %v5081 = vpop.f32.mrf.mxu0
    %5082 = vdwg.mxu0
    %5083 = vmatpush.bf16.msra.mxu0 %v4833
    %5084 = vmatpush.bf16.msra.mxu0 %v4827
    %5085 = vmatpush.bf16.msra.mxu0 %v4821
    %5086 = vmatpush.bf16.msra.mxu0 %v4815
    %5087 = vmatpush.bf16.msra.mxu0 %v4809
    %5088 = vmatpush.bf16.msra.mxu0 %v4803
    %5089 = vmatpush.bf16.msra.mxu0 %v4797
    %5090 = vmatpush.bf16.msra.mxu0 %v4791
    %5091 = vmatmul.bf16.gmra.mxu0 %v4401
    %v5092 = vpop.f32.mrf.mxu0
    %v5093 = vadd.f32 0.0, %v5092
    %v5094 = vpop.f32.mrf.mxu0
    %5095 = vdwg.mxu0
    %5096 = vmatpush.bf16.msra.mxu0 %v4881
    %5097 = vmatpush.bf16.msra.mxu0 %v4875
    %5098 = vmatpush.bf16.msra.mxu0 %v4869
    %5099 = vmatpush.bf16.msra.mxu0 %v4863
    %5100 = vmatpush.bf16.msra.mxu0 %v4857
    %5101 = vmatpush.bf16.msra.mxu0 %v4851
    %5102 = vmatpush.bf16.msra.mxu0 %v4845
    %5103 = vmatpush.bf16.msra.mxu0 %v4839
    %5104 = vmatmul.bf16.gmra.mxu0 %v4402
    %v5105 = vpop.f32.mrf.mxu0
    %v5106 = vadd.f32 %v5093, %v5105
    %v5107 = vpop.f32.mrf.mxu0
    %5108 = vdwg.mxu0
    %5109 = vmatpush.bf16.msra.mxu0 %v4834
    %5110 = vmatpush.bf16.msra.mxu0 %v4828
    %5111 = vmatpush.bf16.msra.mxu0 %v4822
    %5112 = vmatpush.bf16.msra.mxu0 %v4816
    %5113 = vmatpush.bf16.msra.mxu0 %v4810
    %5114 = vmatpush.bf16.msra.mxu0 %v4804
    %5115 = vmatpush.bf16.msra.mxu0 %v4798
    %5116 = vmatpush.bf16.msra.mxu0 %v4792
    %5117 = vmatmul.bf16.gmra.mxu0 %v4401
    %v5118 = vpop.f32.mrf.mxu0
    %v5119 = vadd.f32 0.0, %v5118
    %v5120 = vpop.f32.mrf.mxu0
    %5121 = vdwg.mxu0
    %5122 = vmatpush.bf16.msra.mxu0 %v4882
    %5123 = vmatpush.bf16.msra.mxu0 %v4876
    %5124 = vmatpush.bf16.msra.mxu0 %v4870
    %5125 = vmatpush.bf16.msra.mxu0 %v4864
    %5126 = vmatpush.bf16.msra.mxu0 %v4858
    %5127 = vmatpush.bf16.msra.mxu0 %v4852
    %5128 = vmatpush.bf16.msra.mxu0 %v4846
    %5129 = vmatpush.bf16.msra.mxu0 %v4840
    %5130 = vmatmul.bf16.gmra.mxu0 %v4402
    %v5131 = vpop.f32.mrf.mxu0
    %v5132 = vadd.f32 %v5119, %v5131
    %v5133 = vpop.f32.mrf.mxu0
    %5134 = vdwg.mxu0
    %v5135 = vadd.f32 %v3878, %v5002
    %v5136 = vadd.f32 %v3982, %v5028
    %v5137 = vadd.f32 %v4086, %v5054
    %v5138 = vadd.f32 %v4190, %v5080
    %v5139 = vadd.f32 %v4294, %v5106
    %v5140 = vadd.f32 %v4398, %v5132
    %v5141 = vld [vmem:[#allocation20] sm:$0x3f]
    %v5143 = vperm.slane %v5141, 0
    %v5144 = vperm.slane %v5141, 1
    %v5145 = vperm.slane %v5141, 2
    %v5146 = vperm.slane %v5141, 3
    %v5147 = vperm.slane %v5141, 4
    %v5148 = vperm.slane %v5141, 5
    %v5155 = vadd.f32 %v5135, %v5143
    %v5156 = vadd.f32 %v5136, %v5144
    %v5157 = vadd.f32 %v5137, %v5145
    %v5158 = vadd.f32 %v5138, %v5146
    %v5159 = vadd.f32 %v5139, %v5147
    %v5160 = vadd.f32 %v5140, %v5148
    %v5161 = vmax.f32 %v5155, 0.0
    %v5162 = vmax.f32 %v5156, 0.0
    %v5163 = vmax.f32 %v5157, 0.0
    %v5164 = vmax.f32 %v5158, 0.0
    %v5165 = vmax.f32 %v5159, 0.0
    %v5166 = vmax.f32 %v5160, 0.0
    %v5167 = vpack.c.bf16 %v5161, %v5161
    %v5168 = vpack.c.bf16 %v5162, %v5162
    %v5169 = vpack.c.bf16 %v5163, %v5163
    %v5170 = vpack.c.bf16 %v5164, %v5164
    %v5171 = vpack.c.bf16 %v5165, %v5165
    %v5172 = vpack.c.bf16 %v5166, %v5166
    %v5173 = vld [vmem:[#allocation22] sm:$0xf]
    %v5174 = vld [vmem:[#allocation22 + $0x4] sm:$0xf]
    %v5175 = vld [vmem:[#allocation22 + $0x8] sm:$0xf]
    %v5176 = vld [vmem:[#allocation22 + $0xc] sm:$0xf]
    %v5177 = vld [vmem:[#allocation22 + $0x10] sm:$0xf]
    %v5178 = vld [vmem:[#allocation22 + $0x14] sm:$0xf]
    %v5179 = vld [vmem:[#allocation22 + $0x18] sm:$0xf]
    %v5180 = vld [vmem:[#allocation22 + $0x1c] sm:$0xf]
    %v5181 = vld [vmem:[#allocation22 + $0x20] sm:$0xf]
    %v5182 = vld [vmem:[#allocation22 + $0x24] sm:$0xf]
    %v5183 = vld [vmem:[#allocation22 + $0x28] sm:$0xf]
    %v5184 = vld [vmem:[#allocation22 + $0x2c] sm:$0xf]
    %v5185 = vld [vmem:[#allocation22 + $0x30] sm:$0xf]
    %v5186 = vld [vmem:[#allocation22 + $0x34] sm:$0xf]
    %v5187 = vld [vmem:[#allocation22 + $0x38] sm:$0xf]
    %v5188 = vld [vmem:[#allocation22 + $0x3c] sm:$0xf]
    %v5189 = vld [vmem:[#allocation22 + $0x40] sm:$0xf]
    %v5190 = vld [vmem:[#allocation22 + $0x44] sm:$0xf]
    %v5191 = vld [vmem:[#allocation22 + $0x48] sm:$0xf]
    %v5192 = vld [vmem:[#allocation22 + $0x4c] sm:$0xf]
    %v5193 = vld [vmem:[#allocation22 + $0x50] sm:$0xf]
    %v5194 = vld [vmem:[#allocation22 + $0x54] sm:$0xf]
    %v5195 = vld [vmem:[#allocation22 + $0x58] sm:$0xf]
    %v5196 = vld [vmem:[#allocation22 + $0x5c] sm:$0xf]
    %v5197 = vld [vmem:[#allocation22 + $0x60] sm:$0xf]
    %v5198 = vld [vmem:[#allocation22 + $0x64] sm:$0xf]
    %v5199 = vld [vmem:[#allocation22 + $0x68] sm:$0xf]
    %v5200 = vld [vmem:[#allocation22 + $0x6c] sm:$0xf]
    %v5201 = vld [vmem:[#allocation22 + $0x70] sm:$0xf]
    %v5202 = vld [vmem:[#allocation22 + $0x74] sm:$0xf]
    %v5203 = vld [vmem:[#allocation22 + $0x78] sm:$0xf]
    %v5204 = vld [vmem:[#allocation22 + $0x7c] sm:$0xf]
    %v5205 = vld [vmem:[#allocation22 + $0x80] sm:$0xf]
    %v5206 = vld [vmem:[#allocation22 + $0x84] sm:$0xf]
    %v5207 = vld [vmem:[#allocation22 + $0x88] sm:$0xf]
    %v5208 = vld [vmem:[#allocation22 + $0x8c] sm:$0xf]
    %v5209 = vld [vmem:[#allocation22 + $0x90] sm:$0xf]
    %v5210 = vld [vmem:[#allocation22 + $0x94] sm:$0xf]
    %v5211 = vld [vmem:[#allocation22 + $0x98] sm:$0xf]
    %v5212 = vld [vmem:[#allocation22 + $0x9c] sm:$0xf]
    %v5213 = vld [vmem:[#allocation22 + $0xa0] sm:$0xf]
    %v5214 = vld [vmem:[#allocation22 + $0xa4] sm:$0xf]
    %v5215 = vld [vmem:[#allocation22 + $0xa8] sm:$0xf]
    %v5216 = vld [vmem:[#allocation22 + $0xac] sm:$0xf]
    %v5217 = vld [vmem:[#allocation22 + $0xb0] sm:$0xf]
    %v5218 = vld [vmem:[#allocation22 + $0xb4] sm:$0xf]
    %v5219 = vld [vmem:[#allocation22 + $0xb8] sm:$0xf]
    %v5220 = vld [vmem:[#allocation22 + $0xbc] sm:$0xf]
    %v5221 = vld [vmem:[#allocation22 + $0xc0] sm:$0xf]
    %v5222 = vld [vmem:[#allocation22 + $0xc4] sm:$0xf]
    %v5223 = vld [vmem:[#allocation22 + $0xc8] sm:$0xf]
    %v5224 = vld [vmem:[#allocation22 + $0xcc] sm:$0xf]
    %v5225 = vld [vmem:[#allocation22 + $0xd0] sm:$0xf]
    %v5226 = vld [vmem:[#allocation22 + $0xd4] sm:$0xf]
    %v5227 = vld [vmem:[#allocation22 + $0xd8] sm:$0xf]
    %v5228 = vld [vmem:[#allocation22 + $0xdc] sm:$0xf]
    %v5229 = vld [vmem:[#allocation22 + $0xe0] sm:$0xf]
    %v5230 = vld [vmem:[#allocation22 + $0xe4] sm:$0xf]
    %v5231 = vld [vmem:[#allocation22 + $0xe8] sm:$0xf]
    %v5232 = vld [vmem:[#allocation22 + $0xec] sm:$0xf]
    %v5233 = vld [vmem:[#allocation22 + $0xf0] sm:$0xf]
    %v5234 = vld [vmem:[#allocation22 + $0xf4] sm:$0xf]
    %v5235 = vld [vmem:[#allocation22 + $0xf8] sm:$0xf]
    %v5236 = vld [vmem:[#allocation22 + $0xfc] sm:$0xf]
    %v5237 = vld [vmem:[#allocation22 + $0x100] sm:$0xf]
    %v5238 = vld [vmem:[#allocation22 + $0x104] sm:$0xf]
    %v5239 = vld [vmem:[#allocation22 + $0x108] sm:$0xf]
    %v5240 = vld [vmem:[#allocation22 + $0x10c] sm:$0xf]
    %v5241 = vld [vmem:[#allocation22 + $0x110] sm:$0xf]
    %v5242 = vld [vmem:[#allocation22 + $0x114] sm:$0xf]
    %v5243 = vld [vmem:[#allocation22 + $0x118] sm:$0xf]
    %v5244 = vld [vmem:[#allocation22 + $0x11c] sm:$0xf]
    %v5245 = vld [vmem:[#allocation22 + $0x120] sm:$0xf]
    %v5246 = vld [vmem:[#allocation22 + $0x124] sm:$0xf]
    %v5247 = vld [vmem:[#allocation22 + $0x128] sm:$0xf]
    %v5248 = vld [vmem:[#allocation22 + $0x12c] sm:$0xf]
    %v5249 = vld [vmem:[#allocation22 + $0x130] sm:$0xf]
    %v5250 = vld [vmem:[#allocation22 + $0x134] sm:$0xf]
    %v5251 = vld [vmem:[#allocation22 + $0x138] sm:$0xf]
    %v5252 = vld [vmem:[#allocation22 + $0x13c] sm:$0xf]
    %v5253 = vld [vmem:[#allocation22 + $0x140] sm:$0xf]
    %v5254 = vld [vmem:[#allocation22 + $0x144] sm:$0xf]
    %v5255 = vld [vmem:[#allocation22 + $0x148] sm:$0xf]
    %v5256 = vld [vmem:[#allocation22 + $0x14c] sm:$0xf]
    %v5257 = vld [vmem:[#allocation22 + $0x150] sm:$0xf]
    %v5258 = vld [vmem:[#allocation22 + $0x154] sm:$0xf]
    %v5259 = vld [vmem:[#allocation22 + $0x158] sm:$0xf]
    %v5260 = vld [vmem:[#allocation22 + $0x15c] sm:$0xf]
    %v5261 = vld [vmem:[#allocation22 + $0x160] sm:$0xf]
    %v5262 = vld [vmem:[#allocation22 + $0x164] sm:$0xf]
    %v5263 = vld [vmem:[#allocation22 + $0x168] sm:$0xf]
    %v5264 = vld [vmem:[#allocation22 + $0x16c] sm:$0xf]
    %v5265 = vld [vmem:[#allocation22 + $0x170] sm:$0xf]
    %v5266 = vld [vmem:[#allocation22 + $0x174] sm:$0xf]
    %v5267 = vld [vmem:[#allocation22 + $0x178] sm:$0xf]
    %v5268 = vld [vmem:[#allocation22 + $0x17c] sm:$0xf]
    %v5269 = vld [vmem:[#allocation23] sm:$0x1]
    %v5271 = vperm.slane %v5269, 0
    %v5369 = vunpack.c.l.b16 %v5173
    %v5370 = vunpack.c.l.b16 %v5174
    %v5371 = vunpack.c.l.b16 %v5175
    %v5372 = vunpack.c.l.b16 %v5176
    %v5373 = vunpack.c.l.b16 %v5177
    %v5374 = vunpack.c.l.b16 %v5178
    %v5375 = vunpack.c.l.b16 %v5179
    %v5376 = vunpack.c.l.b16 %v5180
    %v5377 = vunpack.c.l.b16 %v5181
    %v5378 = vunpack.c.l.b16 %v5182
    %v5379 = vunpack.c.l.b16 %v5183
    %v5380 = vunpack.c.l.b16 %v5184
    %v5381 = vunpack.c.l.b16 %v5185
    %v5382 = vunpack.c.l.b16 %v5186
    %v5383 = vunpack.c.l.b16 %v5187
    %v5384 = vunpack.c.l.b16 %v5188
    %v5385 = vunpack.c.l.b16 %v5189
    %v5386 = vunpack.c.l.b16 %v5190
    %v5387 = vunpack.c.l.b16 %v5191
    %v5388 = vunpack.c.l.b16 %v5192
    %v5389 = vunpack.c.l.b16 %v5193
    %v5390 = vunpack.c.l.b16 %v5194
    %v5391 = vunpack.c.l.b16 %v5195
    %v5392 = vunpack.c.l.b16 %v5196
    %v5393 = vunpack.c.l.b16 %v5197
    %v5394 = vunpack.c.l.b16 %v5198
    %v5395 = vunpack.c.l.b16 %v5199
    %v5396 = vunpack.c.l.b16 %v5200
    %v5397 = vunpack.c.l.b16 %v5201
    %v5398 = vunpack.c.l.b16 %v5202
    %v5399 = vunpack.c.l.b16 %v5203
    %v5400 = vunpack.c.l.b16 %v5204
    %v5401 = vunpack.c.l.b16 %v5205
    %v5402 = vunpack.c.l.b16 %v5206
    %v5403 = vunpack.c.l.b16 %v5207
    %v5404 = vunpack.c.l.b16 %v5208
    %v5405 = vunpack.c.l.b16 %v5209
    %v5406 = vunpack.c.l.b16 %v5210
    %v5407 = vunpack.c.l.b16 %v5211
    %v5408 = vunpack.c.l.b16 %v5212
    %v5409 = vunpack.c.l.b16 %v5213
    %v5410 = vunpack.c.l.b16 %v5214
    %v5411 = vunpack.c.l.b16 %v5215
    %v5412 = vunpack.c.l.b16 %v5216
    %v5413 = vunpack.c.l.b16 %v5217
    %v5414 = vunpack.c.l.b16 %v5218
    %v5415 = vunpack.c.l.b16 %v5219
    %v5416 = vunpack.c.l.b16 %v5220
    %v5417 = vunpack.c.l.b16 %v5221
    %v5418 = vunpack.c.l.b16 %v5222
    %v5419 = vunpack.c.l.b16 %v5223
    %v5420 = vunpack.c.l.b16 %v5224
    %v5421 = vunpack.c.l.b16 %v5225
    %v5422 = vunpack.c.l.b16 %v5226
    %v5423 = vunpack.c.l.b16 %v5227
    %v5424 = vunpack.c.l.b16 %v5228
    %v5425 = vunpack.c.l.b16 %v5229
    %v5426 = vunpack.c.l.b16 %v5230
    %v5427 = vunpack.c.l.b16 %v5231
    %v5428 = vunpack.c.l.b16 %v5232
    %v5429 = vunpack.c.l.b16 %v5233
    %v5430 = vunpack.c.l.b16 %v5234
    %v5431 = vunpack.c.l.b16 %v5235
    %v5432 = vunpack.c.l.b16 %v5236
    %v5433 = vunpack.c.l.b16 %v5237
    %v5434 = vunpack.c.l.b16 %v5238
    %v5435 = vunpack.c.l.b16 %v5239
    %v5436 = vunpack.c.l.b16 %v5240
    %v5437 = vunpack.c.l.b16 %v5241
    %v5438 = vunpack.c.l.b16 %v5242
    %v5439 = vunpack.c.l.b16 %v5243
    %v5440 = vunpack.c.l.b16 %v5244
    %v5441 = vunpack.c.l.b16 %v5245
    %v5442 = vunpack.c.l.b16 %v5246
    %v5443 = vunpack.c.l.b16 %v5247
    %v5444 = vunpack.c.l.b16 %v5248
    %v5445 = vunpack.c.l.b16 %v5249
    %v5446 = vunpack.c.l.b16 %v5250
    %v5447 = vunpack.c.l.b16 %v5251
    %v5448 = vunpack.c.l.b16 %v5252
    %v5449 = vunpack.c.l.b16 %v5253
    %v5450 = vunpack.c.l.b16 %v5254
    %v5451 = vunpack.c.l.b16 %v5255
    %v5452 = vunpack.c.l.b16 %v5256
    %v5453 = vunpack.c.l.b16 %v5257
    %v5454 = vunpack.c.l.b16 %v5258
    %v5455 = vunpack.c.l.b16 %v5259
    %v5456 = vunpack.c.l.b16 %v5260
    %v5457 = vunpack.c.l.b16 %v5261
    %v5458 = vunpack.c.l.b16 %v5262
    %v5459 = vunpack.c.l.b16 %v5263
    %v5460 = vunpack.c.l.b16 %v5264
    %v5461 = vunpack.c.l.b16 %v5265
    %v5462 = vunpack.c.l.b16 %v5266
    %v5463 = vunpack.c.l.b16 %v5267
    %v5464 = vunpack.c.l.b16 %v5268
    %v5465 = vpack.c.b16 %v5370, %v5369
    %v5466 = vpack.c.b16 %v5372, %v5371
    %v5467 = vpack.c.b16 %v5374, %v5373
    %v5468 = vpack.c.b16 %v5376, %v5375
    %v5469 = vpack.c.b16 %v5378, %v5377
    %v5470 = vpack.c.b16 %v5380, %v5379
    %v5471 = vpack.c.b16 %v5382, %v5381
    %v5472 = vpack.c.b16 %v5384, %v5383
    %v5473 = vpack.c.b16 %v5386, %v5385
    %v5474 = vpack.c.b16 %v5388, %v5387
    %v5475 = vpack.c.b16 %v5390, %v5389
    %v5476 = vpack.c.b16 %v5392, %v5391
    %v5477 = vpack.c.b16 %v5394, %v5393
    %v5478 = vpack.c.b16 %v5396, %v5395
    %v5479 = vpack.c.b16 %v5398, %v5397
    %v5480 = vpack.c.b16 %v5400, %v5399
    %v5481 = vpack.c.b16 %v5402, %v5401
    %v5482 = vpack.c.b16 %v5404, %v5403
    %v5483 = vpack.c.b16 %v5406, %v5405
    %v5484 = vpack.c.b16 %v5408, %v5407
    %v5485 = vpack.c.b16 %v5410, %v5409
    %v5486 = vpack.c.b16 %v5412, %v5411
    %v5487 = vpack.c.b16 %v5414, %v5413
    %v5488 = vpack.c.b16 %v5416, %v5415
    %v5489 = vpack.c.b16 %v5418, %v5417
    %v5490 = vpack.c.b16 %v5420, %v5419
    %v5491 = vpack.c.b16 %v5422, %v5421
    %v5492 = vpack.c.b16 %v5424, %v5423
    %v5493 = vpack.c.b16 %v5426, %v5425
    %v5494 = vpack.c.b16 %v5428, %v5427
    %v5495 = vpack.c.b16 %v5430, %v5429
    %v5496 = vpack.c.b16 %v5432, %v5431
    %v5497 = vpack.c.b16 %v5434, %v5433
    %v5498 = vpack.c.b16 %v5436, %v5435
    %v5499 = vpack.c.b16 %v5438, %v5437
    %v5500 = vpack.c.b16 %v5440, %v5439
    %v5501 = vpack.c.b16 %v5442, %v5441
    %v5502 = vpack.c.b16 %v5444, %v5443
    %v5503 = vpack.c.b16 %v5446, %v5445
    %v5504 = vpack.c.b16 %v5448, %v5447
    %v5505 = vpack.c.b16 %v5450, %v5449
    %v5506 = vpack.c.b16 %v5452, %v5451
    %v5507 = vpack.c.b16 %v5454, %v5453
    %v5508 = vpack.c.b16 %v5456, %v5455
    %v5509 = vpack.c.b16 %v5458, %v5457
    %v5510 = vpack.c.b16 %v5460, %v5459
    %v5511 = vpack.c.b16 %v5462, %v5461
    %v5512 = vpack.c.b16 %v5464, %v5463
    %5561 = vmatpush.bf16.msra.mxu0 %v5472
    %5562 = vmatpush.bf16.msra.mxu0 %v5471
    %5563 = vmatpush.bf16.msra.mxu0 %v5470
    %5564 = vmatpush.bf16.msra.mxu0 %v5469
    %5565 = vmatpush.bf16.msra.mxu0 %v5468
    %5566 = vmatpush.bf16.msra.mxu0 %v5467
    %5567 = vmatpush.bf16.msra.mxu0 %v5466
    %5568 = vmatpush.bf16.msra.mxu0 %v5465
    %5569 = vmatmul.bf16.gmra.mxu0 %v5167
    %v5570 = vpop.f32.mrf.mxu0
    %v5571 = vadd.f32 %v5271, %v5570
    %v5572 = vpop.f32.mrf.mxu0
    %5573 = vdwg.mxu0
    %5574 = vmatpush.bf16.msra.mxu0 %v5480
    %5575 = vmatpush.bf16.msra.mxu0 %v5479
    %5576 = vmatpush.bf16.msra.mxu0 %v5478
    %5577 = vmatpush.bf16.msra.mxu0 %v5477
    %5578 = vmatpush.bf16.msra.mxu0 %v5476
    %5579 = vmatpush.bf16.msra.mxu0 %v5475
    %5580 = vmatpush.bf16.msra.mxu0 %v5474
    %5581 = vmatpush.bf16.msra.mxu0 %v5473
    %5582 = vmatmul.bf16.gmra.mxu0 %v5168
    %v5583 = vpop.f32.mrf.mxu0
    %v5584 = vadd.f32 %v5571, %v5583
    %v5585 = vpop.f32.mrf.mxu0
    %5586 = vdwg.mxu0
    %5587 = vmatpush.bf16.msra.mxu0 %v5488
    %5588 = vmatpush.bf16.msra.mxu0 %v5487
    %5589 = vmatpush.bf16.msra.mxu0 %v5486
    %5590 = vmatpush.bf16.msra.mxu0 %v5485
    %5591 = vmatpush.bf16.msra.mxu0 %v5484
    %5592 = vmatpush.bf16.msra.mxu0 %v5483
    %5593 = vmatpush.bf16.msra.mxu0 %v5482
    %5594 = vmatpush.bf16.msra.mxu0 %v5481
    %5595 = vmatmul.bf16.gmra.mxu0 %v5169
    %v5596 = vpop.f32.mrf.mxu0
    %v5597 = vadd.f32 %v5584, %v5596
    %v5598 = vpop.f32.mrf.mxu0
    %5599 = vdwg.mxu0
    %5600 = vmatpush.bf16.msra.mxu0 %v5496
    %5601 = vmatpush.bf16.msra.mxu0 %v5495
    %5602 = vmatpush.bf16.msra.mxu0 %v5494
    %5603 = vmatpush.bf16.msra.mxu0 %v5493
    %5604 = vmatpush.bf16.msra.mxu0 %v5492
    %5605 = vmatpush.bf16.msra.mxu0 %v5491
    %5606 = vmatpush.bf16.msra.mxu0 %v5490
    %5607 = vmatpush.bf16.msra.mxu0 %v5489
    %5608 = vmatmul.bf16.gmra.mxu0 %v5170
    %v5609 = vpop.f32.mrf.mxu0
    %v5610 = vadd.f32 %v5597, %v5609
    %v5611 = vpop.f32.mrf.mxu0
    %5612 = vdwg.mxu0
    %5613 = vmatpush.bf16.msra.mxu0 %v5504
    %5614 = vmatpush.bf16.msra.mxu0 %v5503
    %5615 = vmatpush.bf16.msra.mxu0 %v5502
    %5616 = vmatpush.bf16.msra.mxu0 %v5501
    %5617 = vmatpush.bf16.msra.mxu0 %v5500
    %5618 = vmatpush.bf16.msra.mxu0 %v5499
    %5619 = vmatpush.bf16.msra.mxu0 %v5498
    %5620 = vmatpush.bf16.msra.mxu0 %v5497
    %5621 = vmatmul.bf16.gmra.mxu0 %v5171
    %v5622 = vpop.f32.mrf.mxu0
    %v5623 = vadd.f32 %v5610, %v5622
    %v5624 = vpop.f32.mrf.mxu0
    %5625 = vdwg.mxu0
    %5626 = vmatpush.bf16.msra.mxu0 %v5512
    %5627 = vmatpush.bf16.msra.mxu0 %v5511
    %5628 = vmatpush.bf16.msra.mxu0 %v5510
    %5629 = vmatpush.bf16.msra.mxu0 %v5509
    %5630 = vmatpush.bf16.msra.mxu0 %v5508
    %5631 = vmatpush.bf16.msra.mxu0 %v5507
    %5632 = vmatpush.bf16.msra.mxu0 %v5506
    %5633 = vmatpush.bf16.msra.mxu0 %v5505
    %5634 = vmatmul.bf16.gmra.mxu0 %v5172
    %v5635 = vpop.f32.mrf.mxu0
    %v5636 = vadd.f32 %v5623, %v5635
    %v5637 = vpop.f32.mrf.mxu0
    %5638 = vdwg.mxu0
    %v5639 = vmul.f32 %v264, 2.0
    %v5640 = vmul.f32 %v5639, 3.218876
    %v5641 = vmul.f32 %v5640, 1.442695
    %v5642 = vpow.pop %v5641
    %v5643 = vsub.f32 %v5642, 1.0
    %v5644 = vmul.f32 %v5643, 0.15533373
    %v5645 = vrsqrt.pop %v5644
    %v5646 = vmul.f32 %v5645, %v5644
    %v5647 = vmul.f32 %v5646, %v5645
    %v5648 = vmul.f32 0.5, %v5647
    %v5649 = vsub.f32 1.5, %v5648
    %v5650 = vmul.f32 %v5645, %v5649
    %v5651 = vmul.f32 %v5644, %v5650
    %vm5652 = vcmp.eq.f32.partialorder %v5644, inf
    %v5653 = vsel %vm5652, %v5644, %v5651
    %vm5654 = vcmp.eq.f32.partialorder %v5644, 0.0
    %v5655 = vand.u32 %v5644, 2147483648
    %v5656 = vsel %vm5654, %v5655, %v5653
    %v5657 = vadd.f32 %v5656, 1e-07
    %v5658 = vrcp.pop %v5657
    %5660 = vset.pattern.permute.xlu0 0
    %5661 = vperm.xlu0 %5660, %v5658
    %v5662 = vpop.permute.xlu0 %5661
    %v5664 = vmul.f32 %v5636, %v5662
    %5665 = vst [vmem:[#allocation25] sm:$0xff] %v5664
    // Predicated region
    $region126: #{forward_pallas.1} parent=1 // pred_check
      _
    $region127: #{forward_pallas.1} parent=1 // pred_check_branch
      %5667 = sbr.rel (0) target = $region129
    $region128: #{forward_pallas.1} parent=1 // pred_region
      %5669 = vsyncadd [#allocation4], 0
      %s5671 = sshll.u32 [#allocation25], 4
      %s5672 = int_to_ptr.vmem [resolvable:$true] %s5671
      %s5673 = sshll.u32 %s17, 4
      %s5674 = int_to_ptr.hbm [resolvable:$true] %s5673
      %5676 = dma.vmem_to_hbm [thread:$0]  %s5672, 128, %s5674, [#allocation4]
    $region129: #{forward_pallas.1} parent=1 // pred_fallthru
      _
    // Predicated region
    $region130: #{forward_pallas.1} parent=1 // pred_check
      _
    $region131: #{forward_pallas.1} parent=1 // pred_check_branch
      %5678 = sbr.rel (0) target = $region133
    $region132: #{forward_pallas.1} parent=1 // pred_region
      %5680 = dma.done [#allocation4], 128
    $region133: #{forward_pallas.1} parent=1 // pred_fallthru
      _
    %5681 = vsyncpa [#allocation3], 1
    %5682 = vsyncpa [#allocation6], 1
    %5683 = vsyncpa [#allocation9], 1
    %5684 = vsyncpa [#allocation12], 1
    %5685 = vsyncpa [#allocation15], 1
    %5686 = vsyncpa [#allocation18], 1
    %5687 = vsyncpa [#allocation21], 1
    %5688 = vsyncpa [#allocation24], 1
    %5689 = vsyncpa [#allocation4], 1

</llo_original>
